<compile_context>
chip_gen: v7x
topology: tpu7x:2x2x1
jax: 0.10.0
libtpu: 0.0.40
codegen_flags: <defaults>
</compile_context>

<pallas_src>
import functools

import jax
import jax.numpy as jnp
from jax import lax
from jax.experimental import pallas as pl
from jax.experimental.pallas import tpu as pltpu


def basic_block_kernel(x0_ref, x1_ref, x2_ref, x3_ref, s1_ref, t1_ref,
                       w1_ref, b1_ref, w2_ref, b2_ref, out_ref,
                       xpad_ref, xslab_ref, hp_ref, hslab_ref,
                       *, Bt, Ho, Wo, Cin, Pp):
    """One block of Bt images per grid step, flat (rows = Bt*Ho*Wo) output layout.

    x{p}_ref : (Bt, Ho, Wo, Cin) bf16   raw x parity phase p: x[n, 2ho + p//2, 2wo + p%2, c]
    s1/t1    : (1, Cin) f32             folded bn1 scale / shift
    w1_ref   : (9*Cin, Pp) bf16         conv1 weights, tap-major, bn2 folded in
    b1_ref   : (1, Pp) f32              b1*s2 + t2
    w2_ref   : (9*Pp + Cin, Pp) bf16    conv2 taps stacked + 1x1 downsample rows
    b2_ref   : (1, Pp) f32              b2 + bd
    out_ref  : (Bt*Ho*Wo, Pp) f32
    scratch  : xpad  (4*Bt, Ho+1, Wo+1, Cin) bf16   padded bn1/relu parity phases
               xslab (Bt*HW, 9*Cin)            bf16  conv1 im2col slab
               hp    (Bt, Ho+2, Wo+2, Pp)      bf16  padded conv2 input
               hslab (Bt*HW, 9*Pp + Cin)       bf16  conv2 + downsample slab
    """
    M = Bt * Ho * Wo

    # ---- bn1 + relu on each stride-2 parity phase of raw x (each pixel touched once);
    #      stage into a scratch zero-padded by one row/col at the TOP/LEFT only (halo-only
    #      zeroing each step: per-core scratch is not zero-initialized on a parallel axis).
    xpad_ref[:, 0:1, :, :] = jnp.zeros((4 * Bt, 1, Wo + 1, Cin), jnp.bfloat16)
    xpad_ref[:, :, 0:1, :] = jnp.zeros((4 * Bt, Ho + 1, 1, Cin), jnp.bfloat16)
    x0_raw = x0_ref[...]                        # phase (even,even) = raw x[2ho, 2wo] (kept for downsample)
    s1 = s1_ref[...]
    t1 = t1_ref[...]
    phases = (x0_raw, x1_ref[...], x2_ref[...], x3_ref[...])
    for p in range(4):
        v = jnp.maximum(phases[p].astype(jnp.float32) * s1 + t1, 0.0)
        xpad_ref[p * Bt:(p + 1) * Bt, 1:Ho + 1, 1:Wo + 1, :] = v.astype(jnp.bfloat16)

    # ---- conv1 im2col slab: each of the 9 stride-2 taps is a dense slice of one phase ----
    for kh in range(3):
        rp, r0 = ((1, 0), (0, 1), (1, 1))[kh]
        for kw in range(3):
            cp, c0 = ((1, 0), (0, 1), (1, 1))[kw]
            p = 2 * rp + cp
            t = kh * 3 + kw
            tap = xpad_ref[p * Bt:(p + 1) * Bt, r0:r0 + Ho, c0:c0 + Wo, :]
            xslab_ref[:, t * Cin:(t + 1) * Cin] = tap.reshape(M, Cin)

    # ---- conv1 as ONE (M, 9*Cin) x (9*Cin, Pp) GEMM; bn2 pre-folded; relu2 ---------------
    h = jnp.dot(xslab_ref[...], w1_ref[...], preferred_element_type=jnp.float32)
    h = jnp.maximum(h + b1_ref[...], 0.0).astype(jnp.bfloat16)           # (M, Pp)

    # ---- stage conv2 input into a zero-padded scratch; zero only the 1-wide halo ---------
    hp_ref[:, 0:1, :, :] = jnp.zeros((Bt, 1, Wo + 2, Pp), jnp.bfloat16)
    hp_ref[:, Ho + 1:Ho + 2, :, :] = jnp.zeros((Bt, 1, Wo + 2, Pp), jnp.bfloat16)
    hp_ref[:, :, 0:1, :] = jnp.zeros((Bt, Ho + 2, 1, Pp), jnp.bfloat16)
    hp_ref[:, :, Wo + 1:Wo + 2, :] = jnp.zeros((Bt, Ho + 2, 1, Pp), jnp.bfloat16)
    hp_ref[:, 1:Ho + 1, 1:Wo + 1, :] = h.reshape(Bt, Ho, Wo, Pp)

    # ---- conv2 (3x3 s1 p1) + 1x1 s2 downsample residual as ONE GEMM over a wide slab -----
    for kh in range(3):
        for kw in range(3):
            t = kh * 3 + kw
            hslab_ref[:, t * Pp:(t + 1) * Pp] = (
                hp_ref[:, kh:kh + Ho, kw:kw + Wo, :].reshape(M, Pp))
    hslab_ref[:, 9 * Pp:9 * Pp + Cin] = x0_raw.reshape(M, Cin)            # raw center tap

    out = jnp.dot(hslab_ref[...], w2_ref[...], preferred_element_type=jnp.float32)
    out_ref[...] = out + b2_ref[...]                                      # single bulk store


def _ceil_to(x, m):
    return -(-int(x) // m) * m


def _vmem_bytes(shape, itemsize):
    lead = 1
    for d in shape[:-2]:
        lead *= int(d)
    return lead * _ceil_to(shape[-2], 8) * _ceil_to(shape[-1], 128) * itemsize


def basic_block_pallas(x_nchw, params, *, block_batch=None):
    N, Cin, H, W = x_nchw.shape
    assert H % 2 == 0 and W % 2 == 0, "stride-2 convs assume even spatial dims"
    Ho, Wo = H // 2, W // 2
    HW = Ho * Wo
    P = params["w1"].shape[0]
    Pp = _ceil_to(P, 128)          # lane-dense output channels (padded; sliced off below)
    eps = 1e-3

    # ---- VMEM budget & batch-tile selection ----------------------------------------------
    try:
        vmem_cap = int(pltpu.get_tpu_info().vmem_capacity_bytes)
    except Exception:
        vmem_cap = 64 * 1024 * 1024                     # conservative default (v7x per-TC)

    weight_bytes = (_vmem_bytes((9 * Cin, Pp), 2) + _vmem_bytes((9 * Pp + Cin, Pp), 2)
                    + 2 * _vmem_bytes((1, Pp), 4) + 2 * _vmem_bytes((1, Cin), 4))

    def step_bytes(b):
        m = b * HW
        return (weight_bytes
                + 2 * 4 * _vmem_bytes((b, Ho, Wo, Cin), 2)        # 4 phase inputs, dbl-buffered
                + 2 * _vmem_bytes((m, Pp), 4)                     # output block, dbl-buffered
                + _vmem_bytes((4 * b, Ho + 1, Wo + 1, Cin), 2)    # xpad scratch
                + _vmem_bytes((m, 9 * Cin), 2)                    # conv1 slab
                + _vmem_bytes((b, Ho + 2, Wo + 2, Pp), 2)         # hp scratch
                + _vmem_bytes((m, 9 * Pp + Cin), 2))              # conv2+downsample slab

    if block_batch is None:
        budget = int(0.55 * vmem_cap)
        divisors = [b for b in range(1, N + 1) if N % b == 0]

        def ok(b):
            if step_bytes(b) > budget:
                return False
            if b != N and (b * HW) % 8 != 0:
                return False
            return b * HW <= 1024 or b == 1
        Bt = 1
        for min_steps in (4, 2, 1):            # prefer >= 4 steps (2 per v7x TensorCore)
            cands = [b for b in divisors if ok(b) and N // b >= min_steps]
            if cands:
                Bt = max(cands)
                break
    else:
        Bt = block_batch
    assert N % Bt == 0, "block_batch must divide N"

    vmem_limit = int(min(max(32 * 1024 * 1024, 2 * step_bytes(Bt)), int(0.9 * vmem_cap)))

    # ---- inputs: raw x as NHWC bf16, split into the four stride-2 parity phases (glue) ----
    x_nhwc = jnp.transpose(x_nchw, (0, 2, 3, 1)).astype(jnp.bfloat16)     # (N, H, W, Cin)
    # phases[p][n, ho, wo, c] == x[n, 2*ho + p//2, 2*wo + p%2, c]; total bytes == x itself.
    phases = tuple(x_nhwc[:, rp::2, cp::2, :] for rp in (0, 1) for cp in (0, 1))

    # ---- fold BN (inference mode) into scale/shift; fold bn2 into conv1 weights (glue) ----
    f32 = jnp.float32
    s1v = (params["gamma1"] / jnp.sqrt(params["var1"] + eps)).astype(f32)
    t1v = (params["beta1"] - params["mean1"] * s1v).astype(f32)
    s2v = (params["gamma2"] / jnp.sqrt(params["var2"] + eps)).astype(f32)
    t2v = (params["beta2"] - params["mean2"] * s2v).astype(f32)
    s1 = s1v.reshape(1, Cin)
    t1 = t1v.reshape(1, Cin)

    # conv1 weights, tap-major rows ((kh*3+kw)*Cin + c), bn2 folded into columns, lane-padded
    w1_hwio = jnp.transpose(params["w1"], (2, 3, 1, 0)).reshape(9 * Cin, P).astype(f32)
    w1p = (jnp.zeros((9 * Cin, Pp), f32).at[:, :P].set(w1_hwio * s2v[None, :])
           .astype(jnp.bfloat16))
    b1p = jnp.zeros((1, Pp), f32).at[0, :P].set(params["b1"] * s2v + t2v)

    # conv2 + downsample combined weights: 9 taps x Pp conv2-input channels, then Cin rows
    w2_hwio = jnp.transpose(params["w2"], (2, 3, 1, 0)).astype(f32)       # (3, 3, P, P)
    w2c = jnp.zeros((9 * Pp + Cin, Pp), f32)
    for t in range(9):
        w2c = w2c.at[t * Pp:t * Pp + P, :P].set(w2_hwio[t // 3, t % 3])
    w2c = w2c.at[9 * Pp:, :P].set(params["wd"][:, :, 0, 0].T)             # 1x1 s2 downsample
    w2p = w2c.astype(jnp.bfloat16)
    b2p = jnp.zeros((1, Pp), f32).at[0, :P].set(params["b2"] + params["bd"])

    kernel = functools.partial(basic_block_kernel, Bt=Bt, Ho=Ho, Wo=Wo, Cin=Cin, Pp=Pp)

    def full(shape):
        return pl.BlockSpec(shape, lambda n: (0,) * len(shape))

    phase_spec = pl.BlockSpec((Bt, Ho, Wo, Cin), lambda n: (n, 0, 0, 0))

    out = pl.pallas_call(
        kernel,
        out_shape=jax.ShapeDtypeStruct((N * HW, Pp), jnp.float32),
        grid_spec=pltpu.PrefetchScalarGridSpec(
            num_scalar_prefetch=0,
            grid=(N // Bt,),
            in_specs=[
                phase_spec, phase_spec, phase_spec, phase_spec,   # raw x parity phases
                full((1, Cin)),            # bn1 scale
                full((1, Cin)),            # bn1 shift
                full((9 * Cin, Pp)),       # conv1 weights (bn2 folded)
                full((1, Pp)),             # conv1 bias  (b1*s2 + t2)
                full((9 * Pp + Cin, Pp)),  # conv2 + downsample weights
                full((1, Pp)),             # conv2 + downsample bias (b2 + bd)
            ],
            out_specs=pl.BlockSpec((Bt * HW, Pp), lambda n: (n, 0)),
            scratch_shapes=[
                pltpu.VMEM((4 * Bt, Ho + 1, Wo + 1, Cin), jnp.bfloat16),   # padded bn1 phases
                pltpu.VMEM((Bt * HW, 9 * Cin), jnp.bfloat16),              # conv1 im2col slab
                pltpu.VMEM((Bt, Ho + 2, Wo + 2, Pp), jnp.bfloat16),        # padded conv2 input
                pltpu.VMEM((Bt * HW, 9 * Pp + Cin), jnp.bfloat16),         # conv2+dwnsmpl slab
            ],
        ),
        compiler_params=pltpu.CompilerParams(
            dimension_semantics=("parallel",),
            vmem_limit_bytes=vmem_limit,
        ),
    )(*phases, s1, t1, w1p, b1p, w2p, b2p)

    out = out.reshape(N, Ho, Wo, Pp)[..., :P]
    return jnp.transpose(out, (0, 3, 1, 2))               # back to NCHW


def reference(x, p):
    """Plain-JAX reference mirroring the PyTorch forward (eval-mode BN)."""
    eps = 1e-3

    def bn(v, gamma, beta, mean, var):
        return ((v - mean[None, :, None, None]) /
                jnp.sqrt(var + eps)[None, :, None, None] *
                gamma[None, :, None, None] + beta[None, :, None, None])

    dn = ('NCHW', 'OIHW', 'NCHW')
    resid = lax.conv_general_dilated(x, p["wd"], (2, 2), 'VALID',
                                     dimension_numbers=dn) + p["bd"][None, :, None, None]
    out = jax.nn.relu(bn(x, p["gamma1"], p["beta1"], p["mean1"], p["var1"]))
    out = lax.conv_general_dilated(out, p["w1"], (2, 2), [(1, 1), (1, 1)],
                                   dimension_numbers=dn) + p["b1"][None, :, None, None]
    out = bn(out, p["gamma2"], p["beta2"], p["mean2"], p["var2"])
    out = jax.nn.relu(out)
    out = lax.conv_general_dilated(out, p["w2"], (1, 1), [(1, 1), (1, 1)],
                                   dimension_numbers=dn) + p["b2"][None, :, None, None]
    return out + resid


if __name__ == "__main__":
    key = jax.random.PRNGKey(0)
    N, Cin, P, H, W = 2, 4, 8, 16, 16        # inplanes=4, planes=8
    ks = jax.random.split(key, 16)
    params = {
        "w1": jax.random.normal(ks[0], (P, Cin, 3, 3), jnp.float32) * 0.2,
        "b1": jax.random.normal(ks[1], (P,), jnp.float32) * 0.1,
        "w2": jax.random.normal(ks[2], (P, P, 3, 3), jnp.float32) * 0.2,
        "b2": jax.random.normal(ks[3], (P,), jnp.float32) * 0.1,
        "wd": jax.random.normal(ks[4], (P, Cin, 1, 1), jnp.float32) * 0.2,
        "bd": jax.random.normal(ks[5], (P,), jnp.float32) * 0.1,
        "gamma1": 1.0 + 0.1 * jax.random.normal(ks[6], (Cin,), jnp.float32),
        "beta1": 0.1 * jax.random.normal(ks[7], (Cin,), jnp.float32),
        "mean1": 0.1 * jax.random.normal(ks[8], (Cin,), jnp.float32),
        "var1": 0.5 + 0.2 * jnp.abs(jax.random.normal(ks[9], (Cin,), jnp.float32)),
        "gamma2": 1.0 + 0.1 * jax.random.normal(ks[10], (P,), jnp.float32),
        "beta2": 0.1 * jax.random.normal(ks[11], (P,), jnp.float32),
        "mean2": 0.1 * jax.random.normal(ks[12], (P,), jnp.float32),
        "var2": 0.5 + 0.2 * jnp.abs(jax.random.normal(ks[13], (P,), jnp.float32)),
    }
    x = jax.random.normal(ks[14], (N, Cin, H, W), jnp.float32)

    out = basic_block_pallas(x, params)
    out = jax.block_until_ready(out)

    ref = reference(x, params)
    err = float(jnp.max(jnp.abs(out - ref)))
    # bf16 MXU operands (inputs, folded weights, staged activations) -> bf16-sized tolerance.
    if not bool(jnp.allclose(out, ref, atol=5e-2, rtol=5e-2)):
        raise AssertionError(f"Pallas result mismatch vs reference, max abs err = {err}")
    print("KERNEL_OK")
</pallas_src>

<mosaic_0001>
module attributes {stable_mosaic.version = 11 : i64} {
  func.func @basic_block_kernel(%arg0: i32, %arg1: memref<1x8x8x4xbf16, #tpu.memory_space<vmem>>, %arg2: memref<1x8x8x4xbf16, #tpu.memory_space<vmem>>, %arg3: memref<1x8x8x4xbf16, #tpu.memory_space<vmem>>, %arg4: memref<1x8x8x4xbf16, #tpu.memory_space<vmem>>, %arg5: memref<1x4xf32, #tpu.memory_space<vmem>>, %arg6: memref<1x4xf32, #tpu.memory_space<vmem>>, %arg7: memref<36x128xbf16, #tpu.memory_space<vmem>>, %arg8: memref<1x128xf32, #tpu.memory_space<vmem>>, %arg9: memref<1156x128xbf16, #tpu.memory_space<vmem>>, %arg10: memref<1x128xf32, #tpu.memory_space<vmem>>, %arg11: memref<64x128xf32, #tpu.memory_space<vmem>>, %arg12: memref<4x9x9x4xbf16, #tpu.memory_space<vmem>>, %arg13: memref<64x36xbf16, #tpu.memory_space<vmem>>, %arg14: memref<1x10x10x128xbf16, #tpu.memory_space<vmem>>, %arg15: memref<64x1156xbf16, #tpu.memory_space<vmem>>) attributes {dimension_semantics = [#tpu.dimension_semantics<parallel>], iteration_bounds = array<i64: 2>, scalar_prefetch = 0 : i64, scratch_operands = 4 : i64, tpu.core_type = #tpu.core_type<tc>, window_params = [{transform_indices = @transform_0, window_bounds = array<i64: 1, 8, 8, 4>}, {transform_indices = @transform_1, window_bounds = array<i64: 1, 8, 8, 4>}, {transform_indices = @transform_2, window_bounds = array<i64: 1, 8, 8, 4>}, {transform_indices = @transform_3, window_bounds = array<i64: 1, 8, 8, 4>}, {pipeline_mode = #tpu.pipeline_mode<synchronous>, transform_indices = @transform_4, window_bounds = array<i64: 1, 4>}, {pipeline_mode = #tpu.pipeline_mode<synchronous>, transform_indices = @transform_5, window_bounds = array<i64: 1, 4>}, {pipeline_mode = #tpu.pipeline_mode<synchronous>, transform_indices = @transform_6, window_bounds = array<i64: 36, 128>}, {pipeline_mode = #tpu.pipeline_mode<synchronous>, transform_indices = @transform_7, window_bounds = array<i64: 1, 128>}, {pipeline_mode = #tpu.pipeline_mode<synchronous>, transform_indices = @transform_8, window_bounds = array<i64: 1156, 128>}, {pipeline_mode = #tpu.pipeline_mode<synchronous>, transform_indices = @transform_9, window_bounds = array<i64: 1, 128>}, {transform_indices = @transform_10, window_bounds = array<i64: 64, 128>}]} {
    %cst = arith.constant 0.000000e+00 : bf16
    %0 = vector.broadcast %cst : bf16 to vector<4x1x9x4xbf16>
    %c0 = arith.constant 0 : index
    %c0_0 = arith.constant 0 : index
    %c0_1 = arith.constant 0 : index
    %c0_2 = arith.constant 0 : index
    %1 = vector.load %arg12[%c0, %c0_0, %c0_1, %c0_2] : memref<4x9x9x4xbf16, #tpu.memory_space<vmem>>, vector<4x1x9x4xbf16>
    tpu.vector_store %arg12[%c0, %c0_0, %c0_1, %c0_2], %0 {strides = array<i32>} : memref<4x9x9x4xbf16, #tpu.memory_space<vmem>>, vector<4x1x9x4xbf16>,
    %cst_3 = arith.constant 0.000000e+00 : bf16
    %2 = vector.broadcast %cst_3 : bf16 to vector<4x9x1x4xbf16>
    %c0_4 = arith.constant 0 : index
    %c0_5 = arith.constant 0 : index
    %c0_6 = arith.constant 0 : index
    %c0_7 = arith.constant 0 : index
    %3 = vector.load %arg12[%c0_4, %c0_5, %c0_6, %c0_7] : memref<4x9x9x4xbf16, #tpu.memory_space<vmem>>, vector<4x9x1x4xbf16>
    tpu.vector_store %arg12[%c0_4, %c0_5, %c0_6, %c0_7], %2 {strides = array<i32>} : memref<4x9x9x4xbf16, #tpu.memory_space<vmem>>, vector<4x9x1x4xbf16>,
    %c0_8 = arith.constant 0 : index
    %c0_9 = arith.constant 0 : index
    %c0_10 = arith.constant 0 : index
    %c0_11 = arith.constant 0 : index
    %4 = vector.load %arg1[%c0_8, %c0_9, %c0_10, %c0_11] : memref<1x8x8x4xbf16, #tpu.memory_space<vmem>>, vector<1x8x8x4xbf16>
    %c0_12 = arith.constant 0 : index
    %c0_13 = arith.constant 0 : index
    %5 = vector.load %arg5[%c0_12, %c0_13] : memref<1x4xf32, #tpu.memory_space<vmem>>, vector<1x4xf32>
    %c0_14 = arith.constant 0 : index
    %c0_15 = arith.constant 0 : index
    %6 = vector.load %arg6[%c0_14, %c0_15] : memref<1x4xf32, #tpu.memory_space<vmem>>, vector<1x4xf32>
    %c0_16 = arith.constant 0 : index
    %c0_17 = arith.constant 0 : index
    %c0_18 = arith.constant 0 : index
    %c0_19 = arith.constant 0 : index
    %7 = vector.load %arg2[%c0_16, %c0_17, %c0_18, %c0_19] : memref<1x8x8x4xbf16, #tpu.memory_space<vmem>>, vector<1x8x8x4xbf16>
    %c0_20 = arith.constant 0 : index
    %c0_21 = arith.constant 0 : index
    %c0_22 = arith.constant 0 : index
    %c0_23 = arith.constant 0 : index
    %8 = vector.load %arg3[%c0_20, %c0_21, %c0_22, %c0_23] : memref<1x8x8x4xbf16, #tpu.memory_space<vmem>>, vector<1x8x8x4xbf16>
    %c0_24 = arith.constant 0 : index
    %c0_25 = arith.constant 0 : index
    %c0_26 = arith.constant 0 : index
    %c0_27 = arith.constant 0 : index
    %9 = vector.load %arg4[%c0_24, %c0_25, %c0_26, %c0_27] : memref<1x8x8x4xbf16, #tpu.memory_space<vmem>>, vector<1x8x8x4xbf16>
    %10 = arith.extf %4 : vector<1x8x8x4xbf16> to vector<1x8x8x4xf32>
    %11 = vector.shape_cast %5 : vector<1x4xf32> to vector<1x1x1x4xf32>
    %12 = vector.broadcast %11 : vector<1x1x1x4xf32> to vector<1x8x8x4xf32>
    %13 = arith.mulf %10, %12 : vector<1x8x8x4xf32>
    %14 = vector.shape_cast %6 : vector<1x4xf32> to vector<1x1x1x4xf32>
    %15 = vector.broadcast %14 : vector<1x1x1x4xf32> to vector<1x8x8x4xf32>
    %16 = arith.addf %13, %15 : vector<1x8x8x4xf32>
    %cst_28 = arith.constant 0.000000e+00 : f32
    %17 = vector.broadcast %cst_28 : f32 to vector<1x8x8x4xf32>
    %18 = arith.maximumf %16, %17 : vector<1x8x8x4xf32>
    %19 = arith.truncf %18 : vector<1x8x8x4xf32> to vector<1x8x8x4xbf16>
    %c0_29 = arith.constant 0 : index
    %c1 = arith.constant 1 : index
    %c1_30 = arith.constant 1 : index
    %c0_31 = arith.constant 0 : index
    %20 = vector.load %arg12[%c0_29, %c1, %c1_30, %c0_31] : memref<4x9x9x4xbf16, #tpu.memory_space<vmem>>, vector<1x8x8x4xbf16>
    tpu.vector_store %arg12[%c0_29, %c1, %c1_30, %c0_31], %19 {strides = array<i32>} : memref<4x9x9x4xbf16, #tpu.memory_space<vmem>>, vector<1x8x8x4xbf16>,
    %21 = arith.extf %7 : vector<1x8x8x4xbf16> to vector<1x8x8x4xf32>
    %22 = vector.shape_cast %5 : vector<1x4xf32> to vector<1x1x1x4xf32>
    %23 = vector.broadcast %22 : vector<1x1x1x4xf32> to vector<1x8x8x4xf32>
    %24 = arith.mulf %21, %23 : vector<1x8x8x4xf32>
    %25 = vector.shape_cast %6 : vector<1x4xf32> to vector<1x1x1x4xf32>
    %26 = vector.broadcast %25 : vector<1x1x1x4xf32> to vector<1x8x8x4xf32>
    %27 = arith.addf %24, %26 : vector<1x8x8x4xf32>
    %cst_32 = arith.constant 0.000000e+00 : f32
    %28 = vector.broadcast %cst_32 : f32 to vector<1x8x8x4xf32>
    %29 = arith.maximumf %27, %28 : vector<1x8x8x4xf32>
    %30 = arith.truncf %29 : vector<1x8x8x4xf32> to vector<1x8x8x4xbf16>
    %c1_33 = arith.constant 1 : index
    %c1_34 = arith.constant 1 : index
    %c1_35 = arith.constant 1 : index
    %c0_36 = arith.constant 0 : index
    %31 = vector.load %arg12[%c1_33, %c1_34, %c1_35, %c0_36] : memref<4x9x9x4xbf16, #tpu.memory_space<vmem>>, vector<1x8x8x4xbf16>
    tpu.vector_store %arg12[%c1_33, %c1_34, %c1_35, %c0_36], %30 {strides = array<i32>} : memref<4x9x9x4xbf16, #tpu.memory_space<vmem>>, vector<1x8x8x4xbf16>,
    %32 = arith.extf %8 : vector<1x8x8x4xbf16> to vector<1x8x8x4xf32>
    %33 = vector.shape_cast %5 : vector<1x4xf32> to vector<1x1x1x4xf32>
    %34 = vector.broadcast %33 : vector<1x1x1x4xf32> to vector<1x8x8x4xf32>
    %35 = arith.mulf %32, %34 : vector<1x8x8x4xf32>
    %36 = vector.shape_cast %6 : vector<1x4xf32> to vector<1x1x1x4xf32>
    %37 = vector.broadcast %36 : vector<1x1x1x4xf32> to vector<1x8x8x4xf32>
    %38 = arith.addf %35, %37 : vector<1x8x8x4xf32>
    %cst_37 = arith.constant 0.000000e+00 : f32
    %39 = vector.broadcast %cst_37 : f32 to vector<1x8x8x4xf32>
    %40 = arith.maximumf %38, %39 : vector<1x8x8x4xf32>
    %41 = arith.truncf %40 : vector<1x8x8x4xf32> to vector<1x8x8x4xbf16>
    %c2 = arith.constant 2 : index
    %c1_38 = arith.constant 1 : index
    %c1_39 = arith.constant 1 : index
    %c0_40 = arith.constant 0 : index
    %42 = vector.load %arg12[%c2, %c1_38, %c1_39, %c0_40] : memref<4x9x9x4xbf16, #tpu.memory_space<vmem>>, vector<1x8x8x4xbf16>
    tpu.vector_store %arg12[%c2, %c1_38, %c1_39, %c0_40], %41 {strides = array<i32>} : memref<4x9x9x4xbf16, #tpu.memory_space<vmem>>, vector<1x8x8x4xbf16>,
    %43 = arith.extf %9 : vector<1x8x8x4xbf16> to vector<1x8x8x4xf32>
    %44 = vector.shape_cast %5 : vector<1x4xf32> to vector<1x1x1x4xf32>
    %45 = vector.broadcast %44 : vector<1x1x1x4xf32> to vector<1x8x8x4xf32>
    %46 = arith.mulf %43, %45 : vector<1x8x8x4xf32>
    %47 = vector.shape_cast %6 : vector<1x4xf32> to vector<1x1x1x4xf32>
    %48 = vector.broadcast %47 : vector<1x1x1x4xf32> to vector<1x8x8x4xf32>
    %49 = arith.addf %46, %48 : vector<1x8x8x4xf32>
    %cst_41 = arith.constant 0.000000e+00 : f32
    %50 = vector.broadcast %cst_41 : f32 to vector<1x8x8x4xf32>
    %51 = arith.maximumf %49, %50 : vector<1x8x8x4xf32>
    %52 = arith.truncf %51 : vector<1x8x8x4xf32> to vector<1x8x8x4xbf16>
    %c3 = arith.constant 3 : index
    %c1_42 = arith.constant 1 : index
    %c1_43 = arith.constant 1 : index
    %c0_44 = arith.constant 0 : index
    %53 = vector.load %arg12[%c3, %c1_42, %c1_43, %c0_44] : memref<4x9x9x4xbf16, #tpu.memory_space<vmem>>, vector<1x8x8x4xbf16>
    tpu.vector_store %arg12[%c3, %c1_42, %c1_43, %c0_44], %52 {strides = array<i32>} : memref<4x9x9x4xbf16, #tpu.memory_space<vmem>>, vector<1x8x8x4xbf16>,
    %c3_45 = arith.constant 3 : index
    %c0_46 = arith.constant 0 : index
    %c0_47 = arith.constant 0 : index
    %c0_48 = arith.constant 0 : index
    %54 = vector.load %arg12[%c3_45, %c0_46, %c0_47, %c0_48] : memref<4x9x9x4xbf16, #tpu.memory_space<vmem>>, vector<1x8x8x4xbf16>
    %55 = vector.shape_cast %54 : vector<1x8x8x4xbf16> to vector<64x4xbf16>
    %c0_49 = arith.constant 0 : index
    %c0_50 = arith.constant 0 : index
    %56 = vector.load %arg13[%c0_49, %c0_50] : memref<64x36xbf16, #tpu.memory_space<vmem>>, vector<64x4xbf16>
    tpu.vector_store %arg13[%c0_49, %c0_50], %55 {strides = array<i32>} : memref<64x36xbf16, #tpu.memory_space<vmem>>, vector<64x4xbf16>,
    %c2_51 = arith.constant 2 : index
    %c0_52 = arith.constant 0 : index
    %c1_53 = arith.constant 1 : index
    %c0_54 = arith.constant 0 : index
    %57 = vector.load %arg12[%c2_51, %c0_52, %c1_53, %c0_54] : memref<4x9x9x4xbf16, #tpu.memory_space<vmem>>, vector<1x8x8x4xbf16>
    %58 = vector.shape_cast %57 : vector<1x8x8x4xbf16> to vector<64x4xbf16>
    %c0_55 = arith.constant 0 : index
    %c4 = arith.constant 4 : index
    %59 = vector.load %arg13[%c0_55, %c4] : memref<64x36xbf16, #tpu.memory_space<vmem>>, vector<64x4xbf16>
    tpu.vector_store %arg13[%c0_55, %c4], %58 {strides = array<i32>} : memref<64x36xbf16, #tpu.memory_space<vmem>>, vector<64x4xbf16>,
    %c3_56 = arith.constant 3 : index
    %c0_57 = arith.constant 0 : index
    %c1_58 = arith.constant 1 : index
    %c0_59 = arith.constant 0 : index
    %60 = vector.load %arg12[%c3_56, %c0_57, %c1_58, %c0_59] : memref<4x9x9x4xbf16, #tpu.memory_space<vmem>>, vector<1x8x8x4xbf16>
    %61 = vector.shape_cast %60 : vector<1x8x8x4xbf16> to vector<64x4xbf16>
    %c0_60 = arith.constant 0 : index
    %c8 = arith.constant 8 : index
    %62 = vector.load %arg13[%c0_60, %c8] : memref<64x36xbf16, #tpu.memory_space<vmem>>, vector<64x4xbf16>
    tpu.vector_store %arg13[%c0_60, %c8], %61 {strides = array<i32>} : memref<64x36xbf16, #tpu.memory_space<vmem>>, vector<64x4xbf16>,
    %c1_61 = arith.constant 1 : index
    %c1_62 = arith.constant 1 : index
    %c0_63 = arith.constant 0 : index
    %c0_64 = arith.constant 0 : index
    %63 = vector.load %arg12[%c1_61, %c1_62, %c0_63, %c0_64] : memref<4x9x9x4xbf16, #tpu.memory_space<vmem>>, vector<1x8x8x4xbf16>
    %64 = vector.shape_cast %63 : vector<1x8x8x4xbf16> to vector<64x4xbf16>
    %c0_65 = arith.constant 0 : index
    %c12 = arith.constant 12 : index
    %65 = vector.load %arg13[%c0_65, %c12] : memref<64x36xbf16, #tpu.memory_space<vmem>>, vector<64x4xbf16>
    tpu.vector_store %arg13[%c0_65, %c12], %64 {strides = array<i32>} : memref<64x36xbf16, #tpu.memory_space<vmem>>, vector<64x4xbf16>,
    %c0_66 = arith.constant 0 : index
    %c1_67 = arith.constant 1 : index
    %c1_68 = arith.constant 1 : index
    %c0_69 = arith.constant 0 : index
    %66 = vector.load %arg12[%c0_66, %c1_67, %c1_68, %c0_69] : memref<4x9x9x4xbf16, #tpu.memory_space<vmem>>, vector<1x8x8x4xbf16>
    %67 = vector.shape_cast %66 : vector<1x8x8x4xbf16> to vector<64x4xbf16>
    %c0_70 = arith.constant 0 : index
    %c16 = arith.constant 16 : index
    %68 = vector.load %arg13[%c0_70, %c16] : memref<64x36xbf16, #tpu.memory_space<vmem>>, vector<64x4xbf16>
    tpu.vector_store %arg13[%c0_70, %c16], %67 {strides = array<i32>} : memref<64x36xbf16, #tpu.memory_space<vmem>>, vector<64x4xbf16>,
    %c1_71 = arith.constant 1 : index
    %c1_72 = arith.constant 1 : index
    %c1_73 = arith.constant 1 : index
    %c0_74 = arith.constant 0 : index
    %69 = vector.load %arg12[%c1_71, %c1_72, %c1_73, %c0_74] : memref<4x9x9x4xbf16, #tpu.memory_space<vmem>>, vector<1x8x8x4xbf16>
    %70 = vector.shape_cast %69 : vector<1x8x8x4xbf16> to vector<64x4xbf16>
    %c0_75 = arith.constant 0 : index
    %c20 = arith.constant 20 : index
    %71 = vector.load %arg13[%c0_75, %c20] : memref<64x36xbf16, #tpu.memory_space<vmem>>, vector<64x4xbf16>
    tpu.vector_store %arg13[%c0_75, %c20], %70 {strides = array<i32>} : memref<64x36xbf16, #tpu.memory_space<vmem>>, vector<64x4xbf16>,
    %c3_76 = arith.constant 3 : index
    %c1_77 = arith.constant 1 : index
    %c0_78 = arith.constant 0 : index
    %c0_79 = arith.constant 0 : index
    %72 = vector.load %arg12[%c3_76, %c1_77, %c0_78, %c0_79] : memref<4x9x9x4xbf16, #tpu.memory_space<vmem>>, vector<1x8x8x4xbf16>
    %73 = vector.shape_cast %72 : vector<1x8x8x4xbf16> to vector<64x4xbf16>
    %c0_80 = arith.constant 0 : index
    %c24 = arith.constant 24 : index
    %74 = vector.load %arg13[%c0_80, %c24] : memref<64x36xbf16, #tpu.memory_space<vmem>>, vector<64x4xbf16>
    tpu.vector_store %arg13[%c0_80, %c24], %73 {strides = array<i32>} : memref<64x36xbf16, #tpu.memory_space<vmem>>, vector<64x4xbf16>,
    %c2_81 = arith.constant 2 : index
    %c1_82 = arith.constant 1 : index
    %c1_83 = arith.constant 1 : index
    %c0_84 = arith.constant 0 : index
    %75 = vector.load %arg12[%c2_81, %c1_82, %c1_83, %c0_84] : memref<4x9x9x4xbf16, #tpu.memory_space<vmem>>, vector<1x8x8x4xbf16>
    %76 = vector.shape_cast %75 : vector<1x8x8x4xbf16> to vector<64x4xbf16>
    %c0_85 = arith.constant 0 : index
    %c28 = arith.constant 28 : index
    %77 = vector.load %arg13[%c0_85, %c28] : memref<64x36xbf16, #tpu.memory_space<vmem>>, vector<64x4xbf16>
    tpu.vector_store %arg13[%c0_85, %c28], %76 {strides = array<i32>} : memref<64x36xbf16, #tpu.memory_space<vmem>>, vector<64x4xbf16>,
    %c3_86 = arith.constant 3 : index
    %c1_87 = arith.constant 1 : index
    %c1_88 = arith.constant 1 : index
    %c0_89 = arith.constant 0 : index
    %78 = vector.load %arg12[%c3_86, %c1_87, %c1_88, %c0_89] : memref<4x9x9x4xbf16, #tpu.memory_space<vmem>>, vector<1x8x8x4xbf16>
    %79 = vector.shape_cast %78 : vector<1x8x8x4xbf16> to vector<64x4xbf16>
    %c0_90 = arith.constant 0 : index
    %c32 = arith.constant 32 : index
    %80 = vector.load %arg13[%c0_90, %c32] : memref<64x36xbf16, #tpu.memory_space<vmem>>, vector<64x4xbf16>
    tpu.vector_store %arg13[%c0_90, %c32], %79 {strides = array<i32>} : memref<64x36xbf16, #tpu.memory_space<vmem>>, vector<64x4xbf16>,
    %c0_91 = arith.constant 0 : index
    %c0_92 = arith.constant 0 : index
    %81 = vector.load %arg13[%c0_91, %c0_92] : memref<64x36xbf16, #tpu.memory_space<vmem>>, vector<64x36xbf16>
    %c0_93 = arith.constant 0 : index
    %c0_94 = arith.constant 0 : index
    %82 = vector.load %arg7[%c0_93, %c0_94] : memref<36x128xbf16, #tpu.memory_space<vmem>>, vector<36x128xbf16>
    %cst_95 = arith.constant dense<0.000000e+00> : vector<64x128xf32>
    %83 = tpu.matmul %81, %82, %cst_95 {dimension_numbers = #tpu.dot_dimension_numbers<[1], [0], [0], [1], [0, 0, 1, 1], [], []>} : vector<64x36xbf16>, vector<36x128xbf16>, vector<64x128xf32> -> vector<64x128xf32>
    %c0_96 = arith.constant 0 : index
    %c0_97 = arith.constant 0 : index
    %84 = vector.load %arg8[%c0_96, %c0_97] : memref<1x128xf32, #tpu.memory_space<vmem>>, vector<1x128xf32>
    %85 = vector.broadcast %84 : vector<1x128xf32> to vector<64x128xf32>
    %86 = arith.addf %83, %85 : vector<64x128xf32>
    %cst_98 = arith.constant 0.000000e+00 : f32
    %87 = vector.broadcast %cst_98 : f32 to vector<64x128xf32>
    %88 = arith.maximumf %86, %87 : vector<64x128xf32>
    %89 = arith.truncf %88 : vector<64x128xf32> to vector<64x128xbf16>
    %cst_99 = arith.constant 0.000000e+00 : bf16
    %90 = vector.broadcast %cst_99 : bf16 to vector<1x1x10x128xbf16>
    %c0_100 = arith.constant 0 : index
    %c0_101 = arith.constant 0 : index
    %c0_102 = arith.constant 0 : index
    %c0_103 = arith.constant 0 : index
    %91 = vector.load %arg14[%c0_100, %c0_101, %c0_102, %c0_103] : memref<1x10x10x128xbf16, #tpu.memory_space<vmem>>, vector<1x1x10x128xbf16>
    tpu.vector_store %arg14[%c0_100, %c0_101, %c0_102, %c0_103], %90 {strides = array<i32>} : memref<1x10x10x128xbf16, #tpu.memory_space<vmem>>, vector<1x1x10x128xbf16>,
    %cst_104 = arith.constant 0.000000e+00 : bf16
    %92 = vector.broadcast %cst_104 : bf16 to vector<1x1x10x128xbf16>
    %c0_105 = arith.constant 0 : index
    %c9 = arith.constant 9 : index
    %c0_106 = arith.constant 0 : index
    %c0_107 = arith.constant 0 : index
    %93 = vector.load %arg14[%c0_105, %c9, %c0_106, %c0_107] : memref<1x10x10x128xbf16, #tpu.memory_space<vmem>>, vector<1x1x10x128xbf16>
    tpu.vector_store %arg14[%c0_105, %c9, %c0_106, %c0_107], %92 {strides = array<i32>} : memref<1x10x10x128xbf16, #tpu.memory_space<vmem>>, vector<1x1x10x128xbf16>,
    %cst_108 = arith.constant 0.000000e+00 : bf16
    %94 = vector.broadcast %cst_108 : bf16 to vector<1x10x1x128xbf16>
    %c0_109 = arith.constant 0 : index
    %c0_110 = arith.constant 0 : index
    %c0_111 = arith.constant 0 : index
    %c0_112 = arith.constant 0 : index
    %95 = vector.load %arg14[%c0_109, %c0_110, %c0_111, %c0_112] : memref<1x10x10x128xbf16, #tpu.memory_space<vmem>>, vector<1x10x1x128xbf16>
    tpu.vector_store %arg14[%c0_109, %c0_110, %c0_111, %c0_112], %94 {strides = array<i32>} : memref<1x10x10x128xbf16, #tpu.memory_space<vmem>>, vector<1x10x1x128xbf16>,
    %cst_113 = arith.constant 0.000000e+00 : bf16
    %96 = vector.broadcast %cst_113 : bf16 to vector<1x10x1x128xbf16>
    %c0_114 = arith.constant 0 : index
    %c0_115 = arith.constant 0 : index
    %c9_116 = arith.constant 9 : index
    %c0_117 = arith.constant 0 : index
    %97 = vector.load %arg14[%c0_114, %c0_115, %c9_116, %c0_117] : memref<1x10x10x128xbf16, #tpu.memory_space<vmem>>, vector<1x10x1x128xbf16>
    tpu.vector_store %arg14[%c0_114, %c0_115, %c9_116, %c0_117], %96 {strides = array<i32>} : memref<1x10x10x128xbf16, #tpu.memory_space<vmem>>, vector<1x10x1x128xbf16>,
    %98 = vector.shape_cast %89 : vector<64x128xbf16> to vector<1x8x8x128xbf16>
    %c0_118 = arith.constant 0 : index
    %c1_119 = arith.constant 1 : index
    %c1_120 = arith.constant 1 : index
    %c0_121 = arith.constant 0 : index
    %99 = vector.load %arg14[%c0_118, %c1_119, %c1_120, %c0_121] : memref<1x10x10x128xbf16, #tpu.memory_space<vmem>>, vector<1x8x8x128xbf16>
    tpu.vector_store %arg14[%c0_118, %c1_119, %c1_120, %c0_121], %98 {strides = array<i32>} : memref<1x10x10x128xbf16, #tpu.memory_space<vmem>>, vector<1x8x8x128xbf16>,
    %c0_122 = arith.constant 0 : index
    %c0_123 = arith.constant 0 : index
    %c0_124 = arith.constant 0 : index
    %c0_125 = arith.constant 0 : index
    %100 = vector.load %arg14[%c0_122, %c0_123, %c0_124, %c0_125] : memref<1x10x10x128xbf16, #tpu.memory_space<vmem>>, vector<1x8x8x128xbf16>
    %101 = vector.shape_cast %100 : vector<1x8x8x128xbf16> to vector<64x128xbf16>
    %c0_126 = arith.constant 0 : index
    %c0_127 = arith.constant 0 : index
    %102 = vector.load %arg15[%c0_126, %c0_127] : memref<64x1156xbf16, #tpu.memory_space<vmem>>, vector<64x128xbf16>
    tpu.vector_store %arg15[%c0_126, %c0_127], %101 {strides = array<i32>} : memref<64x1156xbf16, #tpu.memory_space<vmem>>, vector<64x128xbf16>,
    %c0_128 = arith.constant 0 : index
    %c0_129 = arith.constant 0 : index
    %c1_130 = arith.constant 1 : index
    %c0_131 = arith.constant 0 : index
    %103 = vector.load %arg14[%c0_128, %c0_129, %c1_130, %c0_131] : memref<1x10x10x128xbf16, #tpu.memory_space<vmem>>, vector<1x8x8x128xbf16>
    %104 = vector.shape_cast %103 : vector<1x8x8x128xbf16> to vector<64x128xbf16>
    %c0_132 = arith.constant 0 : index
    %c128 = arith.constant 128 : index
    %105 = vector.load %arg15[%c0_132, %c128] : memref<64x1156xbf16, #tpu.memory_space<vmem>>, vector<64x128xbf16>
    tpu.vector_store %arg15[%c0_132, %c128], %104 {strides = array<i32>} : memref<64x1156xbf16, #tpu.memory_space<vmem>>, vector<64x128xbf16>,
    %c0_133 = arith.constant 0 : index
    %c0_134 = arith.constant 0 : index
    %c2_135 = arith.constant 2 : index
    %c0_136 = arith.constant 0 : index
    %106 = vector.load %arg14[%c0_133, %c0_134, %c2_135, %c0_136] : memref<1x10x10x128xbf16, #tpu.memory_space<vmem>>, vector<1x8x8x128xbf16>
    %107 = vector.shape_cast %106 : vector<1x8x8x128xbf16> to vector<64x128xbf16>
    %c0_137 = arith.constant 0 : index
    %c256 = arith.constant 256 : index
    %108 = vector.load %arg15[%c0_137, %c256] : memref<64x1156xbf16, #tpu.memory_space<vmem>>, vector<64x128xbf16>
    tpu.vector_store %arg15[%c0_137, %c256], %107 {strides = array<i32>} : memref<64x1156xbf16, #tpu.memory_space<vmem>>, vector<64x128xbf16>,
    %c0_138 = arith.constant 0 : index
    %c1_139 = arith.constant 1 : index
    %c0_140 = arith.constant 0 : index
    %c0_141 = arith.constant 0 : index
    %109 = vector.load %arg14[%c0_138, %c1_139, %c0_140, %c0_141] : memref<1x10x10x128xbf16, #tpu.memory_space<vmem>>, vector<1x8x8x128xbf16>
    %110 = vector.shape_cast %109 : vector<1x8x8x128xbf16> to vector<64x128xbf16>
    %c0_142 = arith.constant 0 : index
    %c384 = arith.constant 384 : index
    %111 = vector.load %arg15[%c0_142, %c384] : memref<64x1156xbf16, #tpu.memory_space<vmem>>, vector<64x128xbf16>
    tpu.vector_store %arg15[%c0_142, %c384], %110 {strides = array<i32>} : memref<64x1156xbf16, #tpu.memory_space<vmem>>, vector<64x128xbf16>,
    %c0_143 = arith.constant 0 : index
    %c1_144 = arith.constant 1 : index
    %c1_145 = arith.constant 1 : index
    %c0_146 = arith.constant 0 : index
    %112 = vector.load %arg14[%c0_143, %c1_144, %c1_145, %c0_146] : memref<1x10x10x128xbf16, #tpu.memory_space<vmem>>, vector<1x8x8x128xbf16>
    %113 = vector.shape_cast %112 : vector<1x8x8x128xbf16> to vector<64x128xbf16>
    %c0_147 = arith.constant 0 : index
    %c512 = arith.constant 512 : index
    %114 = vector.load %arg15[%c0_147, %c512] : memref<64x1156xbf16, #tpu.memory_space<vmem>>, vector<64x128xbf16>
    tpu.vector_store %arg15[%c0_147, %c512], %113 {strides = array<i32>} : memref<64x1156xbf16, #tpu.memory_space<vmem>>, vector<64x128xbf16>,
    %c0_148 = arith.constant 0 : index
    %c1_149 = arith.constant 1 : index
    %c2_150 = arith.constant 2 : index
    %c0_151 = arith.constant 0 : index
    %115 = vector.load %arg14[%c0_148, %c1_149, %c2_150, %c0_151] : memref<1x10x10x128xbf16, #tpu.memory_space<vmem>>, vector<1x8x8x128xbf16>
    %116 = vector.shape_cast %115 : vector<1x8x8x128xbf16> to vector<64x128xbf16>
    %c0_152 = arith.constant 0 : index
    %c640 = arith.constant 640 : index
    %117 = vector.load %arg15[%c0_152, %c640] : memref<64x1156xbf16, #tpu.memory_space<vmem>>, vector<64x128xbf16>
    tpu.vector_store %arg15[%c0_152, %c640], %116 {strides = array<i32>} : memref<64x1156xbf16, #tpu.memory_space<vmem>>, vector<64x128xbf16>,
    %c0_153 = arith.constant 0 : index
    %c2_154 = arith.constant 2 : index
    %c0_155 = arith.constant 0 : index
    %c0_156 = arith.constant 0 : index
    %118 = vector.load %arg14[%c0_153, %c2_154, %c0_155, %c0_156] : memref<1x10x10x128xbf16, #tpu.memory_space<vmem>>, vector<1x8x8x128xbf16>
    %119 = vector.shape_cast %118 : vector<1x8x8x128xbf16> to vector<64x128xbf16>
    %c0_157 = arith.constant 0 : index
    %c768 = arith.constant 768 : index
    %120 = vector.load %arg15[%c0_157, %c768] : memref<64x1156xbf16, #tpu.memory_space<vmem>>, vector<64x128xbf16>
    tpu.vector_store %arg15[%c0_157, %c768], %119 {strides = array<i32>} : memref<64x1156xbf16, #tpu.memory_space<vmem>>, vector<64x128xbf16>,
    %c0_158 = arith.constant 0 : index
    %c2_159 = arith.constant 2 : index
    %c1_160 = arith.constant 1 : index
    %c0_161 = arith.constant 0 : index
    %121 = vector.load %arg14[%c0_158, %c2_159, %c1_160, %c0_161] : memref<1x10x10x128xbf16, #tpu.memory_space<vmem>>, vector<1x8x8x128xbf16>
    %122 = vector.shape_cast %121 : vector<1x8x8x128xbf16> to vector<64x128xbf16>
    %c0_162 = arith.constant 0 : index
    %c896 = arith.constant 896 : index
    %123 = vector.load %arg15[%c0_162, %c896] : memref<64x1156xbf16, #tpu.memory_space<vmem>>, vector<64x128xbf16>
    tpu.vector_store %arg15[%c0_162, %c896], %122 {strides = array<i32>} : memref<64x1156xbf16, #tpu.memory_space<vmem>>, vector<64x128xbf16>,
    %c0_163 = arith.constant 0 : index
    %c2_164 = arith.constant 2 : index
    %c2_165 = arith.constant 2 : index
    %c0_166 = arith.constant 0 : index
    %124 = vector.load %arg14[%c0_163, %c2_164, %c2_165, %c0_166] : memref<1x10x10x128xbf16, #tpu.memory_space<vmem>>, vector<1x8x8x128xbf16>
    %125 = vector.shape_cast %124 : vector<1x8x8x128xbf16> to vector<64x128xbf16>
    %c0_167 = arith.constant 0 : index
    %c1024 = arith.constant 1024 : index
    %126 = vector.load %arg15[%c0_167, %c1024] : memref<64x1156xbf16, #tpu.memory_space<vmem>>, vector<64x128xbf16>
    tpu.vector_store %arg15[%c0_167, %c1024], %125 {strides = array<i32>} : memref<64x1156xbf16, #tpu.memory_space<vmem>>, vector<64x128xbf16>,
    %127 = vector.shape_cast %4 : vector<1x8x8x4xbf16> to vector<64x4xbf16>
    %c0_168 = arith.constant 0 : index
    %c1152 = arith.constant 1152 : index
    %128 = vector.load %arg15[%c0_168, %c1152] : memref<64x1156xbf16, #tpu.memory_space<vmem>>, vector<64x4xbf16>
    tpu.vector_store %arg15[%c0_168, %c1152], %127 {strides = array<i32>} : memref<64x1156xbf16, #tpu.memory_space<vmem>>, vector<64x4xbf16>,
    %c0_169 = arith.constant 0 : index
    %c0_170 = arith.constant 0 : index
    %129 = vector.load %arg15[%c0_169, %c0_170] : memref<64x1156xbf16, #tpu.memory_space<vmem>>, vector<64x1156xbf16>
    %c0_171 = arith.constant 0 : index
    %c0_172 = arith.constant 0 : index
    %130 = vector.load %arg9[%c0_171, %c0_172] : memref<1156x128xbf16, #tpu.memory_space<vmem>>, vector<1156x128xbf16>
    %cst_173 = arith.constant dense<0.000000e+00> : vector<64x128xf32>
    %131 = tpu.matmul %129, %130, %cst_173 {dimension_numbers = #tpu.dot_dimension_numbers<[1], [0], [0], [1], [0, 0, 1, 1], [], []>} : vector<64x1156xbf16>, vector<1156x128xbf16>, vector<64x128xf32> -> vector<64x128xf32>
    %c0_174 = arith.constant 0 : index
    %c0_175 = arith.constant 0 : index
    %132 = vector.load %arg10[%c0_174, %c0_175] : memref<1x128xf32, #tpu.memory_space<vmem>>, vector<1x128xf32>
    %133 = vector.broadcast %132 : vector<1x128xf32> to vector<64x128xf32>
    %134 = arith.addf %131, %133 : vector<64x128xf32>
    %c0_176 = arith.constant 0 : index
    %c0_177 = arith.constant 0 : index
    %135 = vector.load %arg11[%c0_176, %c0_177] : memref<64x128xf32, #tpu.memory_space<vmem>>, vector<64x128xf32>
    tpu.vector_store %arg11[%c0_176, %c0_177], %134 {strides = array<i32>} : memref<64x128xf32, #tpu.memory_space<vmem>>, vector<64x128xf32>,
    return
  }
  func.func @transform_0(%arg0: i32) -> (i32, i32, i32, i32) {
    %c0_i32 = arith.constant 0 : i32
    %c0_i32_0 = arith.constant 0 : i32
    %c0_i32_1 = arith.constant 0 : i32
    %c0_i32_2 = arith.constant 0 : i32
    return %arg0, %c0_i32, %c0_i32_0, %c0_i32_1 : i32, i32, i32, i32
  }
  func.func @transform_1(%arg0: i32) -> (i32, i32, i32, i32) {
    %c0_i32 = arith.constant 0 : i32
    %c0_i32_0 = arith.constant 0 : i32
    %c0_i32_1 = arith.constant 0 : i32
    %c0_i32_2 = arith.constant 0 : i32
    return %arg0, %c0_i32, %c0_i32_0, %c0_i32_1 : i32, i32, i32, i32
  }
  func.func @transform_2(%arg0: i32) -> (i32, i32, i32, i32) {
    %c0_i32 = arith.constant 0 : i32
    %c0_i32_0 = arith.constant 0 : i32
    %c0_i32_1 = arith.constant 0 : i32
    %c0_i32_2 = arith.constant 0 : i32
    return %arg0, %c0_i32, %c0_i32_0, %c0_i32_1 : i32, i32, i32, i32
  }
  func.func @transform_3(%arg0: i32) -> (i32, i32, i32, i32) {
    %c0_i32 = arith.constant 0 : i32
    %c0_i32_0 = arith.constant 0 : i32
    %c0_i32_1 = arith.constant 0 : i32
    %c0_i32_2 = arith.constant 0 : i32
    return %arg0, %c0_i32, %c0_i32_0, %c0_i32_1 : i32, i32, i32, i32
  }
  func.func @transform_4(%arg0: i32) -> (i32, i32) {
    %c0_i32 = arith.constant 0 : i32
    %c0_i32_0 = arith.constant 0 : i32
    %c0_i32_1 = arith.constant 0 : i32
    return %c0_i32, %c0_i32_0 : i32, i32
  }
  func.func @transform_5(%arg0: i32) -> (i32, i32) {
    %c0_i32 = arith.constant 0 : i32
    %c0_i32_0 = arith.constant 0 : i32
    %c0_i32_1 = arith.constant 0 : i32
    return %c0_i32, %c0_i32_0 : i32, i32
  }
  func.func @transform_6(%arg0: i32) -> (i32, i32) {
    %c0_i32 = arith.constant 0 : i32
    %c0_i32_0 = arith.constant 0 : i32
    %c0_i32_1 = arith.constant 0 : i32
    return %c0_i32, %c0_i32_0 : i32, i32
  }
  func.func @transform_7(%arg0: i32) -> (i32, i32) {
    %c0_i32 = arith.constant 0 : i32
    %c0_i32_0 = arith.constant 0 : i32
    %c0_i32_1 = arith.constant 0 : i32
    return %c0_i32, %c0_i32_0 : i32, i32
  }
  func.func @transform_8(%arg0: i32) -> (i32, i32) {
    %c0_i32 = arith.constant 0 : i32
    %c0_i32_0 = arith.constant 0 : i32
    %c0_i32_1 = arith.constant 0 : i32
    return %c0_i32, %c0_i32_0 : i32, i32
  }
  func.func @transform_9(%arg0: i32) -> (i32, i32) {
    %c0_i32 = arith.constant 0 : i32
    %c0_i32_0 = arith.constant 0 : i32
    %c0_i32_1 = arith.constant 0 : i32
    return %c0_i32, %c0_i32_0 : i32, i32
  }
  func.func @transform_10(%arg0: i32) -> (i32, i32) {
    %c0_i32 = arith.constant 0 : i32
    %c0_i32_0 = arith.constant 0 : i32
    return %arg0, %c0_i32 : i32, i32
  }
}

</mosaic_0001>

<llo_original>
// kernel: tpu_custom_call.1
$region0: #{tpu_custom_call.1}
  #allocation0 [shape = 'u32[]', space=smem, size = 0x4, offset = 0x4, fixed_abs, tag = 'smem constant byte address 0x4 - core index']
  #allocation1 [shape = 'u32[144,128]{1,0:T(1,128)}', space=vmem, size = 0x12000, scoped, tag = 'internal scratch']
  #allocation2 [shape = 'bf16[4,9,9,4]{3,2,1,0:T(8,128)(2,1)}', space=vmem, size = 0x24000, scoped, tag = 'scratch operand']
  #allocation3 [shape = 'bf16[64,36]{1,0:T(16,128)(2,1)}', space=vmem, size = 0x4000, scoped, tag = 'scratch operand']
  #allocation4 [shape = 'bf16[1,10,10,128]{3,2,1,0:T(8,128)(2,1)}', space=vmem, size = 0xa000, scoped, tag = 'scratch operand']
  #allocation5 [shape = 'bf16[64,1156]{1,0:T(16,128)(2,1)}', space=vmem, size = 0x28000, scoped, tag = 'scratch operand']
  %s0 = inlined_call_operand.vmem [shape: bf16[2,8,8,4], index: 0, kind: input, shape index: {}]
  %s1 = inlined_call_operand.vmem [shape: bf16[2,8,8,4], index: 1, kind: input, shape index: {}]
  %s2 = inlined_call_operand.vmem [shape: bf16[2,8,8,4], index: 2, kind: input, shape index: {}]
  %s3 = inlined_call_operand.vmem [shape: bf16[2,8,8,4], index: 3, kind: input, shape index: {}]
  %s4 = inlined_call_operand.vmem [shape: f32[1,4], index: 4, kind: input, shape index: {}]
  %s5 = inlined_call_operand.vmem [shape: f32[1,4], index: 5, kind: input, shape index: {}]
  %s6 = inlined_call_operand.vmem [shape: bf16[36,128], index: 6, kind: input, shape index: {}]
  %s7 = inlined_call_operand.vmem [shape: f32[1,128], index: 7, kind: input, shape index: {}]
  %s8 = inlined_call_operand.hbm [shape: bf16[1156,128], index: 8, kind: input, shape index: {}]
  %s9 = inlined_call_operand.vmem [shape: f32[1,128], index: 9, kind: input, shape index: {}]
  %s10 = inlined_call_operand.hbm [shape: f32[128,128], index: 10, kind: output, shape index: {}]
  %s11 = sld [smem:[#allocation0]]
  $region77: #{tpu_custom_call.1} parent=0
    _
  %s13 = ssub.s32 1, %s11
  %s14 = scalar_select 0, %s13, %s11
  $region1: #{tpu_custom_call.1} parent=0
    #allocation6 [shape = 'u8[296960]{0}', space=vmem, size = 0x48800, scoped, tag = 'input window, operand 8, single buffered']
    #allocation7 [shape = 's32[2]{0}', space=sflag, size = 0x8, scoped, tag = 'scoped memory for tpu_custom_call.1']
    #allocation8 [shape = 's32[2]{0}', space=sflag, size = 0x8, scoped, tag = 'scoped memory for tpu_custom_call.1']
    #allocation9 [shape = 'u8[65536]{0}', space=vmem, size = 0x10000, scoped, tag = 'output window, operand 0']
    %15 = vsyncpa [#allocation7], 0
    %16 = vsyncpa [#allocation8], 0
    %s17 = scalar_lea.sflag [#allocation8], 1
    %18 = vsyncpa %s17, 0
    loop: start=0, step=1, limit=4
    $region2: #{tpu_custom_call.1} parent=1 // loop_pre_header
      _
    $region3: #{tpu_custom_call.1} parent=1 // loop_header
      %s20 = sphi 0, %s24
      %p21 = scmp.ge.s32.totalorder %s20, 4
      %s30 = sphi 0, %s32
      %s33 = sphi 0, %s30
      %s34 = sphi 0, %s33
      %s50 = sphi 0, %s34
      %s56 = sphi 0, %s58
      %s59 = sphi 0, %s56
      %s60 = sphi 0, %s59
      %s76 = sphi 0, %s60
      %s82 = sphi 0, %s84
      %s85 = sphi 0, %s82
      %s86 = sphi 0, %s85
      %s102 = sphi 0, %s86
      %s108 = sphi 0, %s110
      %s111 = sphi 0, %s108
      %s112 = sphi 0, %s111
      %s128 = sphi 0, %s112
      %s132 = sphi 0, %s132
      %s134 = sphi 0, %s132
      %s135 = sphi 0, %s134
      %s149 = sphi 0, %s135
      %s153 = sphi 0, %s153
      %s155 = sphi 0, %s153
      %s156 = sphi 0, %s155
      %s170 = sphi 0, %s156
      %s174 = sphi 0, %s174
      %s176 = sphi 0, %s174
      %s177 = sphi 0, %s176
      %s191 = sphi 0, %s177
      %s195 = sphi 0, %s195
      %s197 = sphi 0, %s195
      %s198 = sphi 0, %s197
      %s212 = sphi 0, %s198
      %s216 = sphi 0, %s216
      %s218 = sphi 0, %s216
      %s219 = sphi 0, %s218
      %s233 = sphi 0, %s219
      %s237 = sphi 0, %s237
      %s239 = sphi 0, %s237
      %s240 = sphi 0, %s239
      %s254 = sphi 0, %s240
      %s260 = sphi 0, %s262
      %s263 = sphi 0, %s260
      %s264 = sphi 0, %s263
      %s280 = sphi 0, %s264
    $region4: #{tpu_custom_call.1} parent=1 // loop_header_branch
      %23 = sbr.rel (%p21) target = $region8
    $region5: #{tpu_custom_call.1} parent=1 // loop_body
      %s25 = ssub.s32 %s20, 1
      %s26 = ssub.s32 %s20, 2
      %s27 = sadd.s32 %s20, 1
      %s28 = ssub.s32 %s20, %s27
      %p29 = scmp.eq.s32.totalorder %s28, 0
      %s31 = sadd.s32 %s30, 1
      %s32 = scalar_select %p29, %s30, %s31
      %p35 = pneg %p29
      %p36 = scmp.eq.s32.totalorder %s20, 1
      %p37 = por %p35, %p36
      %p38 = scmp.ne.s32.totalorder %s30, %s33
      %p39 = scmp.eq.s32.totalorder %s20, 0
      %p40 = por %p38, %p39
      %p41 = scmp.ne.s32.totalorder %s30, %s33
      %p42 = scmp.eq.s32.totalorder %s25, 1
      %p43 = por %p41, %p42
      %p44 = scmp.ne.s32.totalorder %s33, %s34
      %p45 = scmp.eq.s32.totalorder %s25, 0
      %p46 = por %p44, %p45
      %p47 = scmp.ne.s32.totalorder %s33, %s34
      %p48 = scmp.eq.s32.totalorder %s26, 1
      %p49 = por %p47, %p48
      %p51 = scmp.ne.s32.totalorder %s34, %s50
      %p52 = scmp.eq.s32.totalorder %s26, 0
      %p53 = por %p51, %p52
      %s54 = ssub.s32 %s20, %s27
      %p55 = scmp.eq.s32.totalorder %s54, 0
      %s57 = sadd.s32 %s56, 1
      %s58 = scalar_select %p55, %s56, %s57
      %p61 = pneg %p55
      %p62 = scmp.eq.s32.totalorder %s20, 1
      %p63 = por %p61, %p62
      %p64 = scmp.ne.s32.totalorder %s56, %s59
      %p65 = scmp.eq.s32.totalorder %s20, 0
      %p66 = por %p64, %p65
      %p67 = scmp.ne.s32.totalorder %s56, %s59
      %p68 = scmp.eq.s32.totalorder %s25, 1
      %p69 = por %p67, %p68
      %p70 = scmp.ne.s32.totalorder %s59, %s60
      %p71 = scmp.eq.s32.totalorder %s25, 0
      %p72 = por %p70, %p71
      %p73 = scmp.ne.s32.totalorder %s59, %s60
      %p74 = scmp.eq.s32.totalorder %s26, 1
      %p75 = por %p73, %p74
      %p77 = scmp.ne.s32.totalorder %s60, %s76
      %p78 = scmp.eq.s32.totalorder %s26, 0
      %p79 = por %p77, %p78
      %s80 = ssub.s32 %s20, %s27
      %p81 = scmp.eq.s32.totalorder %s80, 0
      %s83 = sadd.s32 %s82, 1
      %s84 = scalar_select %p81, %s82, %s83
      %p87 = pneg %p81
      %p88 = scmp.eq.s32.totalorder %s20, 1
      %p89 = por %p87, %p88
      %p90 = scmp.ne.s32.totalorder %s82, %s85
      %p91 = scmp.eq.s32.totalorder %s20, 0
      %p92 = por %p90, %p91
      %p93 = scmp.ne.s32.totalorder %s82, %s85
      %p94 = scmp.eq.s32.totalorder %s25, 1
      %p95 = por %p93, %p94
      %p96 = scmp.ne.s32.totalorder %s85, %s86
      %p97 = scmp.eq.s32.totalorder %s25, 0
      %p98 = por %p96, %p97
      %p99 = scmp.ne.s32.totalorder %s85, %s86
      %p100 = scmp.eq.s32.totalorder %s26, 1
      %p101 = por %p99, %p100
      %p103 = scmp.ne.s32.totalorder %s86, %s102
      %p104 = scmp.eq.s32.totalorder %s26, 0
      %p105 = por %p103, %p104
      %s106 = ssub.s32 %s20, %s27
      %p107 = scmp.eq.s32.totalorder %s106, 0
      %s109 = sadd.s32 %s108, 1
      %s110 = scalar_select %p107, %s108, %s109
      %p113 = pneg %p107
      %p114 = scmp.eq.s32.totalorder %s20, 1
      %p115 = por %p113, %p114
      %p116 = scmp.ne.s32.totalorder %s108, %s111
      %p117 = scmp.eq.s32.totalorder %s20, 0
      %p118 = por %p116, %p117
      %p119 = scmp.ne.s32.totalorder %s108, %s111
      %p120 = scmp.eq.s32.totalorder %s25, 1
      %p121 = por %p119, %p120
      %p122 = scmp.ne.s32.totalorder %s111, %s112
      %p123 = scmp.eq.s32.totalorder %s25, 0
      %p124 = por %p122, %p123
      %p125 = scmp.ne.s32.totalorder %s111, %s112
      %p126 = scmp.eq.s32.totalorder %s26, 1
      %p127 = por %p125, %p126
      %p129 = scmp.ne.s32.totalorder %s112, %s128
      %p130 = scmp.eq.s32.totalorder %s26, 0
      %p131 = por %p129, %p130
      %s133 = sadd.s32 %s132, 1
      %p136 = scmp.eq.s32.totalorder %s20, 1
      %p137 = scmp.ne.s32.totalorder %s132, %s134
      %p138 = scmp.eq.s32.totalorder %s20, 0
      %p139 = por %p137, %p138
      %p140 = scmp.ne.s32.totalorder %s132, %s134
      %p141 = scmp.eq.s32.totalorder %s25, 1
      %p142 = por %p140, %p141
      %p143 = scmp.ne.s32.totalorder %s134, %s135
      %p144 = scmp.eq.s32.totalorder %s25, 0
      %p145 = por %p143, %p144
      %p146 = scmp.ne.s32.totalorder %s134, %s135
      %p147 = scmp.eq.s32.totalorder %s26, 1
      %p148 = por %p146, %p147
      %p150 = scmp.ne.s32.totalorder %s135, %s149
      %p151 = scmp.eq.s32.totalorder %s26, 0
      %p152 = por %p150, %p151
      %s154 = sadd.s32 %s153, 1
      %p157 = scmp.eq.s32.totalorder %s20, 1
      %p158 = scmp.ne.s32.totalorder %s153, %s155
      %p159 = scmp.eq.s32.totalorder %s20, 0
      %p160 = por %p158, %p159
      %p161 = scmp.ne.s32.totalorder %s153, %s155
      %p162 = scmp.eq.s32.totalorder %s25, 1
      %p163 = por %p161, %p162
      %p164 = scmp.ne.s32.totalorder %s155, %s156
      %p165 = scmp.eq.s32.totalorder %s25, 0
      %p166 = por %p164, %p165
      %p167 = scmp.ne.s32.totalorder %s155, %s156
      %p168 = scmp.eq.s32.totalorder %s26, 1
      %p169 = por %p167, %p168
      %p171 = scmp.ne.s32.totalorder %s156, %s170
      %p172 = scmp.eq.s32.totalorder %s26, 0
      %p173 = por %p171, %p172
      %s175 = sadd.s32 %s174, 1
      %p178 = scmp.eq.s32.totalorder %s20, 1
      %p179 = scmp.ne.s32.totalorder %s174, %s176
      %p180 = scmp.eq.s32.totalorder %s20, 0
      %p181 = por %p179, %p180
      %p182 = scmp.ne.s32.totalorder %s174, %s176
      %p183 = scmp.eq.s32.totalorder %s25, 1
      %p184 = por %p182, %p183
      %p185 = scmp.ne.s32.totalorder %s176, %s177
      %p186 = scmp.eq.s32.totalorder %s25, 0
      %p187 = por %p185, %p186
      %p188 = scmp.ne.s32.totalorder %s176, %s177
      %p189 = scmp.eq.s32.totalorder %s26, 1
      %p190 = por %p188, %p189
      %p192 = scmp.ne.s32.totalorder %s177, %s191
      %p193 = scmp.eq.s32.totalorder %s26, 0
      %p194 = por %p192, %p193
      %s196 = sadd.s32 %s195, 1
      %p199 = scmp.eq.s32.totalorder %s20, 1
      %p200 = scmp.ne.s32.totalorder %s195, %s197
      %p201 = scmp.eq.s32.totalorder %s20, 0
      %p202 = por %p200, %p201
      %p203 = scmp.ne.s32.totalorder %s195, %s197
      %p204 = scmp.eq.s32.totalorder %s25, 1
      %p205 = por %p203, %p204
      %p206 = scmp.ne.s32.totalorder %s197, %s198
      %p207 = scmp.eq.s32.totalorder %s25, 0
      %p208 = por %p206, %p207
      %p209 = scmp.ne.s32.totalorder %s197, %s198
      %p210 = scmp.eq.s32.totalorder %s26, 1
      %p211 = por %p209, %p210
      %p213 = scmp.ne.s32.totalorder %s198, %s212
      %p214 = scmp.eq.s32.totalorder %s26, 0
      %p215 = por %p213, %p214
      %s217 = sadd.s32 %s216, 1
      %p220 = scmp.eq.s32.totalorder %s20, 1
      %p221 = scmp.ne.s32.totalorder %s216, %s218
      %p222 = scmp.eq.s32.totalorder %s20, 0
      %p223 = por %p221, %p222
      %p224 = scmp.ne.s32.totalorder %s216, %s218
      %p225 = scmp.eq.s32.totalorder %s25, 1
      %p226 = por %p224, %p225
      %p227 = scmp.ne.s32.totalorder %s218, %s219
      %p228 = scmp.eq.s32.totalorder %s25, 0
      %p229 = por %p227, %p228
      %p230 = scmp.ne.s32.totalorder %s218, %s219
      %p231 = scmp.eq.s32.totalorder %s26, 1
      %p232 = por %p230, %p231
      %p234 = scmp.ne.s32.totalorder %s219, %s233
      %p235 = scmp.eq.s32.totalorder %s26, 0
      %p236 = por %p234, %p235
      %s238 = sadd.s32 %s237, 1
      %p241 = scmp.eq.s32.totalorder %s20, 1
      %p242 = scmp.ne.s32.totalorder %s237, %s239
      %p243 = scmp.eq.s32.totalorder %s20, 0
      %p244 = por %p242, %p243
      %p245 = scmp.ne.s32.totalorder %s237, %s239
      %p246 = scmp.eq.s32.totalorder %s25, 1
      %p247 = por %p245, %p246
      %p248 = scmp.ne.s32.totalorder %s239, %s240
      %p249 = scmp.eq.s32.totalorder %s25, 0
      %p250 = por %p248, %p249
      %p251 = scmp.ne.s32.totalorder %s239, %s240
      %p252 = scmp.eq.s32.totalorder %s26, 1
      %p253 = por %p251, %p252
      %p255 = scmp.ne.s32.totalorder %s240, %s254
      %p256 = scmp.eq.s32.totalorder %s26, 0
      %p257 = por %p255, %p256
      %s258 = ssub.s32 %s20, %s27
      %p259 = scmp.eq.s32.totalorder %s258, 0
      %s261 = sadd.s32 %s260, 1
      %s262 = scalar_select %p259, %s260, %s261
      %p265 = pneg %p259
      %p266 = scmp.eq.s32.totalorder %s20, 1
      %p267 = por %p265, %p266
      %p268 = scmp.ne.s32.totalorder %s260, %s263
      %p269 = scmp.eq.s32.totalorder %s20, 0
      %p270 = por %p268, %p269
      %p271 = scmp.ne.s32.totalorder %s260, %s263
      %p272 = scmp.eq.s32.totalorder %s25, 1
      %p273 = por %p271, %p272
      %p274 = scmp.ne.s32.totalorder %s263, %s264
      %p275 = scmp.eq.s32.totalorder %s25, 0
      %p276 = por %p274, %p275
      %p277 = scmp.ne.s32.totalorder %s263, %s264
      %p278 = scmp.eq.s32.totalorder %s26, 1
      %p279 = por %p277, %p278
      %p281 = scmp.ne.s32.totalorder %s264, %s280
      %p282 = scmp.eq.s32.totalorder %s26, 0
      %p283 = por %p281, %p282
      %p284 = scmp.le.s32.totalorder 1, %s20
      %p285 = scmp.lt.s32.totalorder %s20, 3
      %p286 = pnand %p284, %p285
      %p287 = pneg %p286
      // Predicated region
      $region9: #{tpu_custom_call.1} parent=5 // pred_check
        _
      $region10: #{tpu_custom_call.1} parent=5 // pred_check_branch
        %289 = sbr.rel (%p286) target = $region12
      $region11: #{tpu_custom_call.1} parent=5 // pred_region
        %s290 = ssub.s32 %s20, 1
        // Predicated region
        $region13: #{tpu_custom_call.1} parent=11 // pred_check
          %p291 = pneg %p145
        $region14: #{tpu_custom_call.1} parent=11 // pred_check_branch
          %293 = sbr.rel (%p291) target = $region16
        $region15: #{tpu_custom_call.1} parent=11 // pred_region
          _
        $region16: #{tpu_custom_call.1} parent=11 // pred_fallthru
          _
        // Predicated region
        $region17: #{tpu_custom_call.1} parent=11 // pred_check
          %p294 = pneg %p166
        $region18: #{tpu_custom_call.1} parent=11 // pred_check_branch
          %296 = sbr.rel (%p294) target = $region20
        $region19: #{tpu_custom_call.1} parent=11 // pred_region
          _
        $region20: #{tpu_custom_call.1} parent=11 // pred_fallthru
          _
        // Predicated region
        $region21: #{tpu_custom_call.1} parent=11 // pred_check
          %p297 = pneg %p187
        $region22: #{tpu_custom_call.1} parent=11 // pred_check_branch
          %299 = sbr.rel (%p297) target = $region24
        $region23: #{tpu_custom_call.1} parent=11 // pred_region
          _
        $region24: #{tpu_custom_call.1} parent=11 // pred_fallthru
          _
        // Predicated region
        $region25: #{tpu_custom_call.1} parent=11 // pred_check
          %p300 = pneg %p208
        $region26: #{tpu_custom_call.1} parent=11 // pred_check_branch
          %302 = sbr.rel (%p300) target = $region28
        $region27: #{tpu_custom_call.1} parent=11 // pred_region
          _
        $region28: #{tpu_custom_call.1} parent=11 // pred_fallthru
          _
        // Predicated region
        $region29: #{tpu_custom_call.1} parent=11 // pred_check
          %p303 = pneg %p229
        $region30: #{tpu_custom_call.1} parent=11 // pred_check_branch
          %305 = sbr.rel (%p303) target = $region32
        $region31: #{tpu_custom_call.1} parent=11 // pred_region
          %s307 = ssub.s32 9280, 9280
          %308 = vsyncadd [#allocation7], %s307
          %s309 = sshll.u32 [#allocation6], 4
          %s310 = int_to_ptr.vmem [resolvable:$true] %s309
          %315 = dma.hbm_to_vmem [thread:$0]  %s8, 9280, %s310, [#allocation7], 64, 64, 4
        $region32: #{tpu_custom_call.1} parent=11 // pred_fallthru
          _
        // Predicated region
        $region33: #{tpu_custom_call.1} parent=11 // pred_check
          %p316 = pneg %p250
        $region34: #{tpu_custom_call.1} parent=11 // pred_check_branch
          %318 = sbr.rel (%p316) target = $region36
        $region35: #{tpu_custom_call.1} parent=11 // pred_region
          _
        $region36: #{tpu_custom_call.1} parent=11 // pred_fallthru
          _
      $region12: #{tpu_custom_call.1} parent=5 // pred_fallthru
        _
      %p319 = scmp.lt.s32.totalorder %s20, 2
      // Predicated region
      $region37: #{tpu_custom_call.1} parent=5 // pred_check
        %p320 = pneg %p319
      $region38: #{tpu_custom_call.1} parent=5 // pred_check_branch
        %322 = sbr.rel (%p320) target = $region40
      $region39: #{tpu_custom_call.1} parent=5 // pred_region
        // Predicated region
        $region41: #{tpu_custom_call.1} parent=39 // pred_check
          %p323 = pneg %p40
        $region42: #{tpu_custom_call.1} parent=39 // pred_check_branch
          %325 = sbr.rel (%p323) target = $region44
        $region43: #{tpu_custom_call.1} parent=39 // pred_region
          %p326 = scmp.lt.s32.totalorder %s20, 1
          %s327 = scalar_select %p326, %s20, 1
          %s328 = smul.addr %s327, 8
          %s329 = smul.addr %s328, 4
          %s330 = scalar_lea.vmem %s0, %s329
        $region44: #{tpu_custom_call.1} parent=39 // pred_fallthru
          _
        // Predicated region
        $region45: #{tpu_custom_call.1} parent=39 // pred_check
          %p331 = pneg %p66
        $region46: #{tpu_custom_call.1} parent=39 // pred_check_branch
          %333 = sbr.rel (%p331) target = $region48
        $region47: #{tpu_custom_call.1} parent=39 // pred_region
          %p334 = scmp.lt.s32.totalorder %s20, 1
          %s335 = scalar_select %p334, %s20, 1
          %s336 = smul.addr %s335, 8
          %s337 = smul.addr %s336, 4
          %s338 = scalar_lea.vmem %s1, %s337
        $region48: #{tpu_custom_call.1} parent=39 // pred_fallthru
          _
        // Predicated region
        $region49: #{tpu_custom_call.1} parent=39 // pred_check
          %p339 = pneg %p92
        $region50: #{tpu_custom_call.1} parent=39 // pred_check_branch
          %341 = sbr.rel (%p339) target = $region52
        $region51: #{tpu_custom_call.1} parent=39 // pred_region
          %p342 = scmp.lt.s32.totalorder %s20, 1
          %s343 = scalar_select %p342, %s20, 1
          %s344 = smul.addr %s343, 8
          %s345 = smul.addr %s344, 4
          %s346 = scalar_lea.vmem %s2, %s345
        $region52: #{tpu_custom_call.1} parent=39 // pred_fallthru
          _
        // Predicated region
        $region53: #{tpu_custom_call.1} parent=39 // pred_check
          %p347 = pneg %p118
        $region54: #{tpu_custom_call.1} parent=39 // pred_check_branch
          %349 = sbr.rel (%p347) target = $region56
        $region55: #{tpu_custom_call.1} parent=39 // pred_region
          %p350 = scmp.lt.s32.totalorder %s20, 1
          %s351 = scalar_select %p350, %s20, 1
          %s352 = smul.addr %s351, 8
          %s353 = smul.addr %s352, 4
          %s354 = scalar_lea.vmem %s3, %s353
        $region56: #{tpu_custom_call.1} parent=39 // pred_fallthru
          _
      $region40: #{tpu_custom_call.1} parent=5 // pred_fallthru
        _
      %p355 = scmp.le.s32.totalorder 1, %s20
      %p356 = scmp.lt.s32.totalorder %s20, 3
      %p357 = pnand %p355, %p356
      %p358 = pneg %p357
      // Predicated region
      $region57: #{tpu_custom_call.1} parent=5 // pred_check
        _
      $region58: #{tpu_custom_call.1} parent=5 // pred_check_branch
        %360 = sbr.rel (%p357) target = $region60
      $region59: #{tpu_custom_call.1} parent=5 // pred_region
        %s361 = ssub.s32 %s20, 1
        // Predicated region
        $region61: #{tpu_custom_call.1} parent=59 // pred_check
          %p362 = pneg %p229
        $region62: #{tpu_custom_call.1} parent=59 // pred_check_branch
          %364 = sbr.rel (%p362) target = $region64
        $region63: #{tpu_custom_call.1} parent=59 // pred_region
          %365 = dma.done [#allocation7], 9280
        $region64: #{tpu_custom_call.1} parent=59 // pred_fallthru
          _
        %p366 = scmp.lt.s32.totalorder %s25, 1
        %s367 = scalar_select %p366, %s25, 1
        %s368 = smul.addr %s367, 8
        %s369 = smul.addr %s368, 4
        %s370 = scalar_lea.vmem %s0, %s369
        %p371 = pneg %p46
        %p372 = pneg %p43
        %p373 = scmp.lt.s32.totalorder %s25, 1
        %s374 = scalar_select %p373, %s25, 1
        %s375 = smul.addr %s374, 8
        %s376 = smul.addr %s375, 4
        %s377 = scalar_lea.vmem %s1, %s376
        %p378 = pneg %p72
        %p379 = pneg %p69
        %p380 = scmp.lt.s32.totalorder %s25, 1
        %s381 = scalar_select %p380, %s25, 1
        %s382 = smul.addr %s381, 8
        %s383 = smul.addr %s382, 4
        %s384 = scalar_lea.vmem %s2, %s383
        %p385 = pneg %p98
        %p386 = pneg %p95
        %p387 = scmp.lt.s32.totalorder %s25, 1
        %s388 = scalar_select %p387, %s25, 1
        %s389 = smul.addr %s388, 8
        %s390 = smul.addr %s389, 4
        %s391 = scalar_lea.vmem %s3, %s390
        %p392 = pneg %p124
        %p393 = pneg %p121
        %p394 = pneg %p145
        %p395 = pneg %p142
        %p396 = pneg %p166
        %p397 = pneg %p163
        %p398 = pneg %p187
        %p399 = pneg %p184
        %p400 = pneg %p208
        %p401 = pneg %p205
        %p402 = pneg %p229
        %p403 = pneg %p226
        %p404 = pneg %p250
        %p405 = pneg %p247
        %p406 = pneg %p276
        %p407 = pneg %p273
        %s408 = sand.u32 %s263, 1
        %s409 = scalar_lea.sflag [#allocation8], %s408
        %s410 = sand.u32 %s263, 1
        %s411 = smul.addr %s410, 64
        %s412 = scalar_lea.vmem [#allocation9], %s411
        %p413 = scmp.lt.s32.totalorder %s25, 1
        %s414 = scalar_select %p413, %s25, 1
        %s415 = smul.addr %s414, 8
        %s416 = smul.addr %s415, 4
        %s417 = scalar_lea.vmem %s0, %s416
        %p418 = scmp.lt.s32.totalorder %s25, 1
        %s419 = scalar_select %p418, %s25, 1
        %s420 = smul.addr %s419, 8
        %s421 = smul.addr %s420, 4
        %s422 = scalar_lea.vmem %s1, %s421
        %p423 = scmp.lt.s32.totalorder %s25, 1
        %s424 = scalar_select %p423, %s25, 1
        %s425 = smul.addr %s424, 8
        %s426 = smul.addr %s425, 4
        %s427 = scalar_lea.vmem %s2, %s426
        %p428 = scmp.lt.s32.totalorder %s25, 1
        %s429 = scalar_select %p428, %s25, 1
        %s430 = smul.addr %s429, 8
        %s431 = smul.addr %s430, 4
        %s432 = scalar_lea.vmem %s3, %s431
        %s433 = smul.u32 8, %s25
        %vm435 = vcmask 27648
        %436 = vst.msk [vmem:[#allocation2] sm:$0xf] %vm435, 0
        %vm437 = vcmask 24576
        %vm438 = vsmask.f32 256
        %vm439 = vmand %vm437, %vm438
        %v440 = vld [vmem:[#allocation2 + $0x4] sm:$0x1]
        %v441 = vsel %vm439, 0, %v440
        %442 = vst [vmem:[#allocation2 + $0x4] sm:$0x1] %v441
        %443 = vst.msk [vmem:[#allocation2 + $0x48] sm:$0xf] %vm435, 0
        %v444 = vld [vmem:[#allocation2 + $0x4c] sm:$0x1]
        %v445 = vsel %vm439, 0, %v444
        %446 = vst [vmem:[#allocation2 + $0x4c] sm:$0x1] %v445
        %447 = vst.msk [vmem:[#allocation2 + $0x90] sm:$0xf] %vm435, 0
        %v448 = vld [vmem:[#allocation2 + $0x94] sm:$0x1]
        %v449 = vsel %vm439, 0, %v448
        %450 = vst [vmem:[#allocation2 + $0x94] sm:$0x1] %v449
        %451 = vst.msk [vmem:[#allocation2 + $0xd8] sm:$0xf] %vm435, 0
        %v452 = vld [vmem:[#allocation2 + $0xdc] sm:$0x1]
        %v453 = vsel %vm439, 0, %v452
        %454 = vst [vmem:[#allocation2 + $0xdc] sm:$0x1] %v453
        %v455 = vld [vmem:[#allocation2] sm:$0x1]
        %v456 = vsel %vm439, 0, %v455
        %457 = vst [vmem:[#allocation2] sm:$0x1] %v456
        %v458 = vld [vmem:[#allocation2 + $0x8] sm:$0x1]
        %v459 = vsel %vm439, 0, %v458
        %460 = vst [vmem:[#allocation2 + $0x8] sm:$0x1] %v459
        %v461 = vld [vmem:[#allocation2 + $0x10] sm:$0x1]
        %v462 = vsel %vm439, 0, %v461
        %463 = vst [vmem:[#allocation2 + $0x10] sm:$0x1] %v462
        %v464 = vld [vmem:[#allocation2 + $0x18] sm:$0x1]
        %v465 = vsel %vm439, 0, %v464
        %466 = vst [vmem:[#allocation2 + $0x18] sm:$0x1] %v465
        %v467 = vld [vmem:[#allocation2 + $0x20] sm:$0x1]
        %v468 = vsel %vm439, 0, %v467
        %469 = vst [vmem:[#allocation2 + $0x20] sm:$0x1] %v468
        %v470 = vld [vmem:[#allocation2 + $0x28] sm:$0x1]
        %v471 = vsel %vm439, 0, %v470
        %472 = vst [vmem:[#allocation2 + $0x28] sm:$0x1] %v471
        %v473 = vld [vmem:[#allocation2 + $0x30] sm:$0x1]
        %v474 = vsel %vm439, 0, %v473
        %475 = vst [vmem:[#allocation2 + $0x30] sm:$0x1] %v474
        %v476 = vld [vmem:[#allocation2 + $0x38] sm:$0x1]
        %v477 = vsel %vm439, 0, %v476
        %478 = vst [vmem:[#allocation2 + $0x38] sm:$0x1] %v477
        %v479 = vld [vmem:[#allocation2 + $0x40] sm:$0x1]
        %v480 = vsel %vm439, 0, %v479
        %481 = vst [vmem:[#allocation2 + $0x40] sm:$0x1] %v480
        %v482 = vld [vmem:[#allocation2 + $0x48] sm:$0x1]
        %v483 = vsel %vm439, 0, %v482
        %484 = vst [vmem:[#allocation2 + $0x48] sm:$0x1] %v483
        %v485 = vld [vmem:[#allocation2 + $0x50] sm:$0x1]
        %v486 = vsel %vm439, 0, %v485
        %487 = vst [vmem:[#allocation2 + $0x50] sm:$0x1] %v486
        %v488 = vld [vmem:[#allocation2 + $0x58] sm:$0x1]
        %v489 = vsel %vm439, 0, %v488
        %490 = vst [vmem:[#allocation2 + $0x58] sm:$0x1] %v489
        %v491 = vld [vmem:[#allocation2 + $0x60] sm:$0x1]
        %v492 = vsel %vm439, 0, %v491
        %493 = vst [vmem:[#allocation2 + $0x60] sm:$0x1] %v492
        %v494 = vld [vmem:[#allocation2 + $0x68] sm:$0x1]
        %v495 = vsel %vm439, 0, %v494
        %496 = vst [vmem:[#allocation2 + $0x68] sm:$0x1] %v495
        %v497 = vld [vmem:[#allocation2 + $0x70] sm:$0x1]
        %v498 = vsel %vm439, 0, %v497
        %499 = vst [vmem:[#allocation2 + $0x70] sm:$0x1] %v498
        %v500 = vld [vmem:[#allocation2 + $0x78] sm:$0x1]
        %v501 = vsel %vm439, 0, %v500
        %502 = vst [vmem:[#allocation2 + $0x78] sm:$0x1] %v501
        %v503 = vld [vmem:[#allocation2 + $0x80] sm:$0x1]
        %v504 = vsel %vm439, 0, %v503
        %505 = vst [vmem:[#allocation2 + $0x80] sm:$0x1] %v504
        %v506 = vld [vmem:[#allocation2 + $0x88] sm:$0x1]
        %v507 = vsel %vm439, 0, %v506
        %508 = vst [vmem:[#allocation2 + $0x88] sm:$0x1] %v507
        %v509 = vld [vmem:[#allocation2 + $0x90] sm:$0x1]
        %v510 = vsel %vm439, 0, %v509
        %511 = vst [vmem:[#allocation2 + $0x90] sm:$0x1] %v510
        %v512 = vld [vmem:[#allocation2 + $0x98] sm:$0x1]
        %v513 = vsel %vm439, 0, %v512
        %514 = vst [vmem:[#allocation2 + $0x98] sm:$0x1] %v513
        %v515 = vld [vmem:[#allocation2 + $0xa0] sm:$0x1]
        %v516 = vsel %vm439, 0, %v515
        %517 = vst [vmem:[#allocation2 + $0xa0] sm:$0x1] %v516
        %v518 = vld [vmem:[#allocation2 + $0xa8] sm:$0x1]
        %v519 = vsel %vm439, 0, %v518
        %520 = vst [vmem:[#allocation2 + $0xa8] sm:$0x1] %v519
        %v521 = vld [vmem:[#allocation2 + $0xb0] sm:$0x1]
        %v522 = vsel %vm439, 0, %v521
        %523 = vst [vmem:[#allocation2 + $0xb0] sm:$0x1] %v522
        %v524 = vld [vmem:[#allocation2 + $0xb8] sm:$0x1]
        %v525 = vsel %vm439, 0, %v524
        %526 = vst [vmem:[#allocation2 + $0xb8] sm:$0x1] %v525
        %v527 = vld [vmem:[#allocation2 + $0xc0] sm:$0x1]
        %v528 = vsel %vm439, 0, %v527
        %529 = vst [vmem:[#allocation2 + $0xc0] sm:$0x1] %v528
        %v530 = vld [vmem:[#allocation2 + $0xc8] sm:$0x1]
        %v531 = vsel %vm439, 0, %v530
        %532 = vst [vmem:[#allocation2 + $0xc8] sm:$0x1] %v531
        %v533 = vld [vmem:[#allocation2 + $0xd0] sm:$0x1]
        %v534 = vsel %vm439, 0, %v533
        %535 = vst [vmem:[#allocation2 + $0xd0] sm:$0x1] %v534
        %v536 = vld [vmem:[#allocation2 + $0xd8] sm:$0x1]
        %v537 = vsel %vm439, 0, %v536
        %538 = vst [vmem:[#allocation2 + $0xd8] sm:$0x1] %v537
        %v539 = vld [vmem:[#allocation2 + $0xe0] sm:$0x1]
        %v540 = vsel %vm439, 0, %v539
        %541 = vst [vmem:[#allocation2 + $0xe0] sm:$0x1] %v540
        %v542 = vld [vmem:[#allocation2 + $0xe8] sm:$0x1]
        %v543 = vsel %vm439, 0, %v542
        %544 = vst [vmem:[#allocation2 + $0xe8] sm:$0x1] %v543
        %v545 = vld [vmem:[#allocation2 + $0xf0] sm:$0x1]
        %v546 = vsel %vm439, 0, %v545
        %547 = vst [vmem:[#allocation2 + $0xf0] sm:$0x1] %v546
        %v548 = vld [vmem:[#allocation2 + $0xf8] sm:$0x1]
        %v549 = vsel %vm439, 0, %v548
        %550 = vst [vmem:[#allocation2 + $0xf8] sm:$0x1] %v549
        %v551 = vld [vmem:[#allocation2 + $0x100] sm:$0x1]
        %v552 = vsel %vm439, 0, %v551
        %553 = vst [vmem:[#allocation2 + $0x100] sm:$0x1] %v552
        %v554 = vld [vmem:[#allocation2 + $0x108] sm:$0x1]
        %v555 = vsel %vm439, 0, %v554
        %556 = vst [vmem:[#allocation2 + $0x108] sm:$0x1] %v555
        %v557 = vld [vmem:[#allocation2 + $0x110] sm:$0x1]
        %v558 = vsel %vm439, 0, %v557
        %559 = vst [vmem:[#allocation2 + $0x110] sm:$0x1] %v558
        %v560 = vld [vmem:[#allocation2 + $0x118] sm:$0x1]
        %v561 = vsel %vm439, 0, %v560
        %562 = vst [vmem:[#allocation2 + $0x118] sm:$0x1] %v561
        %v563 = vld [vmem:[%s417] sm:$0xf]
        %v564 = vld [vmem:[%s417 + $0x4] sm:$0xf]
        %v565 = vld [vmem:[%s417 + $0x8] sm:$0xf]
        %v566 = vld [vmem:[%s417 + $0xc] sm:$0xf]
        %v567 = vld [vmem:[%s417 + $0x10] sm:$0xf]
        %v568 = vld [vmem:[%s417 + $0x14] sm:$0xf]
        %v569 = vld [vmem:[%s417 + $0x18] sm:$0xf]
        %v570 = vld [vmem:[%s417 + $0x1c] sm:$0xf]
        %v571 = vld [vmem:[%s4] sm:$0x1]
        %v572 = vld [vmem:[%s5] sm:$0x1]
        %v573 = vld [vmem:[%s422] sm:$0xf]
        %v574 = vld [vmem:[%s422 + $0x4] sm:$0xf]
        %v575 = vld [vmem:[%s422 + $0x8] sm:$0xf]
        %v576 = vld [vmem:[%s422 + $0xc] sm:$0xf]
        %v577 = vld [vmem:[%s422 + $0x10] sm:$0xf]
        %v578 = vld [vmem:[%s422 + $0x14] sm:$0xf]
        %v579 = vld [vmem:[%s422 + $0x18] sm:$0xf]
        %v580 = vld [vmem:[%s422 + $0x1c] sm:$0xf]
        %v581 = vld [vmem:[%s427] sm:$0xf]
        %v582 = vld [vmem:[%s427 + $0x4] sm:$0xf]
        %v583 = vld [vmem:[%s427 + $0x8] sm:$0xf]
        %v584 = vld [vmem:[%s427 + $0xc] sm:$0xf]
        %v585 = vld [vmem:[%s427 + $0x10] sm:$0xf]
        %v586 = vld [vmem:[%s427 + $0x14] sm:$0xf]
        %v587 = vld [vmem:[%s427 + $0x18] sm:$0xf]
        %v588 = vld [vmem:[%s427 + $0x1c] sm:$0xf]
        %v589 = vld [vmem:[%s432] sm:$0xf]
        %v590 = vld [vmem:[%s432 + $0x4] sm:$0xf]
        %v591 = vld [vmem:[%s432 + $0x8] sm:$0xf]
        %v592 = vld [vmem:[%s432 + $0xc] sm:$0xf]
        %v593 = vld [vmem:[%s432 + $0x10] sm:$0xf]
        %v594 = vld [vmem:[%s432 + $0x14] sm:$0xf]
        %v595 = vld [vmem:[%s432 + $0x18] sm:$0xf]
        %v596 = vld [vmem:[%s432 + $0x1c] sm:$0xf]
        %v597 = vunpack.c.l.bf16 %v563
        %v598 = vunpack.c.l.bf16 %v564
        %v599 = vunpack.c.l.bf16 %v565
        %v600 = vunpack.c.l.bf16 %v566
        %v601 = vunpack.c.l.bf16 %v567
        %v602 = vunpack.c.l.bf16 %v568
        %v603 = vunpack.c.l.bf16 %v569
        %v604 = vunpack.c.l.bf16 %v570
        %v606 = vlaneseq
        %v607 = vshrl.u32 %v606, 7
        %v608 = vsub.s32 0, %v607
        %v609 = vrot.slane %v571, %v608
        %v611 = vmul.f32 %v597, %v609
        %v612 = vmul.f32 %v598, %v609
        %v613 = vmul.f32 %v599, %v609
        %v614 = vmul.f32 %v600, %v609
        %v615 = vmul.f32 %v601, %v609
        %v616 = vmul.f32 %v602, %v609
        %v617 = vmul.f32 %v603, %v609
        %v618 = vmul.f32 %v604, %v609
        %v620 = vlaneseq
        %v621 = vshrl.u32 %v620, 7
        %v622 = vsub.s32 0, %v621
        %v623 = vrot.slane %v572, %v622
        %v625 = vadd.f32 %v611, %v623
        %v626 = vadd.f32 %v612, %v623
        %v627 = vadd.f32 %v613, %v623
        %v628 = vadd.f32 %v614, %v623
        %v629 = vadd.f32 %v615, %v623
        %v630 = vadd.f32 %v616, %v623
        %v631 = vadd.f32 %v617, %v623
        %v632 = vadd.f32 %v618, %v623
        %v633 = vmax.f32 %v625, 0.0
        %v634 = vmax.f32 %v626, 0.0
        %v635 = vmax.f32 %v627, 0.0
        %v636 = vmax.f32 %v628, 0.0
        %v637 = vmax.f32 %v629, 0.0
        %v638 = vmax.f32 %v630, 0.0
        %v639 = vmax.f32 %v631, 0.0
        %v640 = vmax.f32 %v632, 0.0
        %v641 = vpack.c.bf16 %v633, %v633
        %v642 = vpack.c.bf16 %v634, %v634
        %v643 = vpack.c.bf16 %v635, %v635
        %v644 = vpack.c.bf16 %v636, %v636
        %v645 = vpack.c.bf16 %v637, %v637
        %v646 = vpack.c.bf16 %v638, %v638
        %v647 = vpack.c.bf16 %v639, %v639
        %v648 = vpack.c.bf16 %v640, %v640
        %v657 = vunpack.c.l.b16 %v641
        %v658 = vunpack.c.l.b16 %v642
        %v659 = vunpack.c.l.b16 %v643
        %v660 = vunpack.c.l.b16 %v644
        %v661 = vunpack.c.l.b16 %v645
        %v662 = vunpack.c.l.b16 %v646
        %v663 = vunpack.c.l.b16 %v647
        %v664 = vunpack.c.l.b16 %v648
        %v665 = vpack.c.b16 %v657, %v657
        %v666 = vpack.c.b16 %v658, %v658
        %v667 = vpack.c.b16 %v659, %v659
        %v668 = vpack.c.b16 %v660, %v660
        %v669 = vpack.c.b16 %v661, %v661
        %v670 = vpack.c.b16 %v662, %v662
        %v671 = vpack.c.b16 %v663, %v663
        %v672 = vpack.c.b16 %v664, %v664
        %v674 = vshrl.u32 %v665, 16
        %v676 = vrot.slane %v674, 7
        %v677 = vshll.u32 %v665, 16
        %v679 = vor.u32 %v676, %v677
        %v680 = vrot.slane %v676, 4
        %v682 = vshrl.u32 %v666, 16
        %v684 = vrot.slane %v682, 7
        %v685 = vshll.u32 %v666, 16
        %v687 = vor.u32 %v684, %v685
        %v688 = vrot.slane %v684, 4
        %v690 = vshrl.u32 %v667, 16
        %v692 = vrot.slane %v690, 7
        %v693 = vshll.u32 %v667, 16
        %v695 = vor.u32 %v692, %v693
        %v696 = vrot.slane %v692, 4
        %v698 = vshrl.u32 %v668, 16
        %v700 = vrot.slane %v698, 7
        %v701 = vshll.u32 %v668, 16
        %v703 = vor.u32 %v700, %v701
        %v704 = vrot.slane %v700, 4
        %v706 = vshrl.u32 %v669, 16
        %v708 = vrot.slane %v706, 7
        %v709 = vshll.u32 %v669, 16
        %v711 = vor.u32 %v708, %v709
        %v712 = vrot.slane %v708, 4
        %v714 = vshrl.u32 %v670, 16
        %v716 = vrot.slane %v714, 7
        %v717 = vshll.u32 %v670, 16
        %v719 = vor.u32 %v716, %v717
        %v720 = vrot.slane %v716, 4
        %v722 = vshrl.u32 %v671, 16
        %v724 = vrot.slane %v722, 7
        %v725 = vshll.u32 %v671, 16
        %v727 = vor.u32 %v724, %v725
        %v728 = vrot.slane %v724, 4
        %v730 = vshrl.u32 %v672, 16
        %v732 = vrot.slane %v730, 7
        %v733 = vshll.u32 %v672, 16
        %v735 = vor.u32 %v732, %v733
        %v736 = vrot.slane %v732, 4
        %s753 = scalar_lea.vmem [#allocation2], 8
        %vm754 = vcmask 27648
        %vm755 = vsmask.f32 7938
        %vm756 = vmand %vm754, %vm755
        %v757 = vld [vmem:[%s753] sm:$0xf]
        %v758 = vsel %vm756, %v679, %v757
        %759 = vst [vmem:[%s753] sm:$0xf] %v758
        %v760 = vld [vmem:[%s753 + $0x4] sm:$0x1]
        %v761 = vsel %vm439, %v680, %v760
        %762 = vst [vmem:[%s753 + $0x4] sm:$0x1] %v761
        %v763 = vld [vmem:[%s753 + $0x8] sm:$0xf]
        %v764 = vsel %vm756, %v687, %v763
        %765 = vst [vmem:[%s753 + $0x8] sm:$0xf] %v764
        %v766 = vld [vmem:[%s753 + $0xc] sm:$0x1]
        %v767 = vsel %vm439, %v688, %v766
        %768 = vst [vmem:[%s753 + $0xc] sm:$0x1] %v767
        %v769 = vld [vmem:[%s753 + $0x10] sm:$0xf]
        %v770 = vsel %vm756, %v695, %v769
        %771 = vst [vmem:[%s753 + $0x10] sm:$0xf] %v770
        %v772 = vld [vmem:[%s753 + $0x14] sm:$0x1]
        %v773 = vsel %vm439, %v696, %v772
        %774 = vst [vmem:[%s753 + $0x14] sm:$0x1] %v773
        %v775 = vld [vmem:[%s753 + $0x18] sm:$0xf]
        %v776 = vsel %vm756, %v703, %v775
        %777 = vst [vmem:[%s753 + $0x18] sm:$0xf] %v776
        %v778 = vld [vmem:[%s753 + $0x1c] sm:$0x1]
        %v779 = vsel %vm439, %v704, %v778
        %780 = vst [vmem:[%s753 + $0x1c] sm:$0x1] %v779
        %v781 = vld [vmem:[%s753 + $0x20] sm:$0xf]
        %v782 = vsel %vm756, %v711, %v781
        %783 = vst [vmem:[%s753 + $0x20] sm:$0xf] %v782
        %v784 = vld [vmem:[%s753 + $0x24] sm:$0x1]
        %v785 = vsel %vm439, %v712, %v784
        %786 = vst [vmem:[%s753 + $0x24] sm:$0x1] %v785
        %v787 = vld [vmem:[%s753 + $0x28] sm:$0xf]
        %v788 = vsel %vm756, %v719, %v787
        %789 = vst [vmem:[%s753 + $0x28] sm:$0xf] %v788
        %v790 = vld [vmem:[%s753 + $0x2c] sm:$0x1]
        %v791 = vsel %vm439, %v720, %v790
        %792 = vst [vmem:[%s753 + $0x2c] sm:$0x1] %v791
        %v793 = vld [vmem:[%s753 + $0x30] sm:$0xf]
        %v794 = vsel %vm756, %v727, %v793
        %795 = vst [vmem:[%s753 + $0x30] sm:$0xf] %v794
        %v796 = vld [vmem:[%s753 + $0x34] sm:$0x1]
        %v797 = vsel %vm439, %v728, %v796
        %798 = vst [vmem:[%s753 + $0x34] sm:$0x1] %v797
        %v799 = vld [vmem:[%s753 + $0x38] sm:$0xf]
        %v800 = vsel %vm756, %v735, %v799
        %801 = vst [vmem:[%s753 + $0x38] sm:$0xf] %v800
        %v802 = vld [vmem:[%s753 + $0x3c] sm:$0x1]
        %v803 = vsel %vm439, %v736, %v802
        %804 = vst [vmem:[%s753 + $0x3c] sm:$0x1] %v803
        %v805 = vunpack.c.l.bf16 %v573
        %v806 = vunpack.c.l.bf16 %v574
        %v807 = vunpack.c.l.bf16 %v575
        %v808 = vunpack.c.l.bf16 %v576
        %v809 = vunpack.c.l.bf16 %v577
        %v810 = vunpack.c.l.bf16 %v578
        %v811 = vunpack.c.l.bf16 %v579
        %v812 = vunpack.c.l.bf16 %v580
        %v813 = vmul.f32 %v805, %v609
        %v814 = vmul.f32 %v806, %v609
        %v815 = vmul.f32 %v807, %v609
        %v816 = vmul.f32 %v808, %v609
        %v817 = vmul.f32 %v809, %v609
        %v818 = vmul.f32 %v810, %v609
        %v819 = vmul.f32 %v811, %v609
        %v820 = vmul.f32 %v812, %v609
        %v821 = vadd.f32 %v813, %v623
        %v822 = vadd.f32 %v814, %v623
        %v823 = vadd.f32 %v815, %v623
        %v824 = vadd.f32 %v816, %v623
        %v825 = vadd.f32 %v817, %v623
        %v826 = vadd.f32 %v818, %v623
        %v827 = vadd.f32 %v819, %v623
        %v828 = vadd.f32 %v820, %v623
        %v829 = vmax.f32 %v821, 0.0
        %v830 = vmax.f32 %v822, 0.0
        %v831 = vmax.f32 %v823, 0.0
        %v832 = vmax.f32 %v824, 0.0
        %v833 = vmax.f32 %v825, 0.0
        %v834 = vmax.f32 %v826, 0.0
        %v835 = vmax.f32 %v827, 0.0
        %v836 = vmax.f32 %v828, 0.0
        %v837 = vpack.c.bf16 %v829, %v829
        %v838 = vpack.c.bf16 %v830, %v830
        %v839 = vpack.c.bf16 %v831, %v831
        %v840 = vpack.c.bf16 %v832, %v832
        %v841 = vpack.c.bf16 %v833, %v833
        %v842 = vpack.c.bf16 %v834, %v834
        %v843 = vpack.c.bf16 %v835, %v835
        %v844 = vpack.c.bf16 %v836, %v836
        %v853 = vunpack.c.l.b16 %v837
        %v854 = vunpack.c.l.b16 %v838
        %v855 = vunpack.c.l.b16 %v839
        %v856 = vunpack.c.l.b16 %v840
        %v857 = vunpack.c.l.b16 %v841
        %v858 = vunpack.c.l.b16 %v842
        %v859 = vunpack.c.l.b16 %v843
        %v860 = vunpack.c.l.b16 %v844
        %v861 = vpack.c.b16 %v853, %v853
        %v862 = vpack.c.b16 %v854, %v854
        %v863 = vpack.c.b16 %v855, %v855
        %v864 = vpack.c.b16 %v856, %v856
        %v865 = vpack.c.b16 %v857, %v857
        %v866 = vpack.c.b16 %v858, %v858
        %v867 = vpack.c.b16 %v859, %v859
        %v868 = vpack.c.b16 %v860, %v860
        %v870 = vshrl.u32 %v861, 16
        %v872 = vrot.slane %v870, 7
        %v873 = vshll.u32 %v861, 16
        %v875 = vor.u32 %v872, %v873
        %v876 = vrot.slane %v872, 4
        %v878 = vshrl.u32 %v862, 16
        %v880 = vrot.slane %v878, 7
        %v881 = vshll.u32 %v862, 16
        %v883 = vor.u32 %v880, %v881
        %v884 = vrot.slane %v880, 4
        %v886 = vshrl.u32 %v863, 16
        %v888 = vrot.slane %v886, 7
        %v889 = vshll.u32 %v863, 16
        %v891 = vor.u32 %v888, %v889
        %v892 = vrot.slane %v888, 4
        %v894 = vshrl.u32 %v864, 16
        %v896 = vrot.slane %v894, 7
        %v897 = vshll.u32 %v864, 16
        %v899 = vor.u32 %v896, %v897
        %v900 = vrot.slane %v896, 4
        %v902 = vshrl.u32 %v865, 16
        %v904 = vrot.slane %v902, 7
        %v905 = vshll.u32 %v865, 16
        %v907 = vor.u32 %v904, %v905
        %v908 = vrot.slane %v904, 4
        %v910 = vshrl.u32 %v866, 16
        %v912 = vrot.slane %v910, 7
        %v913 = vshll.u32 %v866, 16
        %v915 = vor.u32 %v912, %v913
        %v916 = vrot.slane %v912, 4
        %v918 = vshrl.u32 %v867, 16
        %v920 = vrot.slane %v918, 7
        %v921 = vshll.u32 %v867, 16
        %v923 = vor.u32 %v920, %v921
        %v924 = vrot.slane %v920, 4
        %v926 = vshrl.u32 %v868, 16
        %v928 = vrot.slane %v926, 7
        %v929 = vshll.u32 %v868, 16
        %v931 = vor.u32 %v928, %v929
        %v932 = vrot.slane %v928, 4
        %s949 = scalar_lea.vmem [#allocation2], 80
        %v950 = vld [vmem:[%s949] sm:$0xf]
        %v951 = vsel %vm756, %v875, %v950
        %952 = vst [vmem:[%s949] sm:$0xf] %v951
        %v953 = vld [vmem:[%s949 + $0x4] sm:$0x1]
        %v954 = vsel %vm439, %v876, %v953
        %955 = vst [vmem:[%s949 + $0x4] sm:$0x1] %v954
        %v956 = vld [vmem:[%s949 + $0x8] sm:$0xf]
        %v957 = vsel %vm756, %v883, %v956
        %958 = vst [vmem:[%s949 + $0x8] sm:$0xf] %v957
        %v959 = vld [vmem:[%s949 + $0xc] sm:$0x1]
        %v960 = vsel %vm439, %v884, %v959
        %961 = vst [vmem:[%s949 + $0xc] sm:$0x1] %v960
        %v962 = vld [vmem:[%s949 + $0x10] sm:$0xf]
        %v963 = vsel %vm756, %v891, %v962
        %964 = vst [vmem:[%s949 + $0x10] sm:$0xf] %v963
        %v965 = vld [vmem:[%s949 + $0x14] sm:$0x1]
        %v966 = vsel %vm439, %v892, %v965
        %967 = vst [vmem:[%s949 + $0x14] sm:$0x1] %v966
        %v968 = vld [vmem:[%s949 + $0x18] sm:$0xf]
        %v969 = vsel %vm756, %v899, %v968
        %970 = vst [vmem:[%s949 + $0x18] sm:$0xf] %v969
        %v971 = vld [vmem:[%s949 + $0x1c] sm:$0x1]
        %v972 = vsel %vm439, %v900, %v971
        %973 = vst [vmem:[%s949 + $0x1c] sm:$0x1] %v972
        %v974 = vld [vmem:[%s949 + $0x20] sm:$0xf]
        %v975 = vsel %vm756, %v907, %v974
        %976 = vst [vmem:[%s949 + $0x20] sm:$0xf] %v975
        %v977 = vld [vmem:[%s949 + $0x24] sm:$0x1]
        %v978 = vsel %vm439, %v908, %v977
        %979 = vst [vmem:[%s949 + $0x24] sm:$0x1] %v978
        %v980 = vld [vmem:[%s949 + $0x28] sm:$0xf]
        %v981 = vsel %vm756, %v915, %v980
        %982 = vst [vmem:[%s949 + $0x28] sm:$0xf] %v981
        %v983 = vld [vmem:[%s949 + $0x2c] sm:$0x1]
        %v984 = vsel %vm439, %v916, %v983
        %985 = vst [vmem:[%s949 + $0x2c] sm:$0x1] %v984
        %v986 = vld [vmem:[%s949 + $0x30] sm:$0xf]
        %v987 = vsel %vm756, %v923, %v986
        %988 = vst [vmem:[%s949 + $0x30] sm:$0xf] %v987
        %v989 = vld [vmem:[%s949 + $0x34] sm:$0x1]
        %v990 = vsel %vm439, %v924, %v989
        %991 = vst [vmem:[%s949 + $0x34] sm:$0x1] %v990
        %v992 = vld [vmem:[%s949 + $0x38] sm:$0xf]
        %v993 = vsel %vm756, %v931, %v992
        %994 = vst [vmem:[%s949 + $0x38] sm:$0xf] %v993
        %v995 = vld [vmem:[%s949 + $0x3c] sm:$0x1]
        %v996 = vsel %vm439, %v932, %v995
        %997 = vst [vmem:[%s949 + $0x3c] sm:$0x1] %v996
        %v998 = vunpack.c.l.bf16 %v581
        %v999 = vunpack.c.l.bf16 %v582
        %v1000 = vunpack.c.l.bf16 %v583
        %v1001 = vunpack.c.l.bf16 %v584
        %v1002 = vunpack.c.l.bf16 %v585
        %v1003 = vunpack.c.l.bf16 %v586
        %v1004 = vunpack.c.l.bf16 %v587
        %v1005 = vunpack.c.l.bf16 %v588
        %v1006 = vmul.f32 %v998, %v609
        %v1007 = vmul.f32 %v999, %v609
        %v1008 = vmul.f32 %v1000, %v609
        %v1009 = vmul.f32 %v1001, %v609
        %v1010 = vmul.f32 %v1002, %v609
        %v1011 = vmul.f32 %v1003, %v609
        %v1012 = vmul.f32 %v1004, %v609
        %v1013 = vmul.f32 %v1005, %v609
        %v1014 = vadd.f32 %v1006, %v623
        %v1015 = vadd.f32 %v1007, %v623
        %v1016 = vadd.f32 %v1008, %v623
        %v1017 = vadd.f32 %v1009, %v623
        %v1018 = vadd.f32 %v1010, %v623
        %v1019 = vadd.f32 %v1011, %v623
        %v1020 = vadd.f32 %v1012, %v623
        %v1021 = vadd.f32 %v1013, %v623
        %v1022 = vmax.f32 %v1014, 0.0
        %v1023 = vmax.f32 %v1015, 0.0
        %v1024 = vmax.f32 %v1016, 0.0
        %v1025 = vmax.f32 %v1017, 0.0
        %v1026 = vmax.f32 %v1018, 0.0
        %v1027 = vmax.f32 %v1019, 0.0
        %v1028 = vmax.f32 %v1020, 0.0
        %v1029 = vmax.f32 %v1021, 0.0
        %v1030 = vpack.c.bf16 %v1022, %v1022
        %v1031 = vpack.c.bf16 %v1023, %v1023
        %v1032 = vpack.c.bf16 %v1024, %v1024
        %v1033 = vpack.c.bf16 %v1025, %v1025
        %v1034 = vpack.c.bf16 %v1026, %v1026
        %v1035 = vpack.c.bf16 %v1027, %v1027
        %v1036 = vpack.c.bf16 %v1028, %v1028
        %v1037 = vpack.c.bf16 %v1029, %v1029
        %v1046 = vunpack.c.l.b16 %v1030
        %v1047 = vunpack.c.l.b16 %v1031
        %v1048 = vunpack.c.l.b16 %v1032
        %v1049 = vunpack.c.l.b16 %v1033
        %v1050 = vunpack.c.l.b16 %v1034
        %v1051 = vunpack.c.l.b16 %v1035
        %v1052 = vunpack.c.l.b16 %v1036
        %v1053 = vunpack.c.l.b16 %v1037
        %v1054 = vpack.c.b16 %v1046, %v1046
        %v1055 = vpack.c.b16 %v1047, %v1047
        %v1056 = vpack.c.b16 %v1048, %v1048
        %v1057 = vpack.c.b16 %v1049, %v1049
        %v1058 = vpack.c.b16 %v1050, %v1050
        %v1059 = vpack.c.b16 %v1051, %v1051
        %v1060 = vpack.c.b16 %v1052, %v1052
        %v1061 = vpack.c.b16 %v1053, %v1053
        %v1063 = vshrl.u32 %v1054, 16
        %v1065 = vrot.slane %v1063, 7
        %v1066 = vshll.u32 %v1054, 16
        %v1068 = vor.u32 %v1065, %v1066
        %v1069 = vrot.slane %v1065, 4
        %v1071 = vshrl.u32 %v1055, 16
        %v1073 = vrot.slane %v1071, 7
        %v1074 = vshll.u32 %v1055, 16
        %v1076 = vor.u32 %v1073, %v1074
        %v1077 = vrot.slane %v1073, 4
        %v1079 = vshrl.u32 %v1056, 16
        %v1081 = vrot.slane %v1079, 7
        %v1082 = vshll.u32 %v1056, 16
        %v1084 = vor.u32 %v1081, %v1082
        %v1085 = vrot.slane %v1081, 4
        %v1087 = vshrl.u32 %v1057, 16
        %v1089 = vrot.slane %v1087, 7
        %v1090 = vshll.u32 %v1057, 16
        %v1092 = vor.u32 %v1089, %v1090
        %v1093 = vrot.slane %v1089, 4
        %v1095 = vshrl.u32 %v1058, 16
        %v1097 = vrot.slane %v1095, 7
        %v1098 = vshll.u32 %v1058, 16
        %v1100 = vor.u32 %v1097, %v1098
        %v1101 = vrot.slane %v1097, 4
        %v1103 = vshrl.u32 %v1059, 16
        %v1105 = vrot.slane %v1103, 7
        %v1106 = vshll.u32 %v1059, 16
        %v1108 = vor.u32 %v1105, %v1106
        %v1109 = vrot.slane %v1105, 4
        %v1111 = vshrl.u32 %v1060, 16
        %v1113 = vrot.slane %v1111, 7
        %v1114 = vshll.u32 %v1060, 16
        %v1116 = vor.u32 %v1113, %v1114
        %v1117 = vrot.slane %v1113, 4
        %v1119 = vshrl.u32 %v1061, 16
        %v1121 = vrot.slane %v1119, 7
        %v1122 = vshll.u32 %v1061, 16
        %v1124 = vor.u32 %v1121, %v1122
        %v1125 = vrot.slane %v1121, 4
        %s1142 = scalar_lea.vmem [#allocation2], 152
        %v1143 = vld [vmem:[%s1142] sm:$0xf]
        %v1144 = vsel %vm756, %v1068, %v1143
        %1145 = vst [vmem:[%s1142] sm:$0xf] %v1144
        %v1146 = vld [vmem:[%s1142 + $0x4] sm:$0x1]
        %v1147 = vsel %vm439, %v1069, %v1146
        %1148 = vst [vmem:[%s1142 + $0x4] sm:$0x1] %v1147
        %v1149 = vld [vmem:[%s1142 + $0x8] sm:$0xf]
        %v1150 = vsel %vm756, %v1076, %v1149
        %1151 = vst [vmem:[%s1142 + $0x8] sm:$0xf] %v1150
        %v1152 = vld [vmem:[%s1142 + $0xc] sm:$0x1]
        %v1153 = vsel %vm439, %v1077, %v1152
        %1154 = vst [vmem:[%s1142 + $0xc] sm:$0x1] %v1153
        %v1155 = vld [vmem:[%s1142 + $0x10] sm:$0xf]
        %v1156 = vsel %vm756, %v1084, %v1155
        %1157 = vst [vmem:[%s1142 + $0x10] sm:$0xf] %v1156
        %v1158 = vld [vmem:[%s1142 + $0x14] sm:$0x1]
        %v1159 = vsel %vm439, %v1085, %v1158
        %1160 = vst [vmem:[%s1142 + $0x14] sm:$0x1] %v1159
        %v1161 = vld [vmem:[%s1142 + $0x18] sm:$0xf]
        %v1162 = vsel %vm756, %v1092, %v1161
        %1163 = vst [vmem:[%s1142 + $0x18] sm:$0xf] %v1162
        %v1164 = vld [vmem:[%s1142 + $0x1c] sm:$0x1]
        %v1165 = vsel %vm439, %v1093, %v1164
        %1166 = vst [vmem:[%s1142 + $0x1c] sm:$0x1] %v1165
        %v1167 = vld [vmem:[%s1142 + $0x20] sm:$0xf]
        %v1168 = vsel %vm756, %v1100, %v1167
        %1169 = vst [vmem:[%s1142 + $0x20] sm:$0xf] %v1168
        %v1170 = vld [vmem:[%s1142 + $0x24] sm:$0x1]
        %v1171 = vsel %vm439, %v1101, %v1170
        %1172 = vst [vmem:[%s1142 + $0x24] sm:$0x1] %v1171
        %v1173 = vld [vmem:[%s1142 + $0x28] sm:$0xf]
        %v1174 = vsel %vm756, %v1108, %v1173
        %1175 = vst [vmem:[%s1142 + $0x28] sm:$0xf] %v1174
        %v1176 = vld [vmem:[%s1142 + $0x2c] sm:$0x1]
        %v1177 = vsel %vm439, %v1109, %v1176
        %1178 = vst [vmem:[%s1142 + $0x2c] sm:$0x1] %v1177
        %v1179 = vld [vmem:[%s1142 + $0x30] sm:$0xf]
        %v1180 = vsel %vm756, %v1116, %v1179
        %1181 = vst [vmem:[%s1142 + $0x30] sm:$0xf] %v1180
        %v1182 = vld [vmem:[%s1142 + $0x34] sm:$0x1]
        %v1183 = vsel %vm439, %v1117, %v1182
        %1184 = vst [vmem:[%s1142 + $0x34] sm:$0x1] %v1183
        %v1185 = vld [vmem:[%s1142 + $0x38] sm:$0xf]
        %v1186 = vsel %vm756, %v1124, %v1185
        %1187 = vst [vmem:[%s1142 + $0x38] sm:$0xf] %v1186
        %v1188 = vld [vmem:[%s1142 + $0x3c] sm:$0x1]
        %v1189 = vsel %vm439, %v1125, %v1188
        %1190 = vst [vmem:[%s1142 + $0x3c] sm:$0x1] %v1189
        %v1191 = vunpack.c.l.bf16 %v589
        %v1192 = vunpack.c.l.bf16 %v590
        %v1193 = vunpack.c.l.bf16 %v591
        %v1194 = vunpack.c.l.bf16 %v592
        %v1195 = vunpack.c.l.bf16 %v593
        %v1196 = vunpack.c.l.bf16 %v594
        %v1197 = vunpack.c.l.bf16 %v595
        %v1198 = vunpack.c.l.bf16 %v596
        %v1199 = vmul.f32 %v1191, %v609
        %v1200 = vmul.f32 %v1192, %v609
        %v1201 = vmul.f32 %v1193, %v609
        %v1202 = vmul.f32 %v1194, %v609
        %v1203 = vmul.f32 %v1195, %v609
        %v1204 = vmul.f32 %v1196, %v609
        %v1205 = vmul.f32 %v1197, %v609
        %v1206 = vmul.f32 %v1198, %v609
        %v1207 = vadd.f32 %v1199, %v623
        %v1208 = vadd.f32 %v1200, %v623
        %v1209 = vadd.f32 %v1201, %v623
        %v1210 = vadd.f32 %v1202, %v623
        %v1211 = vadd.f32 %v1203, %v623
        %v1212 = vadd.f32 %v1204, %v623
        %v1213 = vadd.f32 %v1205, %v623
        %v1214 = vadd.f32 %v1206, %v623
        %v1215 = vmax.f32 %v1207, 0.0
        %v1216 = vmax.f32 %v1208, 0.0
        %v1217 = vmax.f32 %v1209, 0.0
        %v1218 = vmax.f32 %v1210, 0.0
        %v1219 = vmax.f32 %v1211, 0.0
        %v1220 = vmax.f32 %v1212, 0.0
        %v1221 = vmax.f32 %v1213, 0.0
        %v1222 = vmax.f32 %v1214, 0.0
        %v1223 = vpack.c.bf16 %v1215, %v1215
        %v1224 = vpack.c.bf16 %v1216, %v1216
        %v1225 = vpack.c.bf16 %v1217, %v1217
        %v1226 = vpack.c.bf16 %v1218, %v1218
        %v1227 = vpack.c.bf16 %v1219, %v1219
        %v1228 = vpack.c.bf16 %v1220, %v1220
        %v1229 = vpack.c.bf16 %v1221, %v1221
        %v1230 = vpack.c.bf16 %v1222, %v1222
        %v1239 = vunpack.c.l.b16 %v1223
        %v1240 = vunpack.c.l.b16 %v1224
        %v1241 = vunpack.c.l.b16 %v1225
        %v1242 = vunpack.c.l.b16 %v1226
        %v1243 = vunpack.c.l.b16 %v1227
        %v1244 = vunpack.c.l.b16 %v1228
        %v1245 = vunpack.c.l.b16 %v1229
        %v1246 = vunpack.c.l.b16 %v1230
        %v1247 = vpack.c.b16 %v1239, %v1239
        %v1248 = vpack.c.b16 %v1240, %v1240
        %v1249 = vpack.c.b16 %v1241, %v1241
        %v1250 = vpack.c.b16 %v1242, %v1242
        %v1251 = vpack.c.b16 %v1243, %v1243
        %v1252 = vpack.c.b16 %v1244, %v1244
        %v1253 = vpack.c.b16 %v1245, %v1245
        %v1254 = vpack.c.b16 %v1246, %v1246
        %v1256 = vshrl.u32 %v1247, 16
        %v1258 = vrot.slane %v1256, 7
        %v1259 = vshll.u32 %v1247, 16
        %v1261 = vor.u32 %v1258, %v1259
        %v1262 = vrot.slane %v1258, 4
        %v1264 = vshrl.u32 %v1248, 16
        %v1266 = vrot.slane %v1264, 7
        %v1267 = vshll.u32 %v1248, 16
        %v1269 = vor.u32 %v1266, %v1267
        %v1270 = vrot.slane %v1266, 4
        %v1272 = vshrl.u32 %v1249, 16
        %v1274 = vrot.slane %v1272, 7
        %v1275 = vshll.u32 %v1249, 16
        %v1277 = vor.u32 %v1274, %v1275
        %v1278 = vrot.slane %v1274, 4
        %v1280 = vshrl.u32 %v1250, 16
        %v1282 = vrot.slane %v1280, 7
        %v1283 = vshll.u32 %v1250, 16
        %v1285 = vor.u32 %v1282, %v1283
        %v1286 = vrot.slane %v1282, 4
        %v1288 = vshrl.u32 %v1251, 16
        %v1290 = vrot.slane %v1288, 7
        %v1291 = vshll.u32 %v1251, 16
        %v1293 = vor.u32 %v1290, %v1291
        %v1294 = vrot.slane %v1290, 4
        %v1296 = vshrl.u32 %v1252, 16
        %v1298 = vrot.slane %v1296, 7
        %v1299 = vshll.u32 %v1252, 16
        %v1301 = vor.u32 %v1298, %v1299
        %v1302 = vrot.slane %v1298, 4
        %v1304 = vshrl.u32 %v1253, 16
        %v1306 = vrot.slane %v1304, 7
        %v1307 = vshll.u32 %v1253, 16
        %v1309 = vor.u32 %v1306, %v1307
        %v1310 = vrot.slane %v1306, 4
        %v1312 = vshrl.u32 %v1254, 16
        %v1314 = vrot.slane %v1312, 7
        %v1315 = vshll.u32 %v1254, 16
        %v1317 = vor.u32 %v1314, %v1315
        %v1318 = vrot.slane %v1314, 4
        %s1335 = scalar_lea.vmem [#allocation2], 224
        %v1336 = vld [vmem:[%s1335] sm:$0xf]
        %v1337 = vsel %vm756, %v1261, %v1336
        %1338 = vst [vmem:[%s1335] sm:$0xf] %v1337
        %v1339 = vld [vmem:[%s1335 + $0x4] sm:$0x1]
        %v1340 = vsel %vm439, %v1262, %v1339
        %1341 = vst [vmem:[%s1335 + $0x4] sm:$0x1] %v1340
        %v1342 = vld [vmem:[%s1335 + $0x8] sm:$0xf]
        %v1343 = vsel %vm756, %v1269, %v1342
        %1344 = vst [vmem:[%s1335 + $0x8] sm:$0xf] %v1343
        %v1345 = vld [vmem:[%s1335 + $0xc] sm:$0x1]
        %v1346 = vsel %vm439, %v1270, %v1345
        %1347 = vst [vmem:[%s1335 + $0xc] sm:$0x1] %v1346
        %v1348 = vld [vmem:[%s1335 + $0x10] sm:$0xf]
        %v1349 = vsel %vm756, %v1277, %v1348
        %1350 = vst [vmem:[%s1335 + $0x10] sm:$0xf] %v1349
        %v1351 = vld [vmem:[%s1335 + $0x14] sm:$0x1]
        %v1352 = vsel %vm439, %v1278, %v1351
        %1353 = vst [vmem:[%s1335 + $0x14] sm:$0x1] %v1352
        %v1354 = vld [vmem:[%s1335 + $0x18] sm:$0xf]
        %v1355 = vsel %vm756, %v1285, %v1354
        %1356 = vst [vmem:[%s1335 + $0x18] sm:$0xf] %v1355
        %v1357 = vld [vmem:[%s1335 + $0x1c] sm:$0x1]
        %v1358 = vsel %vm439, %v1286, %v1357
        %1359 = vst [vmem:[%s1335 + $0x1c] sm:$0x1] %v1358
        %v1360 = vld [vmem:[%s1335 + $0x20] sm:$0xf]
        %v1361 = vsel %vm756, %v1293, %v1360
        %1362 = vst [vmem:[%s1335 + $0x20] sm:$0xf] %v1361
        %v1363 = vld [vmem:[%s1335 + $0x24] sm:$0x1]
        %v1364 = vsel %vm439, %v1294, %v1363
        %1365 = vst [vmem:[%s1335 + $0x24] sm:$0x1] %v1364
        %v1366 = vld [vmem:[%s1335 + $0x28] sm:$0xf]
        %v1367 = vsel %vm756, %v1301, %v1366
        %1368 = vst [vmem:[%s1335 + $0x28] sm:$0xf] %v1367
        %v1369 = vld [vmem:[%s1335 + $0x2c] sm:$0x1]
        %v1370 = vsel %vm439, %v1302, %v1369
        %1371 = vst [vmem:[%s1335 + $0x2c] sm:$0x1] %v1370
        %v1372 = vld [vmem:[%s1335 + $0x30] sm:$0xf]
        %v1373 = vsel %vm756, %v1309, %v1372
        %1374 = vst [vmem:[%s1335 + $0x30] sm:$0xf] %v1373
        %v1375 = vld [vmem:[%s1335 + $0x34] sm:$0x1]
        %v1376 = vsel %vm439, %v1310, %v1375
        %1377 = vst [vmem:[%s1335 + $0x34] sm:$0x1] %v1376
        %v1378 = vld [vmem:[%s1335 + $0x38] sm:$0xf]
        %v1379 = vsel %vm756, %v1317, %v1378
        %1380 = vst [vmem:[%s1335 + $0x38] sm:$0xf] %v1379
        %v1381 = vld [vmem:[%s1335 + $0x3c] sm:$0x1]
        %v1382 = vsel %vm439, %v1318, %v1381
        %1383 = vst [vmem:[%s1335 + $0x3c] sm:$0x1] %v1382
        %s1384 = scalar_lea.vmem [#allocation2], 216
        %v1385 = vld [vmem:[%s1384] sm:$0xf]
        %v1386 = vld [vmem:[%s1384 + $0x8] sm:$0xf]
        %v1387 = vld [vmem:[%s1384 + $0x10] sm:$0xf]
        %v1388 = vld [vmem:[%s1384 + $0x18] sm:$0xf]
        %v1389 = vld [vmem:[%s1384 + $0x20] sm:$0xf]
        %v1390 = vld [vmem:[%s1384 + $0x28] sm:$0xf]
        %v1391 = vld [vmem:[%s1384 + $0x30] sm:$0xf]
        %v1392 = vld [vmem:[%s1384 + $0x38] sm:$0xf]
        %v1401 = vunpack.c.l.b16 %v1385
        %v1402 = vunpack.c.l.b16 %v1386
        %v1403 = vunpack.c.l.b16 %v1387
        %v1404 = vunpack.c.l.b16 %v1388
        %v1405 = vunpack.c.l.b16 %v1389
        %v1406 = vunpack.c.l.b16 %v1390
        %v1407 = vunpack.c.l.b16 %v1391
        %v1408 = vunpack.c.l.b16 %v1392
        %v1409 = vpack.c.b16 %v1402, %v1401
        %v1410 = vpack.c.b16 %v1404, %v1403
        %v1411 = vpack.c.b16 %v1406, %v1405
        %v1412 = vpack.c.b16 %v1408, %v1407
        %vm1417 = vcmask 31744
        %1418 = vst.msk [vmem:[#allocation3] sm:$0xff] %vm1417, %v1409
        %1419 = vst.msk [vmem:[#allocation3 + $0x8] sm:$0xff] %vm1417, %v1410
        %1420 = vst.msk [vmem:[#allocation3 + $0x10] sm:$0xff] %vm1417, %v1411
        %1421 = vst.msk [vmem:[#allocation3 + $0x18] sm:$0xff] %vm1417, %v1412
        %s1422 = scalar_lea.vmem [#allocation2], 144
        %v1423 = vld [vmem:[%s1422] sm:$0xf]
        %v1424 = vld [vmem:[%s1422 + $0x4] sm:$0x1]
        %v1425 = vld [vmem:[%s1422 + $0x8] sm:$0xf]
        %v1426 = vld [vmem:[%s1422 + $0xc] sm:$0x1]
        %v1427 = vld [vmem:[%s1422 + $0x10] sm:$0xf]
        %v1428 = vld [vmem:[%s1422 + $0x14] sm:$0x1]
        %v1429 = vld [vmem:[%s1422 + $0x18] sm:$0xf]
        %v1430 = vld [vmem:[%s1422 + $0x1c] sm:$0x1]
        %v1431 = vld [vmem:[%s1422 + $0x20] sm:$0xf]
        %v1432 = vld [vmem:[%s1422 + $0x24] sm:$0x1]
        %v1433 = vld [vmem:[%s1422 + $0x28] sm:$0xf]
        %v1434 = vld [vmem:[%s1422 + $0x2c] sm:$0x1]
        %v1435 = vld [vmem:[%s1422 + $0x30] sm:$0xf]
        %v1436 = vld [vmem:[%s1422 + $0x34] sm:$0x1]
        %v1437 = vld [vmem:[%s1422 + $0x38] sm:$0xf]
        %v1438 = vld [vmem:[%s1422 + $0x3c] sm:$0x1]
        %vm1439 = vsmask.f32 3328
        %vm1440 = vsmask.f32 7440
        %vm1441 = vmor %vm1439, %vm1440
        %v1443 = vshrl.u32 %v1423, 16
        %v1445 = vrot.slane %v1443, 4
        %v1446 = vshll.u32 %v1423, 16
        %v1448 = vrot.slane %v1446, 5
        %v1449 = vor.u32 %v1445, %v1448
        %v1450 = vrot.slane %v1449, 4
        %v1452 = vshll.u32 %v1424, 16
        %v1454 = vrot.slane %v1452, 5
        %v1455 = vsel %vm1441, %v1450, %v1454
        %v1457 = vshrl.u32 %v1425, 16
        %v1459 = vrot.slane %v1457, 4
        %v1460 = vshll.u32 %v1425, 16
        %v1462 = vrot.slane %v1460, 5
        %v1463 = vor.u32 %v1459, %v1462
        %v1464 = vrot.slane %v1463, 4
        %v1466 = vshll.u32 %v1426, 16
        %v1468 = vrot.slane %v1466, 5
        %v1469 = vsel %vm1441, %v1464, %v1468
        %v1471 = vshrl.u32 %v1427, 16
        %v1473 = vrot.slane %v1471, 4
        %v1474 = vshll.u32 %v1427, 16
        %v1476 = vrot.slane %v1474, 5
        %v1477 = vor.u32 %v1473, %v1476
        %v1478 = vrot.slane %v1477, 4
        %v1480 = vshll.u32 %v1428, 16
        %v1482 = vrot.slane %v1480, 5
        %v1483 = vsel %vm1441, %v1478, %v1482
        %v1485 = vshrl.u32 %v1429, 16
        %v1487 = vrot.slane %v1485, 4
        %v1488 = vshll.u32 %v1429, 16
        %v1490 = vrot.slane %v1488, 5
        %v1491 = vor.u32 %v1487, %v1490
        %v1492 = vrot.slane %v1491, 4
        %v1494 = vshll.u32 %v1430, 16
        %v1496 = vrot.slane %v1494, 5
        %v1497 = vsel %vm1441, %v1492, %v1496
        %v1499 = vshrl.u32 %v1431, 16
        %v1501 = vrot.slane %v1499, 4
        %v1502 = vshll.u32 %v1431, 16
        %v1504 = vrot.slane %v1502, 5
        %v1505 = vor.u32 %v1501, %v1504
        %v1506 = vrot.slane %v1505, 4
        %v1508 = vshll.u32 %v1432, 16
        %v1510 = vrot.slane %v1508, 5
        %v1511 = vsel %vm1441, %v1506, %v1510
        %v1513 = vshrl.u32 %v1433, 16
        %v1515 = vrot.slane %v1513, 4
        %v1516 = vshll.u32 %v1433, 16
        %v1518 = vrot.slane %v1516, 5
        %v1519 = vor.u32 %v1515, %v1518
        %v1520 = vrot.slane %v1519, 4
        %v1522 = vshll.u32 %v1434, 16
        %v1524 = vrot.slane %v1522, 5
        %v1525 = vsel %vm1441, %v1520, %v1524
        %v1527 = vshrl.u32 %v1435, 16
        %v1529 = vrot.slane %v1527, 4
        %v1530 = vshll.u32 %v1435, 16
        %v1532 = vrot.slane %v1530, 5
        %v1533 = vor.u32 %v1529, %v1532
        %v1534 = vrot.slane %v1533, 4
        %v1536 = vshll.u32 %v1436, 16
        %v1538 = vrot.slane %v1536, 5
        %v1539 = vsel %vm1441, %v1534, %v1538
        %v1541 = vshrl.u32 %v1437, 16
        %v1543 = vrot.slane %v1541, 4
        %v1544 = vshll.u32 %v1437, 16
        %v1546 = vrot.slane %v1544, 5
        %v1547 = vor.u32 %v1543, %v1546
        %v1548 = vrot.slane %v1547, 4
        %v1550 = vshll.u32 %v1438, 16
        %v1552 = vrot.slane %v1550, 5
        %v1553 = vsel %vm1441, %v1548, %v1552
        %v1554 = vunpack.c.l.b16 %v1455
        %v1555 = vunpack.c.l.b16 %v1469
        %v1556 = vunpack.c.l.b16 %v1483
        %v1557 = vunpack.c.l.b16 %v1497
        %v1558 = vunpack.c.l.b16 %v1511
        %v1559 = vunpack.c.l.b16 %v1525
        %v1560 = vunpack.c.l.b16 %v1539
        %v1561 = vunpack.c.l.b16 %v1553
        %v1562 = vpack.c.b16 %v1555, %v1554
        %v1563 = vpack.c.b16 %v1557, %v1556
        %v1564 = vpack.c.b16 %v1559, %v1558
        %v1565 = vpack.c.b16 %v1561, %v1560
        %1566 = vrot.lane.b32.xlu0 %v1562, 4
        %v1567 = vpop.permute.xlu0 %1566
        %1568 = vrot.lane.b32.xlu0 %v1563, 4
        %v1569 = vpop.permute.xlu0 %1568
        %1570 = vrot.lane.b32.xlu0 %v1564, 4
        %v1571 = vpop.permute.xlu0 %1570
        %1572 = vrot.lane.b32.xlu0 %v1565, 4
        %v1573 = vpop.permute.xlu0 %1572
        %vm1578 = vcmask 64544
        %1579 = vst.msk [vmem:[#allocation3] sm:$0xff] %vm1578, %v1567
        %1580 = vst.msk [vmem:[#allocation3 + $0x8] sm:$0xff] %vm1578, %v1569
        %1581 = vst.msk [vmem:[#allocation3 + $0x10] sm:$0xff] %vm1578, %v1571
        %1582 = vst.msk [vmem:[#allocation3 + $0x18] sm:$0xff] %vm1578, %v1573
        %v1583 = vld [vmem:[%s1384] sm:$0xf]
        %v1584 = vld [vmem:[%s1384 + $0x4] sm:$0x1]
        %v1585 = vld [vmem:[%s1384 + $0x8] sm:$0xf]
        %v1586 = vld [vmem:[%s1384 + $0xc] sm:$0x1]
        %v1587 = vld [vmem:[%s1384 + $0x10] sm:$0xf]
        %v1588 = vld [vmem:[%s1384 + $0x14] sm:$0x1]
        %v1589 = vld [vmem:[%s1384 + $0x18] sm:$0xf]
        %v1590 = vld [vmem:[%s1384 + $0x1c] sm:$0x1]
        %v1591 = vld [vmem:[%s1384 + $0x20] sm:$0xf]
        %v1592 = vld [vmem:[%s1384 + $0x24] sm:$0x1]
        %v1593 = vld [vmem:[%s1384 + $0x28] sm:$0xf]
        %v1594 = vld [vmem:[%s1384 + $0x2c] sm:$0x1]
        %v1595 = vld [vmem:[%s1384 + $0x30] sm:$0xf]
        %v1596 = vld [vmem:[%s1384 + $0x34] sm:$0x1]
        %v1597 = vld [vmem:[%s1384 + $0x38] sm:$0xf]
        %v1598 = vld [vmem:[%s1384 + $0x3c] sm:$0x1]
        %v1600 = vshrl.u32 %v1583, 16
        %v1602 = vrot.slane %v1600, 4
        %v1603 = vshll.u32 %v1583, 16
        %v1605 = vrot.slane %v1603, 5
        %v1606 = vor.u32 %v1602, %v1605
        %v1607 = vrot.slane %v1606, 4
        %v1609 = vshll.u32 %v1584, 16
        %v1611 = vrot.slane %v1609, 5
        %v1612 = vsel %vm1441, %v1607, %v1611
        %v1614 = vshrl.u32 %v1585, 16
        %v1616 = vrot.slane %v1614, 4
        %v1617 = vshll.u32 %v1585, 16
        %v1619 = vrot.slane %v1617, 5
        %v1620 = vor.u32 %v1616, %v1619
        %v1621 = vrot.slane %v1620, 4
        %v1623 = vshll.u32 %v1586, 16
        %v1625 = vrot.slane %v1623, 5
        %v1626 = vsel %vm1441, %v1621, %v1625
        %v1628 = vshrl.u32 %v1587, 16
        %v1630 = vrot.slane %v1628, 4
        %v1631 = vshll.u32 %v1587, 16
        %v1633 = vrot.slane %v1631, 5
        %v1634 = vor.u32 %v1630, %v1633
        %v1635 = vrot.slane %v1634, 4
        %v1637 = vshll.u32 %v1588, 16
        %v1639 = vrot.slane %v1637, 5
        %v1640 = vsel %vm1441, %v1635, %v1639
        %v1642 = vshrl.u32 %v1589, 16
        %v1644 = vrot.slane %v1642, 4
        %v1645 = vshll.u32 %v1589, 16
        %v1647 = vrot.slane %v1645, 5
        %v1648 = vor.u32 %v1644, %v1647
        %v1649 = vrot.slane %v1648, 4
        %v1651 = vshll.u32 %v1590, 16
        %v1653 = vrot.slane %v1651, 5
        %v1654 = vsel %vm1441, %v1649, %v1653
        %v1656 = vshrl.u32 %v1591, 16
        %v1658 = vrot.slane %v1656, 4
        %v1659 = vshll.u32 %v1591, 16
        %v1661 = vrot.slane %v1659, 5
        %v1662 = vor.u32 %v1658, %v1661
        %v1663 = vrot.slane %v1662, 4
        %v1665 = vshll.u32 %v1592, 16
        %v1667 = vrot.slane %v1665, 5
        %v1668 = vsel %vm1441, %v1663, %v1667
        %v1670 = vshrl.u32 %v1593, 16
        %v1672 = vrot.slane %v1670, 4
        %v1673 = vshll.u32 %v1593, 16
        %v1675 = vrot.slane %v1673, 5
        %v1676 = vor.u32 %v1672, %v1675
        %v1677 = vrot.slane %v1676, 4
        %v1679 = vshll.u32 %v1594, 16
        %v1681 = vrot.slane %v1679, 5
        %v1682 = vsel %vm1441, %v1677, %v1681
        %v1684 = vshrl.u32 %v1595, 16
        %v1686 = vrot.slane %v1684, 4
        %v1687 = vshll.u32 %v1595, 16
        %v1689 = vrot.slane %v1687, 5
        %v1690 = vor.u32 %v1686, %v1689
        %v1691 = vrot.slane %v1690, 4
        %v1693 = vshll.u32 %v1596, 16
        %v1695 = vrot.slane %v1693, 5
        %v1696 = vsel %vm1441, %v1691, %v1695
        %v1698 = vshrl.u32 %v1597, 16
        %v1700 = vrot.slane %v1698, 4
        %v1701 = vshll.u32 %v1597, 16
        %v1703 = vrot.slane %v1701, 5
        %v1704 = vor.u32 %v1700, %v1703
        %v1705 = vrot.slane %v1704, 4
        %v1707 = vshll.u32 %v1598, 16
        %v1709 = vrot.slane %v1707, 5
        %v1710 = vsel %vm1441, %v1705, %v1709
        %v1711 = vunpack.c.l.b16 %v1612
        %v1712 = vunpack.c.l.b16 %v1626
        %v1713 = vunpack.c.l.b16 %v1640
        %v1714 = vunpack.c.l.b16 %v1654
        %v1715 = vunpack.c.l.b16 %v1668
        %v1716 = vunpack.c.l.b16 %v1682
        %v1717 = vunpack.c.l.b16 %v1696
        %v1718 = vunpack.c.l.b16 %v1710
        %v1719 = vpack.c.b16 %v1712, %v1711
        %v1720 = vpack.c.b16 %v1714, %v1713
        %v1721 = vpack.c.b16 %v1716, %v1715
        %v1722 = vpack.c.b16 %v1718, %v1717
        %1723 = vrot.lane.b32.xlu0 %v1719, 8
        %v1724 = vpop.permute.xlu0 %1723
        %1725 = vrot.lane.b32.xlu0 %v1720, 8
        %v1726 = vpop.permute.xlu0 %1725
        %1727 = vrot.lane.b32.xlu0 %v1721, 8
        %v1728 = vpop.permute.xlu0 %1727
        %1729 = vrot.lane.b32.xlu0 %v1722, 8
        %v1730 = vpop.permute.xlu0 %1729
        %vm1735 = vcmask 97344
        %1736 = vst.msk [vmem:[#allocation3] sm:$0xff] %vm1735, %v1724
        %1737 = vst.msk [vmem:[#allocation3 + $0x8] sm:$0xff] %vm1735, %v1726
        %1738 = vst.msk [vmem:[#allocation3 + $0x10] sm:$0xff] %vm1735, %v1728
        %1739 = vst.msk [vmem:[#allocation3 + $0x18] sm:$0xff] %vm1735, %v1730
        %v1740 = vld [vmem:[%s949] sm:$0xf]
        %v1741 = vld [vmem:[%s949 + $0x8] sm:$0xf]
        %v1742 = vld [vmem:[%s949 + $0x10] sm:$0xf]
        %v1743 = vld [vmem:[%s949 + $0x18] sm:$0xf]
        %v1744 = vld [vmem:[%s949 + $0x20] sm:$0xf]
        %v1745 = vld [vmem:[%s949 + $0x28] sm:$0xf]
        %v1746 = vld [vmem:[%s949 + $0x30] sm:$0xf]
        %v1747 = vld [vmem:[%s949 + $0x38] sm:$0xf]
        %v1756 = vunpack.c.l.b16 %v1740
        %v1757 = vunpack.c.l.b16 %v1741
        %v1758 = vunpack.c.l.b16 %v1742
        %v1759 = vunpack.c.l.b16 %v1743
        %v1760 = vunpack.c.l.b16 %v1744
        %v1761 = vunpack.c.l.b16 %v1745
        %v1762 = vunpack.c.l.b16 %v1746
        %v1763 = vunpack.c.l.b16 %v1747
        %v1764 = vpack.c.b16 %v1757, %v1756
        %v1765 = vpack.c.b16 %v1759, %v1758
        %v1766 = vpack.c.b16 %v1761, %v1760
        %v1767 = vpack.c.b16 %v1763, %v1762
        %1768 = vrot.lane.b32.xlu0 %v1764, 12
        %v1769 = vpop.permute.xlu0 %1768
        %1770 = vrot.lane.b32.xlu0 %v1765, 12
        %v1771 = vpop.permute.xlu0 %1770
        %1772 = vrot.lane.b32.xlu0 %v1766, 12
        %v1773 = vpop.permute.xlu0 %1772
        %1774 = vrot.lane.b32.xlu0 %v1767, 12
        %v1775 = vpop.permute.xlu0 %1774
        %vm1780 = vcmask 130144
        %1781 = vst.msk [vmem:[#allocation3] sm:$0xff] %vm1780, %v1769
        %1782 = vst.msk [vmem:[#allocation3 + $0x8] sm:$0xff] %vm1780, %v1771
        %1783 = vst.msk [vmem:[#allocation3 + $0x10] sm:$0xff] %vm1780, %v1773
        %1784 = vst.msk [vmem:[#allocation3 + $0x18] sm:$0xff] %vm1780, %v1775
        %v1785 = vld [vmem:[%s753] sm:$0xf]
        %v1786 = vld [vmem:[%s753 + $0x4] sm:$0x1]
        %v1787 = vld [vmem:[%s753 + $0x8] sm:$0xf]
        %v1788 = vld [vmem:[%s753 + $0xc] sm:$0x1]
        %v1789 = vld [vmem:[%s753 + $0x10] sm:$0xf]
        %v1790 = vld [vmem:[%s753 + $0x14] sm:$0x1]
        %v1791 = vld [vmem:[%s753 + $0x18] sm:$0xf]
        %v1792 = vld [vmem:[%s753 + $0x1c] sm:$0x1]
        %v1793 = vld [vmem:[%s753 + $0x20] sm:$0xf]
        %v1794 = vld [vmem:[%s753 + $0x24] sm:$0x1]
        %v1795 = vld [vmem:[%s753 + $0x28] sm:$0xf]
        %v1796 = vld [vmem:[%s753 + $0x2c] sm:$0x1]
        %v1797 = vld [vmem:[%s753 + $0x30] sm:$0xf]
        %v1798 = vld [vmem:[%s753 + $0x34] sm:$0x1]
        %v1799 = vld [vmem:[%s753 + $0x38] sm:$0xf]
        %v1800 = vld [vmem:[%s753 + $0x3c] sm:$0x1]
        %v1802 = vshrl.u32 %v1785, 16
        %v1804 = vrot.slane %v1802, 4
        %v1805 = vshll.u32 %v1785, 16
        %v1807 = vrot.slane %v1805, 5
        %v1808 = vor.u32 %v1804, %v1807
        %v1809 = vrot.slane %v1808, 4
        %v1811 = vshll.u32 %v1786, 16
        %v1813 = vrot.slane %v1811, 5
        %v1814 = vsel %vm1441, %v1809, %v1813
        %v1816 = vshrl.u32 %v1787, 16
        %v1818 = vrot.slane %v1816, 4
        %v1819 = vshll.u32 %v1787, 16
        %v1821 = vrot.slane %v1819, 5
        %v1822 = vor.u32 %v1818, %v1821
        %v1823 = vrot.slane %v1822, 4
        %v1825 = vshll.u32 %v1788, 16
        %v1827 = vrot.slane %v1825, 5
        %v1828 = vsel %vm1441, %v1823, %v1827
        %v1830 = vshrl.u32 %v1789, 16
        %v1832 = vrot.slane %v1830, 4
        %v1833 = vshll.u32 %v1789, 16
        %v1835 = vrot.slane %v1833, 5
        %v1836 = vor.u32 %v1832, %v1835
        %v1837 = vrot.slane %v1836, 4
        %v1839 = vshll.u32 %v1790, 16
        %v1841 = vrot.slane %v1839, 5
        %v1842 = vsel %vm1441, %v1837, %v1841
        %v1844 = vshrl.u32 %v1791, 16
        %v1846 = vrot.slane %v1844, 4
        %v1847 = vshll.u32 %v1791, 16
        %v1849 = vrot.slane %v1847, 5
        %v1850 = vor.u32 %v1846, %v1849
        %v1851 = vrot.slane %v1850, 4
        %v1853 = vshll.u32 %v1792, 16
        %v1855 = vrot.slane %v1853, 5
        %v1856 = vsel %vm1441, %v1851, %v1855
        %v1858 = vshrl.u32 %v1793, 16
        %v1860 = vrot.slane %v1858, 4
        %v1861 = vshll.u32 %v1793, 16
        %v1863 = vrot.slane %v1861, 5
        %v1864 = vor.u32 %v1860, %v1863
        %v1865 = vrot.slane %v1864, 4
        %v1867 = vshll.u32 %v1794, 16
        %v1869 = vrot.slane %v1867, 5
        %v1870 = vsel %vm1441, %v1865, %v1869
        %v1872 = vshrl.u32 %v1795, 16
        %v1874 = vrot.slane %v1872, 4
        %v1875 = vshll.u32 %v1795, 16
        %v1877 = vrot.slane %v1875, 5
        %v1878 = vor.u32 %v1874, %v1877
        %v1879 = vrot.slane %v1878, 4
        %v1881 = vshll.u32 %v1796, 16
        %v1883 = vrot.slane %v1881, 5
        %v1884 = vsel %vm1441, %v1879, %v1883
        %v1886 = vshrl.u32 %v1797, 16
        %v1888 = vrot.slane %v1886, 4
        %v1889 = vshll.u32 %v1797, 16
        %v1891 = vrot.slane %v1889, 5
        %v1892 = vor.u32 %v1888, %v1891
        %v1893 = vrot.slane %v1892, 4
        %v1895 = vshll.u32 %v1798, 16
        %v1897 = vrot.slane %v1895, 5
        %v1898 = vsel %vm1441, %v1893, %v1897
        %v1900 = vshrl.u32 %v1799, 16
        %v1902 = vrot.slane %v1900, 4
        %v1903 = vshll.u32 %v1799, 16
        %v1905 = vrot.slane %v1903, 5
        %v1906 = vor.u32 %v1902, %v1905
        %v1907 = vrot.slane %v1906, 4
        %v1909 = vshll.u32 %v1800, 16
        %v1911 = vrot.slane %v1909, 5
        %v1912 = vsel %vm1441, %v1907, %v1911
        %v1913 = vunpack.c.l.b16 %v1814
        %v1914 = vunpack.c.l.b16 %v1828
        %v1915 = vunpack.c.l.b16 %v1842
        %v1916 = vunpack.c.l.b16 %v1856
        %v1917 = vunpack.c.l.b16 %v1870
        %v1918 = vunpack.c.l.b16 %v1884
        %v1919 = vunpack.c.l.b16 %v1898
        %v1920 = vunpack.c.l.b16 %v1912
        %v1921 = vpack.c.b16 %v1914, %v1913
        %v1922 = vpack.c.b16 %v1916, %v1915
        %v1923 = vpack.c.b16 %v1918, %v1917
        %v1924 = vpack.c.b16 %v1920, %v1919
        %1925 = vrot.lane.b32.xlu0 %v1921, 16
        %v1926 = vpop.permute.xlu0 %1925
        %1927 = vrot.lane.b32.xlu0 %v1922, 16
        %v1928 = vpop.permute.xlu0 %1927
        %1929 = vrot.lane.b32.xlu0 %v1923, 16
        %v1930 = vpop.permute.xlu0 %1929
        %1931 = vrot.lane.b32.xlu0 %v1924, 16
        %v1932 = vpop.permute.xlu0 %1931
        %vm1937 = vcmask 162944
        %1938 = vst.msk [vmem:[#allocation3] sm:$0xff] %vm1937, %v1926
        %1939 = vst.msk [vmem:[#allocation3 + $0x8] sm:$0xff] %vm1937, %v1928
        %1940 = vst.msk [vmem:[#allocation3 + $0x10] sm:$0xff] %vm1937, %v1930
        %1941 = vst.msk [vmem:[#allocation3 + $0x18] sm:$0xff] %vm1937, %v1932
        %v1942 = vld [vmem:[%s949] sm:$0xf]
        %v1943 = vld [vmem:[%s949 + $0x4] sm:$0x1]
        %v1944 = vld [vmem:[%s949 + $0x8] sm:$0xf]
        %v1945 = vld [vmem:[%s949 + $0xc] sm:$0x1]
        %v1946 = vld [vmem:[%s949 + $0x10] sm:$0xf]
        %v1947 = vld [vmem:[%s949 + $0x14] sm:$0x1]
        %v1948 = vld [vmem:[%s949 + $0x18] sm:$0xf]
        %v1949 = vld [vmem:[%s949 + $0x1c] sm:$0x1]
        %v1950 = vld [vmem:[%s949 + $0x20] sm:$0xf]
        %v1951 = vld [vmem:[%s949 + $0x24] sm:$0x1]
        %v1952 = vld [vmem:[%s949 + $0x28] sm:$0xf]
        %v1953 = vld [vmem:[%s949 + $0x2c] sm:$0x1]
        %v1954 = vld [vmem:[%s949 + $0x30] sm:$0xf]
        %v1955 = vld [vmem:[%s949 + $0x34] sm:$0x1]
        %v1956 = vld [vmem:[%s949 + $0x38] sm:$0xf]
        %v1957 = vld [vmem:[%s949 + $0x3c] sm:$0x1]
        %v1959 = vshrl.u32 %v1942, 16
        %v1961 = vrot.slane %v1959, 4
        %v1962 = vshll.u32 %v1942, 16
        %v1964 = vrot.slane %v1962, 5
        %v1965 = vor.u32 %v1961, %v1964
        %v1966 = vrot.slane %v1965, 4
        %v1968 = vshll.u32 %v1943, 16
        %v1970 = vrot.slane %v1968, 5
        %v1971 = vsel %vm1441, %v1966, %v1970
        %v1973 = vshrl.u32 %v1944, 16
        %v1975 = vrot.slane %v1973, 4
        %v1976 = vshll.u32 %v1944, 16
        %v1978 = vrot.slane %v1976, 5
        %v1979 = vor.u32 %v1975, %v1978
        %v1980 = vrot.slane %v1979, 4
        %v1982 = vshll.u32 %v1945, 16
        %v1984 = vrot.slane %v1982, 5
        %v1985 = vsel %vm1441, %v1980, %v1984
        %v1987 = vshrl.u32 %v1946, 16
        %v1989 = vrot.slane %v1987, 4
        %v1990 = vshll.u32 %v1946, 16
        %v1992 = vrot.slane %v1990, 5
        %v1993 = vor.u32 %v1989, %v1992
        %v1994 = vrot.slane %v1993, 4
        %v1996 = vshll.u32 %v1947, 16
        %v1998 = vrot.slane %v1996, 5
        %v1999 = vsel %vm1441, %v1994, %v1998
        %v2001 = vshrl.u32 %v1948, 16
        %v2003 = vrot.slane %v2001, 4
        %v2004 = vshll.u32 %v1948, 16
        %v2006 = vrot.slane %v2004, 5
        %v2007 = vor.u32 %v2003, %v2006
        %v2008 = vrot.slane %v2007, 4
        %v2010 = vshll.u32 %v1949, 16
        %v2012 = vrot.slane %v2010, 5
        %v2013 = vsel %vm1441, %v2008, %v2012
        %v2015 = vshrl.u32 %v1950, 16
        %v2017 = vrot.slane %v2015, 4
        %v2018 = vshll.u32 %v1950, 16
        %v2020 = vrot.slane %v2018, 5
        %v2021 = vor.u32 %v2017, %v2020
        %v2022 = vrot.slane %v2021, 4
        %v2024 = vshll.u32 %v1951, 16
        %v2026 = vrot.slane %v2024, 5
        %v2027 = vsel %vm1441, %v2022, %v2026
        %v2029 = vshrl.u32 %v1952, 16
        %v2031 = vrot.slane %v2029, 4
        %v2032 = vshll.u32 %v1952, 16
        %v2034 = vrot.slane %v2032, 5
        %v2035 = vor.u32 %v2031, %v2034
        %v2036 = vrot.slane %v2035, 4
        %v2038 = vshll.u32 %v1953, 16
        %v2040 = vrot.slane %v2038, 5
        %v2041 = vsel %vm1441, %v2036, %v2040
        %v2043 = vshrl.u32 %v1954, 16
        %v2045 = vrot.slane %v2043, 4
        %v2046 = vshll.u32 %v1954, 16
        %v2048 = vrot.slane %v2046, 5
        %v2049 = vor.u32 %v2045, %v2048
        %v2050 = vrot.slane %v2049, 4
        %v2052 = vshll.u32 %v1955, 16
        %v2054 = vrot.slane %v2052, 5
        %v2055 = vsel %vm1441, %v2050, %v2054
        %v2057 = vshrl.u32 %v1956, 16
        %v2059 = vrot.slane %v2057, 4
        %v2060 = vshll.u32 %v1956, 16
        %v2062 = vrot.slane %v2060, 5
        %v2063 = vor.u32 %v2059, %v2062
        %v2064 = vrot.slane %v2063, 4
        %v2066 = vshll.u32 %v1957, 16
        %v2068 = vrot.slane %v2066, 5
        %v2069 = vsel %vm1441, %v2064, %v2068
        %v2070 = vunpack.c.l.b16 %v1971
        %v2071 = vunpack.c.l.b16 %v1985
        %v2072 = vunpack.c.l.b16 %v1999
        %v2073 = vunpack.c.l.b16 %v2013
        %v2074 = vunpack.c.l.b16 %v2027
        %v2075 = vunpack.c.l.b16 %v2041
        %v2076 = vunpack.c.l.b16 %v2055
        %v2077 = vunpack.c.l.b16 %v2069
        %v2078 = vpack.c.b16 %v2071, %v2070
        %v2079 = vpack.c.b16 %v2073, %v2072
        %v2080 = vpack.c.b16 %v2075, %v2074
        %v2081 = vpack.c.b16 %v2077, %v2076
        %2082 = vrot.lane.b32.xlu0 %v2078, 20
        %v2083 = vpop.permute.xlu0 %2082
        %2084 = vrot.lane.b32.xlu0 %v2079, 20
        %v2085 = vpop.permute.xlu0 %2084
        %2086 = vrot.lane.b32.xlu0 %v2080, 20
        %v2087 = vpop.permute.xlu0 %2086
        %2088 = vrot.lane.b32.xlu0 %v2081, 20
        %v2089 = vpop.permute.xlu0 %2088
        %vm2094 = vcmask 195744
        %2095 = vst.msk [vmem:[#allocation3] sm:$0xff] %vm2094, %v2083
        %2096 = vst.msk [vmem:[#allocation3 + $0x8] sm:$0xff] %vm2094, %v2085
        %2097 = vst.msk [vmem:[#allocation3 + $0x10] sm:$0xff] %vm2094, %v2087
        %2098 = vst.msk [vmem:[#allocation3 + $0x18] sm:$0xff] %vm2094, %v2089
        %v2099 = vld [vmem:[%s1335] sm:$0xf]
        %v2100 = vld [vmem:[%s1335 + $0x8] sm:$0xf]
        %v2101 = vld [vmem:[%s1335 + $0x10] sm:$0xf]
        %v2102 = vld [vmem:[%s1335 + $0x18] sm:$0xf]
        %v2103 = vld [vmem:[%s1335 + $0x20] sm:$0xf]
        %v2104 = vld [vmem:[%s1335 + $0x28] sm:$0xf]
        %v2105 = vld [vmem:[%s1335 + $0x30] sm:$0xf]
        %v2106 = vld [vmem:[%s1335 + $0x38] sm:$0xf]
        %v2115 = vunpack.c.l.b16 %v2099
        %v2116 = vunpack.c.l.b16 %v2100
        %v2117 = vunpack.c.l.b16 %v2101
        %v2118 = vunpack.c.l.b16 %v2102
        %v2119 = vunpack.c.l.b16 %v2103
        %v2120 = vunpack.c.l.b16 %v2104
        %v2121 = vunpack.c.l.b16 %v2105
        %v2122 = vunpack.c.l.b16 %v2106
        %v2123 = vpack.c.b16 %v2116, %v2115
        %v2124 = vpack.c.b16 %v2118, %v2117
        %v2125 = vpack.c.b16 %v2120, %v2119
        %v2126 = vpack.c.b16 %v2122, %v2121
        %2127 = vrot.lane.b32.xlu0 %v2123, 24
        %v2128 = vpop.permute.xlu0 %2127
        %2129 = vrot.lane.b32.xlu0 %v2124, 24
        %v2130 = vpop.permute.xlu0 %2129
        %2131 = vrot.lane.b32.xlu0 %v2125, 24
        %v2132 = vpop.permute.xlu0 %2131
        %2133 = vrot.lane.b32.xlu0 %v2126, 24
        %v2134 = vpop.permute.xlu0 %2133
        %vm2139 = vcmask 228544
        %2140 = vst.msk [vmem:[#allocation3] sm:$0xff] %vm2139, %v2128
        %2141 = vst.msk [vmem:[#allocation3 + $0x8] sm:$0xff] %vm2139, %v2130
        %2142 = vst.msk [vmem:[#allocation3 + $0x10] sm:$0xff] %vm2139, %v2132
        %2143 = vst.msk [vmem:[#allocation3 + $0x18] sm:$0xff] %vm2139, %v2134
        %v2144 = vld [vmem:[%s1142] sm:$0xf]
        %v2145 = vld [vmem:[%s1142 + $0x4] sm:$0x1]
        %v2146 = vld [vmem:[%s1142 + $0x8] sm:$0xf]
        %v2147 = vld [vmem:[%s1142 + $0xc] sm:$0x1]
        %v2148 = vld [vmem:[%s1142 + $0x10] sm:$0xf]
        %v2149 = vld [vmem:[%s1142 + $0x14] sm:$0x1]
        %v2150 = vld [vmem:[%s1142 + $0x18] sm:$0xf]
        %v2151 = vld [vmem:[%s1142 + $0x1c] sm:$0x1]
        %v2152 = vld [vmem:[%s1142 + $0x20] sm:$0xf]
        %v2153 = vld [vmem:[%s1142 + $0x24] sm:$0x1]
        %v2154 = vld [vmem:[%s1142 + $0x28] sm:$0xf]
        %v2155 = vld [vmem:[%s1142 + $0x2c] sm:$0x1]
        %v2156 = vld [vmem:[%s1142 + $0x30] sm:$0xf]
        %v2157 = vld [vmem:[%s1142 + $0x34] sm:$0x1]
        %v2158 = vld [vmem:[%s1142 + $0x38] sm:$0xf]
        %v2159 = vld [vmem:[%s1142 + $0x3c] sm:$0x1]
        %v2161 = vshrl.u32 %v2144, 16
        %v2163 = vrot.slane %v2161, 4
        %v2164 = vshll.u32 %v2144, 16
        %v2166 = vrot.slane %v2164, 5
        %v2167 = vor.u32 %v2163, %v2166
        %v2168 = vrot.slane %v2167, 4
        %v2170 = vshll.u32 %v2145, 16
        %v2172 = vrot.slane %v2170, 5
        %v2173 = vsel %vm1441, %v2168, %v2172
        %v2175 = vshrl.u32 %v2146, 16
        %v2177 = vrot.slane %v2175, 4
        %v2178 = vshll.u32 %v2146, 16
        %v2180 = vrot.slane %v2178, 5
        %v2181 = vor.u32 %v2177, %v2180
        %v2182 = vrot.slane %v2181, 4
        %v2184 = vshll.u32 %v2147, 16
        %v2186 = vrot.slane %v2184, 5
        %v2187 = vsel %vm1441, %v2182, %v2186
        %v2189 = vshrl.u32 %v2148, 16
        %v2191 = vrot.slane %v2189, 4
        %v2192 = vshll.u32 %v2148, 16
        %v2194 = vrot.slane %v2192, 5
        %v2195 = vor.u32 %v2191, %v2194
        %v2196 = vrot.slane %v2195, 4
        %v2198 = vshll.u32 %v2149, 16
        %v2200 = vrot.slane %v2198, 5
        %v2201 = vsel %vm1441, %v2196, %v2200
        %v2203 = vshrl.u32 %v2150, 16
        %v2205 = vrot.slane %v2203, 4
        %v2206 = vshll.u32 %v2150, 16
        %v2208 = vrot.slane %v2206, 5
        %v2209 = vor.u32 %v2205, %v2208
        %v2210 = vrot.slane %v2209, 4
        %v2212 = vshll.u32 %v2151, 16
        %v2214 = vrot.slane %v2212, 5
        %v2215 = vsel %vm1441, %v2210, %v2214
        %v2217 = vshrl.u32 %v2152, 16
        %v2219 = vrot.slane %v2217, 4
        %v2220 = vshll.u32 %v2152, 16
        %v2222 = vrot.slane %v2220, 5
        %v2223 = vor.u32 %v2219, %v2222
        %v2224 = vrot.slane %v2223, 4
        %v2226 = vshll.u32 %v2153, 16
        %v2228 = vrot.slane %v2226, 5
        %v2229 = vsel %vm1441, %v2224, %v2228
        %v2231 = vshrl.u32 %v2154, 16
        %v2233 = vrot.slane %v2231, 4
        %v2234 = vshll.u32 %v2154, 16
        %v2236 = vrot.slane %v2234, 5
        %v2237 = vor.u32 %v2233, %v2236
        %v2238 = vrot.slane %v2237, 4
        %v2240 = vshll.u32 %v2155, 16
        %v2242 = vrot.slane %v2240, 5
        %v2243 = vsel %vm1441, %v2238, %v2242
        %v2245 = vshrl.u32 %v2156, 16
        %v2247 = vrot.slane %v2245, 4
        %v2248 = vshll.u32 %v2156, 16
        %v2250 = vrot.slane %v2248, 5
        %v2251 = vor.u32 %v2247, %v2250
        %v2252 = vrot.slane %v2251, 4
        %v2254 = vshll.u32 %v2157, 16
        %v2256 = vrot.slane %v2254, 5
        %v2257 = vsel %vm1441, %v2252, %v2256
        %v2259 = vshrl.u32 %v2158, 16
        %v2261 = vrot.slane %v2259, 4
        %v2262 = vshll.u32 %v2158, 16
        %v2264 = vrot.slane %v2262, 5
        %v2265 = vor.u32 %v2261, %v2264
        %v2266 = vrot.slane %v2265, 4
        %v2268 = vshll.u32 %v2159, 16
        %v2270 = vrot.slane %v2268, 5
        %v2271 = vsel %vm1441, %v2266, %v2270
        %v2272 = vunpack.c.l.b16 %v2173
        %v2273 = vunpack.c.l.b16 %v2187
        %v2274 = vunpack.c.l.b16 %v2201
        %v2275 = vunpack.c.l.b16 %v2215
        %v2276 = vunpack.c.l.b16 %v2229
        %v2277 = vunpack.c.l.b16 %v2243
        %v2278 = vunpack.c.l.b16 %v2257
        %v2279 = vunpack.c.l.b16 %v2271
        %v2280 = vpack.c.b16 %v2273, %v2272
        %v2281 = vpack.c.b16 %v2275, %v2274
        %v2282 = vpack.c.b16 %v2277, %v2276
        %v2283 = vpack.c.b16 %v2279, %v2278
        %2284 = vrot.lane.b32.xlu0 %v2280, 28
        %v2285 = vpop.permute.xlu0 %2284
        %2286 = vrot.lane.b32.xlu0 %v2281, 28
        %v2287 = vpop.permute.xlu0 %2286
        %2288 = vrot.lane.b32.xlu0 %v2282, 28
        %v2289 = vpop.permute.xlu0 %2288
        %2290 = vrot.lane.b32.xlu0 %v2283, 28
        %v2291 = vpop.permute.xlu0 %2290
        %vm2296 = vcmask 261344
        %2297 = vst.msk [vmem:[#allocation3] sm:$0xff] %vm2296, %v2285
        %2298 = vst.msk [vmem:[#allocation3 + $0x8] sm:$0xff] %vm2296, %v2287
        %2299 = vst.msk [vmem:[#allocation3 + $0x10] sm:$0xff] %vm2296, %v2289
        %2300 = vst.msk [vmem:[#allocation3 + $0x18] sm:$0xff] %vm2296, %v2291
        %v2301 = vld [vmem:[%s1335] sm:$0xf]
        %v2302 = vld [vmem:[%s1335 + $0x4] sm:$0x1]
        %v2303 = vld [vmem:[%s1335 + $0x8] sm:$0xf]
        %v2304 = vld [vmem:[%s1335 + $0xc] sm:$0x1]
        %v2305 = vld [vmem:[%s1335 + $0x10] sm:$0xf]
        %v2306 = vld [vmem:[%s1335 + $0x14] sm:$0x1]
        %v2307 = vld [vmem:[%s1335 + $0x18] sm:$0xf]
        %v2308 = vld [vmem:[%s1335 + $0x1c] sm:$0x1]
        %v2309 = vld [vmem:[%s1335 + $0x20] sm:$0xf]
        %v2310 = vld [vmem:[%s1335 + $0x24] sm:$0x1]
        %v2311 = vld [vmem:[%s1335 + $0x28] sm:$0xf]
        %v2312 = vld [vmem:[%s1335 + $0x2c] sm:$0x1]
        %v2313 = vld [vmem:[%s1335 + $0x30] sm:$0xf]
        %v2314 = vld [vmem:[%s1335 + $0x34] sm:$0x1]
        %v2315 = vld [vmem:[%s1335 + $0x38] sm:$0xf]
        %v2316 = vld [vmem:[%s1335 + $0x3c] sm:$0x1]
        %v2318 = vshrl.u32 %v2301, 16
        %v2320 = vrot.slane %v2318, 4
        %v2321 = vshll.u32 %v2301, 16
        %v2323 = vrot.slane %v2321, 5
        %v2324 = vor.u32 %v2320, %v2323
        %v2325 = vrot.slane %v2324, 4
        %v2327 = vshll.u32 %v2302, 16
        %v2329 = vrot.slane %v2327, 5
        %v2330 = vsel %vm1441, %v2325, %v2329
        %v2332 = vshrl.u32 %v2303, 16
        %v2334 = vrot.slane %v2332, 4
        %v2335 = vshll.u32 %v2303, 16
        %v2337 = vrot.slane %v2335, 5
        %v2338 = vor.u32 %v2334, %v2337
        %v2339 = vrot.slane %v2338, 4
        %v2341 = vshll.u32 %v2304, 16
        %v2343 = vrot.slane %v2341, 5
        %v2344 = vsel %vm1441, %v2339, %v2343
        %v2346 = vshrl.u32 %v2305, 16
        %v2348 = vrot.slane %v2346, 4
        %v2349 = vshll.u32 %v2305, 16
        %v2351 = vrot.slane %v2349, 5
        %v2352 = vor.u32 %v2348, %v2351
        %v2353 = vrot.slane %v2352, 4
        %v2355 = vshll.u32 %v2306, 16
        %v2357 = vrot.slane %v2355, 5
        %v2358 = vsel %vm1441, %v2353, %v2357
        %v2360 = vshrl.u32 %v2307, 16
        %v2362 = vrot.slane %v2360, 4
        %v2363 = vshll.u32 %v2307, 16
        %v2365 = vrot.slane %v2363, 5
        %v2366 = vor.u32 %v2362, %v2365
        %v2367 = vrot.slane %v2366, 4
        %v2369 = vshll.u32 %v2308, 16
        %v2371 = vrot.slane %v2369, 5
        %v2372 = vsel %vm1441, %v2367, %v2371
        %v2374 = vshrl.u32 %v2309, 16
        %v2376 = vrot.slane %v2374, 4
        %v2377 = vshll.u32 %v2309, 16
        %v2379 = vrot.slane %v2377, 5
        %v2380 = vor.u32 %v2376, %v2379
        %v2381 = vrot.slane %v2380, 4
        %v2383 = vshll.u32 %v2310, 16
        %v2385 = vrot.slane %v2383, 5
        %v2386 = vsel %vm1441, %v2381, %v2385
        %v2388 = vshrl.u32 %v2311, 16
        %v2390 = vrot.slane %v2388, 4
        %v2391 = vshll.u32 %v2311, 16
        %v2393 = vrot.slane %v2391, 5
        %v2394 = vor.u32 %v2390, %v2393
        %v2395 = vrot.slane %v2394, 4
        %v2397 = vshll.u32 %v2312, 16
        %v2399 = vrot.slane %v2397, 5
        %v2400 = vsel %vm1441, %v2395, %v2399
        %v2402 = vshrl.u32 %v2313, 16
        %v2404 = vrot.slane %v2402, 4
        %v2405 = vshll.u32 %v2313, 16
        %v2407 = vrot.slane %v2405, 5
        %v2408 = vor.u32 %v2404, %v2407
        %v2409 = vrot.slane %v2408, 4
        %v2411 = vshll.u32 %v2314, 16
        %v2413 = vrot.slane %v2411, 5
        %v2414 = vsel %vm1441, %v2409, %v2413
        %v2416 = vshrl.u32 %v2315, 16
        %v2418 = vrot.slane %v2416, 4
        %v2419 = vshll.u32 %v2315, 16
        %v2421 = vrot.slane %v2419, 5
        %v2422 = vor.u32 %v2418, %v2421
        %v2423 = vrot.slane %v2422, 4
        %v2425 = vshll.u32 %v2316, 16
        %v2427 = vrot.slane %v2425, 5
        %v2428 = vsel %vm1441, %v2423, %v2427
        %v2429 = vunpack.c.l.b16 %v2330
        %v2430 = vunpack.c.l.b16 %v2344
        %v2431 = vunpack.c.l.b16 %v2358
        %v2432 = vunpack.c.l.b16 %v2372
        %v2433 = vunpack.c.l.b16 %v2386
        %v2434 = vunpack.c.l.b16 %v2400
        %v2435 = vunpack.c.l.b16 %v2414
        %v2436 = vunpack.c.l.b16 %v2428
        %v2437 = vpack.c.b16 %v2430, %v2429
        %v2438 = vpack.c.b16 %v2432, %v2431
        %v2439 = vpack.c.b16 %v2434, %v2433
        %v2440 = vpack.c.b16 %v2436, %v2435
        %2441 = vrot.lane.b32.xlu0 %v2437, 32
        %v2442 = vpop.permute.xlu0 %2441
        %2443 = vrot.lane.b32.xlu0 %v2438, 32
        %v2444 = vpop.permute.xlu0 %2443
        %2445 = vrot.lane.b32.xlu0 %v2439, 32
        %v2446 = vpop.permute.xlu0 %2445
        %2447 = vrot.lane.b32.xlu0 %v2440, 32
        %v2448 = vpop.permute.xlu0 %2447
        %vm2453 = vcmask 294144
        %2454 = vst.msk [vmem:[#allocation3] sm:$0xff] %vm2453, %v2442
        %2455 = vst.msk [vmem:[#allocation3 + $0x8] sm:$0xff] %vm2453, %v2444
        %2456 = vst.msk [vmem:[#allocation3 + $0x10] sm:$0xff] %vm2453, %v2446
        %2457 = vst.msk [vmem:[#allocation3 + $0x18] sm:$0xff] %vm2453, %v2448
        %v2458 = vld [vmem:[#allocation3] sm:$0xff]
        %v2459 = vld [vmem:[#allocation3 + $0x8] sm:$0xff]
        %v2460 = vld [vmem:[#allocation3 + $0x10] sm:$0xff]
        %v2461 = vld [vmem:[#allocation3 + $0x18] sm:$0xff]
        %v2462 = vld [vmem:[%s6] sm:$0xf]
        %v2463 = vld [vmem:[%s6 + $0x4] sm:$0xf]
        %v2464 = vld [vmem:[%s6 + $0x8] sm:$0xf]
        %v2465 = vld [vmem:[%s6 + $0xc] sm:$0xf]
        %v2466 = vld [vmem:[%s6 + $0x10] sm:$0x3]
        %v2467 = vld [vmem:[%s7] sm:$0x1]
        %v2469 = vlaneseq
        %v2470 = vshrl.u32 %v2469, 7
        %v2471 = vsub.s32 0, %v2470
        %v2472 = vrot.slane %v2467, %v2471
        %v2479 = vunpack.c.l.b16 %v2462
        %v2480 = vunpack.c.l.b16 %v2463
        %v2481 = vunpack.c.l.b16 %v2464
        %v2482 = vunpack.c.l.b16 %v2465
        %v2483 = vunpack.c.l.b16 %v2466
        %v2484 = vpack.c.b16 %v2480, %v2479
        %v2485 = vpack.c.b16 %v2482, %v2481
        %v2486 = vpack.c.b16 %v2483, %v2483
        %vm2489 = vcmask 293888
        %v2491 = vsel %vm2489, %v2458, 0
        %v2494 = vsel %vm2489, %v2459, 0
        %v2497 = vsel %vm2489, %v2460, 0
        %v2500 = vsel %vm2489, %v2461, 0
        %vm2502 = vcmask 1041408
        %v2504 = vsel %vm2502, %v2486, 0
        %2506 = vmatprep.subr.bf16.mxu0 0
        %2507 = vmatpush1.bf16.msra.mxu0 %v2484
        %2508 = vmatprep.subr.bf16.mxu0 0
        %2509 = vmatpush1.bf16.msra.mxu0 %v2485
        %2510 = vmatprep.subr.bf16.mxu0 0
        %2511 = vmatpush1.bf16.msra.mxu0 %v2504
        %2512 = vmatprep.subr.bf16.mxu0 0
        %2513 = vmatpush1.bf16.msra.mxu0 0
        %2514 = vmatprep.subr.bf16.mxu0 0
        %2515 = vmatpush1.bf16.msra.mxu0 0
        %2516 = vmatprep.subr.bf16.mxu0 0
        %2517 = vmatpush1.bf16.msra.mxu0 0
        %2518 = vmatprep.subr.bf16.mxu0 0
        %2519 = vmatpush1.bf16.msra.mxu0 0
        %2520 = vmatprep.subr.bf16.mxu0 0
        %2521 = vmatpush1.bf16.msra.mxu0 0
        %2522 = vmatprep.subr.bf16.mxu0 0
        %2523 = vmatpush1.bf16.msra.mxu0 0
        %2524 = vmatprep.subr.bf16.mxu0 0
        %2525 = vmatpush1.bf16.msra.mxu0 0
        %2526 = vmatprep.subr.bf16.mxu0 0
        %2527 = vmatpush1.bf16.msra.mxu0 0
        %2528 = vmatprep.subr.bf16.mxu0 0
        %2529 = vmatpush1.bf16.msra.mxu0 0
        %2530 = vmatprep.subr.bf16.mxu0 0
        %2531 = vmatpush1.bf16.msra.mxu0 0
        %2532 = vmatprep.subr.bf16.mxu0 0
        %2533 = vmatpush1.bf16.msra.mxu0 0
        %2534 = vmatprep.subr.bf16.mxu0 0
        %2535 = vmatpush1.bf16.msra.mxu0 0
        %2536 = vmatprep.subr.bf16.mxu0 0
        %2537 = vmatpush1.bf16.msra.mxu0 0
        %2538 = vmatprep.mubr.bf16.mxu0 0
        %2539 = vmatmul.mubr.bf16.gmra.mrb[0].mxu0 %v2491
        %v2540 = vpop.f32.mrb[0].mxu0
        %v2541 = vadd.f32 %v2472, %v2540
        %v2542 = vpop.f32.mrb[0].mxu0
        %v2543 = vpop.f32.mrb[0].mxu0
        %v2544 = vadd.f32 %v2472, %v2543
        %v2545 = vpop.f32.mrb[0].mxu0
        %2546 = vmatprep.mubr.bf16.mxu0 0
        %2547 = vmatmul.mubr.bf16.gmra.mrb[0].mxu0 %v2494
        %v2548 = vpop.f32.mrb[0].mxu0
        %v2549 = vadd.f32 %v2472, %v2548
        %v2550 = vpop.f32.mrb[0].mxu0
        %v2551 = vpop.f32.mrb[0].mxu0
        %v2552 = vadd.f32 %v2472, %v2551
        %v2553 = vpop.f32.mrb[0].mxu0
        %2554 = vmatprep.mubr.bf16.mxu0 0
        %2555 = vmatmul.mubr.bf16.gmra.mrb[0].mxu0 %v2497
        %v2556 = vpop.f32.mrb[0].mxu0
        %v2557 = vadd.f32 %v2472, %v2556
        %v2558 = vpop.f32.mrb[0].mxu0
        %v2559 = vpop.f32.mrb[0].mxu0
        %v2560 = vadd.f32 %v2472, %v2559
        %v2561 = vpop.f32.mrb[0].mxu0
        %2562 = vmatprep.mubr.bf16.mxu0 0
        %2563 = vmatmul.mubr.bf16.gmra.mrb[0].mxu0 %v2500
        %v2564 = vpop.f32.mrb[0].mxu0
        %v2565 = vadd.f32 %v2472, %v2564
        %v2566 = vpop.f32.mrb[0].mxu0
        %v2567 = vpop.f32.mrb[0].mxu0
        %v2568 = vadd.f32 %v2472, %v2567
        %v2569 = vpop.f32.mrb[0].mxu0
        %2570 = vdwg.mxu0
        %v2571 = vmax.f32 %v2541, 0.0
        %v2572 = vmax.f32 %v2544, 0.0
        %v2573 = vmax.f32 %v2549, 0.0
        %v2574 = vmax.f32 %v2552, 0.0
        %v2575 = vmax.f32 %v2557, 0.0
        %v2576 = vmax.f32 %v2560, 0.0
        %v2577 = vmax.f32 %v2565, 0.0
        %v2578 = vmax.f32 %v2568, 0.0
        %v2579 = vpack.c.bf16 %v2572, %v2571
        %v2580 = vpack.c.bf16 %v2574, %v2573
        %v2581 = vpack.c.bf16 %v2576, %v2575
        %v2582 = vpack.c.bf16 %v2578, %v2577
        %2583 = vst [vmem:[#allocation4] sm:$0xf] 0
        %2584 = vst [vmem:[#allocation4 + $0x4] sm:$0x1] 0
        %s2585 = scalar_lea.vmem [#allocation4], 72
        %2586 = vst [vmem:[%s2585] sm:$0xf] 0
        %2587 = vst [vmem:[%s2585 + $0x4] sm:$0x1] 0
        %vm2588 = vcmask 1040384
        %vm2589 = vmand %vm2588, %vm438
        %v2590 = vld [vmem:[#allocation4] sm:$0x1]
        %v2591 = vsel %vm2589, 0, %v2590
        %2592 = vst [vmem:[#allocation4] sm:$0x1] %v2591
        %v2593 = vld [vmem:[#allocation4 + $0x8] sm:$0x1]
        %v2594 = vsel %vm2589, 0, %v2593
        %2595 = vst [vmem:[#allocation4 + $0x8] sm:$0x1] %v2594
        %v2596 = vld [vmem:[#allocation4 + $0x10] sm:$0x1]
        %v2597 = vsel %vm2589, 0, %v2596
        %2598 = vst [vmem:[#allocation4 + $0x10] sm:$0x1] %v2597
        %v2599 = vld [vmem:[#allocation4 + $0x18] sm:$0x1]
        %v2600 = vsel %vm2589, 0, %v2599
        %2601 = vst [vmem:[#allocation4 + $0x18] sm:$0x1] %v2600
        %v2602 = vld [vmem:[#allocation4 + $0x20] sm:$0x1]
        %v2603 = vsel %vm2589, 0, %v2602
        %2604 = vst [vmem:[#allocation4 + $0x20] sm:$0x1] %v2603
        %v2605 = vld [vmem:[#allocation4 + $0x28] sm:$0x1]
        %v2606 = vsel %vm2589, 0, %v2605
        %2607 = vst [vmem:[#allocation4 + $0x28] sm:$0x1] %v2606
        %v2608 = vld [vmem:[#allocation4 + $0x30] sm:$0x1]
        %v2609 = vsel %vm2589, 0, %v2608
        %2610 = vst [vmem:[#allocation4 + $0x30] sm:$0x1] %v2609
        %v2611 = vld [vmem:[#allocation4 + $0x38] sm:$0x1]
        %v2612 = vsel %vm2589, 0, %v2611
        %2613 = vst [vmem:[#allocation4 + $0x38] sm:$0x1] %v2612
        %v2614 = vld [vmem:[#allocation4 + $0x40] sm:$0x1]
        %v2615 = vsel %vm2589, 0, %v2614
        %2616 = vst [vmem:[#allocation4 + $0x40] sm:$0x1] %v2615
        %v2617 = vld [vmem:[#allocation4 + $0x48] sm:$0x1]
        %v2618 = vsel %vm2589, 0, %v2617
        %2619 = vst [vmem:[#allocation4 + $0x48] sm:$0x1] %v2618
        %vm2620 = vmand %vm2588, %vm755
        %v2621 = vld [vmem:[#allocation4 + $0x4] sm:$0x1]
        %v2622 = vsel %vm2620, 0, %v2621
        %2623 = vst [vmem:[#allocation4 + $0x4] sm:$0x1] %v2622
        %v2624 = vld [vmem:[#allocation4 + $0xc] sm:$0x1]
        %v2625 = vsel %vm2620, 0, %v2624
        %2626 = vst [vmem:[#allocation4 + $0xc] sm:$0x1] %v2625
        %v2627 = vld [vmem:[#allocation4 + $0x14] sm:$0x1]
        %v2628 = vsel %vm2620, 0, %v2627
        %2629 = vst [vmem:[#allocation4 + $0x14] sm:$0x1] %v2628
        %v2630 = vld [vmem:[#allocation4 + $0x1c] sm:$0x1]
        %v2631 = vsel %vm2620, 0, %v2630
        %2632 = vst [vmem:[#allocation4 + $0x1c] sm:$0x1] %v2631
        %v2633 = vld [vmem:[#allocation4 + $0x24] sm:$0x1]
        %v2634 = vsel %vm2620, 0, %v2633
        %2635 = vst [vmem:[#allocation4 + $0x24] sm:$0x1] %v2634
        %v2636 = vld [vmem:[#allocation4 + $0x2c] sm:$0x1]
        %v2637 = vsel %vm2620, 0, %v2636
        %2638 = vst [vmem:[#allocation4 + $0x2c] sm:$0x1] %v2637
        %v2639 = vld [vmem:[#allocation4 + $0x34] sm:$0x1]
        %v2640 = vsel %vm2620, 0, %v2639
        %2641 = vst [vmem:[#allocation4 + $0x34] sm:$0x1] %v2640
        %v2642 = vld [vmem:[#allocation4 + $0x3c] sm:$0x1]
        %v2643 = vsel %vm2620, 0, %v2642
        %2644 = vst [vmem:[#allocation4 + $0x3c] sm:$0x1] %v2643
        %v2645 = vld [vmem:[#allocation4 + $0x44] sm:$0x1]
        %v2646 = vsel %vm2620, 0, %v2645
        %2647 = vst [vmem:[#allocation4 + $0x44] sm:$0x1] %v2646
        %v2648 = vld [vmem:[#allocation4 + $0x4c] sm:$0x1]
        %v2649 = vsel %vm2620, 0, %v2648
        %2650 = vst [vmem:[#allocation4 + $0x4c] sm:$0x1] %v2649
        %v2655 = vunpack.c.l.b16 %v2579
        %v2656 = vunpack.c.h.b16 %v2579
        %v2657 = vunpack.c.l.b16 %v2580
        %v2658 = vunpack.c.h.b16 %v2580
        %v2659 = vunpack.c.l.b16 %v2581
        %v2660 = vunpack.c.h.b16 %v2581
        %v2661 = vunpack.c.l.b16 %v2582
        %v2662 = vunpack.c.h.b16 %v2582
        %v2663 = vpack.c.b16 %v2655, %v2655
        %v2664 = vpack.c.b16 %v2656, %v2656
        %v2665 = vpack.c.b16 %v2657, %v2657
        %v2666 = vpack.c.b16 %v2658, %v2658
        %v2667 = vpack.c.b16 %v2659, %v2659
        %v2668 = vpack.c.b16 %v2660, %v2660
        %v2669 = vpack.c.b16 %v2661, %v2661
        %v2670 = vpack.c.b16 %v2662, %v2662
        %v2672 = vshrl.u32 %v2663, 16
        %v2674 = vrot.slane %v2672, 7
        %v2675 = vshll.u32 %v2663, 16
        %v2677 = vor.u32 %v2674, %v2675
        %v2678 = vrot.slane %v2674, 4
        %v2680 = vshrl.u32 %v2664, 16
        %v2682 = vrot.slane %v2680, 7
        %v2683 = vshll.u32 %v2664, 16
        %v2685 = vor.u32 %v2682, %v2683
        %v2686 = vrot.slane %v2682, 4
        %v2688 = vshrl.u32 %v2665, 16
        %v2690 = vrot.slane %v2688, 7
        %v2691 = vshll.u32 %v2665, 16
        %v2693 = vor.u32 %v2690, %v2691
        %v2694 = vrot.slane %v2690, 4
        %v2696 = vshrl.u32 %v2666, 16
        %v2698 = vrot.slane %v2696, 7
        %v2699 = vshll.u32 %v2666, 16
        %v2701 = vor.u32 %v2698, %v2699
        %v2702 = vrot.slane %v2698, 4
        %v2704 = vshrl.u32 %v2667, 16
        %v2706 = vrot.slane %v2704, 7
        %v2707 = vshll.u32 %v2667, 16
        %v2709 = vor.u32 %v2706, %v2707
        %v2710 = vrot.slane %v2706, 4
        %v2712 = vshrl.u32 %v2668, 16
        %v2714 = vrot.slane %v2712, 7
        %v2715 = vshll.u32 %v2668, 16
        %v2717 = vor.u32 %v2714, %v2715
        %v2718 = vrot.slane %v2714, 4
        %v2720 = vshrl.u32 %v2669, 16
        %v2722 = vrot.slane %v2720, 7
        %v2723 = vshll.u32 %v2669, 16
        %v2725 = vor.u32 %v2722, %v2723
        %v2726 = vrot.slane %v2722, 4
        %v2728 = vshrl.u32 %v2670, 16
        %v2730 = vrot.slane %v2728, 7
        %v2731 = vshll.u32 %v2670, 16
        %v2733 = vor.u32 %v2730, %v2731
        %v2734 = vrot.slane %v2730, 4
        %s2751 = scalar_lea.vmem [#allocation4], 8
        %vm2752 = vcmask 1043456
        %vm2753 = vmand %vm2752, %vm755
        %v2754 = vld [vmem:[%s2751] sm:$0xf]
        %v2755 = vsel %vm2753, %v2677, %v2754
        %2756 = vst [vmem:[%s2751] sm:$0xf] %v2755
        %v2757 = vld [vmem:[%s2751 + $0x4] sm:$0x1]
        %v2758 = vsel %vm2589, %v2678, %v2757
        %2759 = vst [vmem:[%s2751 + $0x4] sm:$0x1] %v2758
        %v2760 = vld [vmem:[%s2751 + $0x8] sm:$0xf]
        %v2761 = vsel %vm2753, %v2685, %v2760
        %2762 = vst [vmem:[%s2751 + $0x8] sm:$0xf] %v2761
        %v2763 = vld [vmem:[%s2751 + $0xc] sm:$0x1]
        %v2764 = vsel %vm2589, %v2686, %v2763
        %2765 = vst [vmem:[%s2751 + $0xc] sm:$0x1] %v2764
        %v2766 = vld [vmem:[%s2751 + $0x10] sm:$0xf]
        %v2767 = vsel %vm2753, %v2693, %v2766
        %2768 = vst [vmem:[%s2751 + $0x10] sm:$0xf] %v2767
        %v2769 = vld [vmem:[%s2751 + $0x14] sm:$0x1]
        %v2770 = vsel %vm2589, %v2694, %v2769
        %2771 = vst [vmem:[%s2751 + $0x14] sm:$0x1] %v2770
        %v2772 = vld [vmem:[%s2751 + $0x18] sm:$0xf]
        %v2773 = vsel %vm2753, %v2701, %v2772
        %2774 = vst [vmem:[%s2751 + $0x18] sm:$0xf] %v2773
        %v2775 = vld [vmem:[%s2751 + $0x1c] sm:$0x1]
        %v2776 = vsel %vm2589, %v2702, %v2775
        %2777 = vst [vmem:[%s2751 + $0x1c] sm:$0x1] %v2776
        %v2778 = vld [vmem:[%s2751 + $0x20] sm:$0xf]
        %v2779 = vsel %vm2753, %v2709, %v2778
        %2780 = vst [vmem:[%s2751 + $0x20] sm:$0xf] %v2779
        %v2781 = vld [vmem:[%s2751 + $0x24] sm:$0x1]
        %v2782 = vsel %vm2589, %v2710, %v2781
        %2783 = vst [vmem:[%s2751 + $0x24] sm:$0x1] %v2782
        %v2784 = vld [vmem:[%s2751 + $0x28] sm:$0xf]
        %v2785 = vsel %vm2753, %v2717, %v2784
        %2786 = vst [vmem:[%s2751 + $0x28] sm:$0xf] %v2785
        %v2787 = vld [vmem:[%s2751 + $0x2c] sm:$0x1]
        %v2788 = vsel %vm2589, %v2718, %v2787
        %2789 = vst [vmem:[%s2751 + $0x2c] sm:$0x1] %v2788
        %v2790 = vld [vmem:[%s2751 + $0x30] sm:$0xf]
        %v2791 = vsel %vm2753, %v2725, %v2790
        %2792 = vst [vmem:[%s2751 + $0x30] sm:$0xf] %v2791
        %v2793 = vld [vmem:[%s2751 + $0x34] sm:$0x1]
        %v2794 = vsel %vm2589, %v2726, %v2793
        %2795 = vst [vmem:[%s2751 + $0x34] sm:$0x1] %v2794
        %v2796 = vld [vmem:[%s2751 + $0x38] sm:$0xf]
        %v2797 = vsel %vm2753, %v2733, %v2796
        %2798 = vst [vmem:[%s2751 + $0x38] sm:$0xf] %v2797
        %v2799 = vld [vmem:[%s2751 + $0x3c] sm:$0x1]
        %v2800 = vsel %vm2589, %v2734, %v2799
        %2801 = vst [vmem:[%s2751 + $0x3c] sm:$0x1] %v2800
        %v2802 = vld [vmem:[#allocation4] sm:$0xf]
        %v2803 = vld [vmem:[#allocation4 + $0x8] sm:$0xf]
        %v2804 = vld [vmem:[#allocation4 + $0x10] sm:$0xf]
        %v2805 = vld [vmem:[#allocation4 + $0x18] sm:$0xf]
        %v2806 = vld [vmem:[#allocation4 + $0x20] sm:$0xf]
        %v2807 = vld [vmem:[#allocation4 + $0x28] sm:$0xf]
        %v2808 = vld [vmem:[#allocation4 + $0x30] sm:$0xf]
        %v2809 = vld [vmem:[#allocation4 + $0x38] sm:$0xf]
        %v2818 = vunpack.c.l.b16 %v2802
        %v2819 = vunpack.c.l.b16 %v2803
        %v2820 = vunpack.c.l.b16 %v2804
        %v2821 = vunpack.c.l.b16 %v2805
        %v2822 = vunpack.c.l.b16 %v2806
        %v2823 = vunpack.c.l.b16 %v2807
        %v2824 = vunpack.c.l.b16 %v2808
        %v2825 = vunpack.c.l.b16 %v2809
        %v2826 = vpack.c.b16 %v2819, %v2818
        %v2827 = vpack.c.b16 %v2821, %v2820
        %v2828 = vpack.c.b16 %v2823, %v2822
        %v2829 = vpack.c.b16 %v2825, %v2824
        %2834 = vst [vmem:[#allocation5] sm:$0xff] %v2826
        %2835 = vst [vmem:[#allocation5 + $0x50] sm:$0xff] %v2827
        %2836 = vst [vmem:[#allocation5 + $0xa0] sm:$0xff] %v2828
        %2837 = vst [vmem:[#allocation5 + $0xf0] sm:$0xff] %v2829
        %v2838 = vld [vmem:[#allocation4] sm:$0xf]
        %v2839 = vld [vmem:[#allocation4 + $0x4] sm:$0x1]
        %v2840 = vld [vmem:[#allocation4 + $0x8] sm:$0xf]
        %v2841 = vld [vmem:[#allocation4 + $0xc] sm:$0x1]
        %v2842 = vld [vmem:[#allocation4 + $0x10] sm:$0xf]
        %v2843 = vld [vmem:[#allocation4 + $0x14] sm:$0x1]
        %v2844 = vld [vmem:[#allocation4 + $0x18] sm:$0xf]
        %v2845 = vld [vmem:[#allocation4 + $0x1c] sm:$0x1]
        %v2846 = vld [vmem:[#allocation4 + $0x20] sm:$0xf]
        %v2847 = vld [vmem:[#allocation4 + $0x24] sm:$0x1]
        %v2848 = vld [vmem:[#allocation4 + $0x28] sm:$0xf]
        %v2849 = vld [vmem:[#allocation4 + $0x2c] sm:$0x1]
        %v2850 = vld [vmem:[#allocation4 + $0x30] sm:$0xf]
        %v2851 = vld [vmem:[#allocation4 + $0x34] sm:$0x1]
        %v2852 = vld [vmem:[#allocation4 + $0x38] sm:$0xf]
        %v2853 = vld [vmem:[#allocation4 + $0x3c] sm:$0x1]
        %v2855 = vshrl.u32 %v2838, 16
        %v2857 = vrot.slane %v2855, 4
        %v2858 = vshll.u32 %v2838, 16
        %v2860 = vrot.slane %v2858, 5
        %v2861 = vor.u32 %v2857, %v2860
        %v2862 = vrot.slane %v2861, 4
        %v2864 = vshll.u32 %v2839, 16
        %v2866 = vrot.slane %v2864, 5
        %v2867 = vsel %vm1441, %v2862, %v2866
        %v2869 = vshrl.u32 %v2840, 16
        %v2871 = vrot.slane %v2869, 4
        %v2872 = vshll.u32 %v2840, 16
        %v2874 = vrot.slane %v2872, 5
        %v2875 = vor.u32 %v2871, %v2874
        %v2876 = vrot.slane %v2875, 4
        %v2878 = vshll.u32 %v2841, 16
        %v2880 = vrot.slane %v2878, 5
        %v2881 = vsel %vm1441, %v2876, %v2880
        %v2883 = vshrl.u32 %v2842, 16
        %v2885 = vrot.slane %v2883, 4
        %v2886 = vshll.u32 %v2842, 16
        %v2888 = vrot.slane %v2886, 5
        %v2889 = vor.u32 %v2885, %v2888
        %v2890 = vrot.slane %v2889, 4
        %v2892 = vshll.u32 %v2843, 16
        %v2894 = vrot.slane %v2892, 5
        %v2895 = vsel %vm1441, %v2890, %v2894
        %v2897 = vshrl.u32 %v2844, 16
        %v2899 = vrot.slane %v2897, 4
        %v2900 = vshll.u32 %v2844, 16
        %v2902 = vrot.slane %v2900, 5
        %v2903 = vor.u32 %v2899, %v2902
        %v2904 = vrot.slane %v2903, 4
        %v2906 = vshll.u32 %v2845, 16
        %v2908 = vrot.slane %v2906, 5
        %v2909 = vsel %vm1441, %v2904, %v2908
        %v2911 = vshrl.u32 %v2846, 16
        %v2913 = vrot.slane %v2911, 4
        %v2914 = vshll.u32 %v2846, 16
        %v2916 = vrot.slane %v2914, 5
        %v2917 = vor.u32 %v2913, %v2916
        %v2918 = vrot.slane %v2917, 4
        %v2920 = vshll.u32 %v2847, 16
        %v2922 = vrot.slane %v2920, 5
        %v2923 = vsel %vm1441, %v2918, %v2922
        %v2925 = vshrl.u32 %v2848, 16
        %v2927 = vrot.slane %v2925, 4
        %v2928 = vshll.u32 %v2848, 16
        %v2930 = vrot.slane %v2928, 5
        %v2931 = vor.u32 %v2927, %v2930
        %v2932 = vrot.slane %v2931, 4
        %v2934 = vshll.u32 %v2849, 16
        %v2936 = vrot.slane %v2934, 5
        %v2937 = vsel %vm1441, %v2932, %v2936
        %v2939 = vshrl.u32 %v2850, 16
        %v2941 = vrot.slane %v2939, 4
        %v2942 = vshll.u32 %v2850, 16
        %v2944 = vrot.slane %v2942, 5
        %v2945 = vor.u32 %v2941, %v2944
        %v2946 = vrot.slane %v2945, 4
        %v2948 = vshll.u32 %v2851, 16
        %v2950 = vrot.slane %v2948, 5
        %v2951 = vsel %vm1441, %v2946, %v2950
        %v2953 = vshrl.u32 %v2852, 16
        %v2955 = vrot.slane %v2953, 4
        %v2956 = vshll.u32 %v2852, 16
        %v2958 = vrot.slane %v2956, 5
        %v2959 = vor.u32 %v2955, %v2958
        %v2960 = vrot.slane %v2959, 4
        %v2962 = vshll.u32 %v2853, 16
        %v2964 = vrot.slane %v2962, 5
        %v2965 = vsel %vm1441, %v2960, %v2964
        %v2966 = vunpack.c.l.b16 %v2867
        %v2967 = vunpack.c.l.b16 %v2881
        %v2968 = vunpack.c.l.b16 %v2895
        %v2969 = vunpack.c.l.b16 %v2909
        %v2970 = vunpack.c.l.b16 %v2923
        %v2971 = vunpack.c.l.b16 %v2937
        %v2972 = vunpack.c.l.b16 %v2951
        %v2973 = vunpack.c.l.b16 %v2965
        %v2974 = vpack.c.b16 %v2967, %v2966
        %v2975 = vpack.c.b16 %v2969, %v2968
        %v2976 = vpack.c.b16 %v2971, %v2970
        %v2977 = vpack.c.b16 %v2973, %v2972
        %2982 = vst [vmem:[#allocation5 + $0x8] sm:$0xff] %v2974
        %2983 = vst [vmem:[#allocation5 + $0x58] sm:$0xff] %v2975
        %2984 = vst [vmem:[#allocation5 + $0xa8] sm:$0xff] %v2976
        %2985 = vst [vmem:[#allocation5 + $0xf8] sm:$0xff] %v2977
        %v2986 = vld [vmem:[#allocation4] sm:$0xe]
        %v2987 = vld [vmem:[#allocation4 + $0x4] sm:$0x1]
        %v2988 = vld [vmem:[#allocation4 + $0x8] sm:$0xe]
        %v2989 = vld [vmem:[#allocation4 + $0xc] sm:$0x1]
        %v2990 = vld [vmem:[#allocation4 + $0x10] sm:$0xe]
        %v2991 = vld [vmem:[#allocation4 + $0x14] sm:$0x1]
        %v2992 = vld [vmem:[#allocation4 + $0x18] sm:$0xe]
        %v2993 = vld [vmem:[#allocation4 + $0x1c] sm:$0x1]
        %v2994 = vld [vmem:[#allocation4 + $0x20] sm:$0xe]
        %v2995 = vld [vmem:[#allocation4 + $0x24] sm:$0x1]
        %v2996 = vld [vmem:[#allocation4 + $0x28] sm:$0xe]
        %v2997 = vld [vmem:[#allocation4 + $0x2c] sm:$0x1]
        %v2998 = vld [vmem:[#allocation4 + $0x30] sm:$0xe]
        %v2999 = vld [vmem:[#allocation4 + $0x34] sm:$0x1]
        %v3000 = vld [vmem:[#allocation4 + $0x38] sm:$0xe]
        %v3001 = vld [vmem:[#allocation4 + $0x3c] sm:$0x1]
        %vm3018 = vcmask 1042432
        %vm3019 = vcmask 1046532
        %vm3020 = vmor %vm3018, %vm3019
        %v3021 = vrot.slane %v2986, 5
        %v3022 = vrot.slane %v3021, 4
        %v3023 = vrot.slane %v2987, 5
        %v3024 = vsel %vm3020, %v3022, %v3023
        %v3025 = vrot.slane %v2988, 5
        %v3026 = vrot.slane %v3025, 4
        %v3027 = vrot.slane %v2989, 5
        %v3028 = vsel %vm3020, %v3026, %v3027
        %v3029 = vrot.slane %v2990, 5
        %v3030 = vrot.slane %v3029, 4
        %v3031 = vrot.slane %v2991, 5
        %v3032 = vsel %vm3020, %v3030, %v3031
        %v3033 = vrot.slane %v2992, 5
        %v3034 = vrot.slane %v3033, 4
        %v3035 = vrot.slane %v2993, 5
        %v3036 = vsel %vm3020, %v3034, %v3035
        %v3037 = vrot.slane %v2994, 5
        %v3038 = vrot.slane %v3037, 4
        %v3039 = vrot.slane %v2995, 5
        %v3040 = vsel %vm3020, %v3038, %v3039
        %v3041 = vrot.slane %v2996, 5
        %v3042 = vrot.slane %v3041, 4
        %v3043 = vrot.slane %v2997, 5
        %v3044 = vsel %vm3020, %v3042, %v3043
        %v3045 = vrot.slane %v2998, 5
        %v3046 = vrot.slane %v3045, 4
        %v3047 = vrot.slane %v2999, 5
        %v3048 = vsel %vm3020, %v3046, %v3047
        %v3049 = vrot.slane %v3000, 5
        %v3050 = vrot.slane %v3049, 4
        %v3051 = vrot.slane %v3001, 5
        %v3052 = vsel %vm3020, %v3050, %v3051
        %v3053 = vunpack.c.l.b16 %v3024
        %v3054 = vunpack.c.l.b16 %v3028
        %v3055 = vunpack.c.l.b16 %v3032
        %v3056 = vunpack.c.l.b16 %v3036
        %v3057 = vunpack.c.l.b16 %v3040
        %v3058 = vunpack.c.l.b16 %v3044
        %v3059 = vunpack.c.l.b16 %v3048
        %v3060 = vunpack.c.l.b16 %v3052
        %v3061 = vpack.c.b16 %v3054, %v3053
        %v3062 = vpack.c.b16 %v3056, %v3055
        %v3063 = vpack.c.b16 %v3058, %v3057
        %v3064 = vpack.c.b16 %v3060, %v3059
        %3069 = vst [vmem:[#allocation5 + $0x10] sm:$0xff] %v3061
        %3070 = vst [vmem:[#allocation5 + $0x60] sm:$0xff] %v3062
        %3071 = vst [vmem:[#allocation5 + $0xb0] sm:$0xff] %v3063
        %3072 = vst [vmem:[#allocation5 + $0x100] sm:$0xff] %v3064
        %v3073 = vld [vmem:[%s2751] sm:$0xf]
        %v3074 = vld [vmem:[%s2751 + $0x8] sm:$0xf]
        %v3075 = vld [vmem:[%s2751 + $0x10] sm:$0xf]
        %v3076 = vld [vmem:[%s2751 + $0x18] sm:$0xf]
        %v3077 = vld [vmem:[%s2751 + $0x20] sm:$0xf]
        %v3078 = vld [vmem:[%s2751 + $0x28] sm:$0xf]
        %v3079 = vld [vmem:[%s2751 + $0x30] sm:$0xf]
        %v3080 = vld [vmem:[%s2751 + $0x38] sm:$0xf]
        %v3089 = vunpack.c.l.b16 %v3073
        %v3090 = vunpack.c.l.b16 %v3074
        %v3091 = vunpack.c.l.b16 %v3075
        %v3092 = vunpack.c.l.b16 %v3076
        %v3093 = vunpack.c.l.b16 %v3077
        %v3094 = vunpack.c.l.b16 %v3078
        %v3095 = vunpack.c.l.b16 %v3079
        %v3096 = vunpack.c.l.b16 %v3080
        %v3097 = vpack.c.b16 %v3090, %v3089
        %v3098 = vpack.c.b16 %v3092, %v3091
        %v3099 = vpack.c.b16 %v3094, %v3093
        %v3100 = vpack.c.b16 %v3096, %v3095
        %3105 = vst [vmem:[#allocation5 + $0x18] sm:$0xff] %v3097
        %3106 = vst [vmem:[#allocation5 + $0x68] sm:$0xff] %v3098
        %3107 = vst [vmem:[#allocation5 + $0xb8] sm:$0xff] %v3099
        %3108 = vst [vmem:[#allocation5 + $0x108] sm:$0xff] %v3100
        %v3109 = vld [vmem:[%s2751] sm:$0xf]
        %v3110 = vld [vmem:[%s2751 + $0x4] sm:$0x1]
        %v3111 = vld [vmem:[%s2751 + $0x8] sm:$0xf]
        %v3112 = vld [vmem:[%s2751 + $0xc] sm:$0x1]
        %v3113 = vld [vmem:[%s2751 + $0x10] sm:$0xf]
        %v3114 = vld [vmem:[%s2751 + $0x14] sm:$0x1]
        %v3115 = vld [vmem:[%s2751 + $0x18] sm:$0xf]
        %v3116 = vld [vmem:[%s2751 + $0x1c] sm:$0x1]
        %v3117 = vld [vmem:[%s2751 + $0x20] sm:$0xf]
        %v3118 = vld [vmem:[%s2751 + $0x24] sm:$0x1]
        %v3119 = vld [vmem:[%s2751 + $0x28] sm:$0xf]
        %v3120 = vld [vmem:[%s2751 + $0x2c] sm:$0x1]
        %v3121 = vld [vmem:[%s2751 + $0x30] sm:$0xf]
        %v3122 = vld [vmem:[%s2751 + $0x34] sm:$0x1]
        %v3123 = vld [vmem:[%s2751 + $0x38] sm:$0xf]
        %v3124 = vld [vmem:[%s2751 + $0x3c] sm:$0x1]
        %v3126 = vshrl.u32 %v3109, 16
        %v3128 = vrot.slane %v3126, 4
        %v3129 = vshll.u32 %v3109, 16
        %v3131 = vrot.slane %v3129, 5
        %v3132 = vor.u32 %v3128, %v3131
        %v3133 = vrot.slane %v3132, 4
        %v3135 = vshll.u32 %v3110, 16
        %v3137 = vrot.slane %v3135, 5
        %v3138 = vsel %vm1441, %v3133, %v3137
        %v3140 = vshrl.u32 %v3111, 16
        %v3142 = vrot.slane %v3140, 4
        %v3143 = vshll.u32 %v3111, 16
        %v3145 = vrot.slane %v3143, 5
        %v3146 = vor.u32 %v3142, %v3145
        %v3147 = vrot.slane %v3146, 4
        %v3149 = vshll.u32 %v3112, 16
        %v3151 = vrot.slane %v3149, 5
        %v3152 = vsel %vm1441, %v3147, %v3151
        %v3154 = vshrl.u32 %v3113, 16
        %v3156 = vrot.slane %v3154, 4
        %v3157 = vshll.u32 %v3113, 16
        %v3159 = vrot.slane %v3157, 5
        %v3160 = vor.u32 %v3156, %v3159
        %v3161 = vrot.slane %v3160, 4
        %v3163 = vshll.u32 %v3114, 16
        %v3165 = vrot.slane %v3163, 5
        %v3166 = vsel %vm1441, %v3161, %v3165
        %v3168 = vshrl.u32 %v3115, 16
        %v3170 = vrot.slane %v3168, 4
        %v3171 = vshll.u32 %v3115, 16
        %v3173 = vrot.slane %v3171, 5
        %v3174 = vor.u32 %v3170, %v3173
        %v3175 = vrot.slane %v3174, 4
        %v3177 = vshll.u32 %v3116, 16
        %v3179 = vrot.slane %v3177, 5
        %v3180 = vsel %vm1441, %v3175, %v3179
        %v3182 = vshrl.u32 %v3117, 16
        %v3184 = vrot.slane %v3182, 4
        %v3185 = vshll.u32 %v3117, 16
        %v3187 = vrot.slane %v3185, 5
        %v3188 = vor.u32 %v3184, %v3187
        %v3189 = vrot.slane %v3188, 4
        %v3191 = vshll.u32 %v3118, 16
        %v3193 = vrot.slane %v3191, 5
        %v3194 = vsel %vm1441, %v3189, %v3193
        %v3196 = vshrl.u32 %v3119, 16
        %v3198 = vrot.slane %v3196, 4
        %v3199 = vshll.u32 %v3119, 16
        %v3201 = vrot.slane %v3199, 5
        %v3202 = vor.u32 %v3198, %v3201
        %v3203 = vrot.slane %v3202, 4
        %v3205 = vshll.u32 %v3120, 16
        %v3207 = vrot.slane %v3205, 5
        %v3208 = vsel %vm1441, %v3203, %v3207
        %v3210 = vshrl.u32 %v3121, 16
        %v3212 = vrot.slane %v3210, 4
        %v3213 = vshll.u32 %v3121, 16
        %v3215 = vrot.slane %v3213, 5
        %v3216 = vor.u32 %v3212, %v3215
        %v3217 = vrot.slane %v3216, 4
        %v3219 = vshll.u32 %v3122, 16
        %v3221 = vrot.slane %v3219, 5
        %v3222 = vsel %vm1441, %v3217, %v3221
        %v3224 = vshrl.u32 %v3123, 16
        %v3226 = vrot.slane %v3224, 4
        %v3227 = vshll.u32 %v3123, 16
        %v3229 = vrot.slane %v3227, 5
        %v3230 = vor.u32 %v3226, %v3229
        %v3231 = vrot.slane %v3230, 4
        %v3233 = vshll.u32 %v3124, 16
        %v3235 = vrot.slane %v3233, 5
        %v3236 = vsel %vm1441, %v3231, %v3235
        %v3237 = vunpack.c.l.b16 %v3138
        %v3238 = vunpack.c.l.b16 %v3152
        %v3239 = vunpack.c.l.b16 %v3166
        %v3240 = vunpack.c.l.b16 %v3180
        %v3241 = vunpack.c.l.b16 %v3194
        %v3242 = vunpack.c.l.b16 %v3208
        %v3243 = vunpack.c.l.b16 %v3222
        %v3244 = vunpack.c.l.b16 %v3236
        %v3245 = vpack.c.b16 %v3238, %v3237
        %v3246 = vpack.c.b16 %v3240, %v3239
        %v3247 = vpack.c.b16 %v3242, %v3241
        %v3248 = vpack.c.b16 %v3244, %v3243
        %3253 = vst [vmem:[#allocation5 + $0x20] sm:$0xff] %v3245
        %3254 = vst [vmem:[#allocation5 + $0x70] sm:$0xff] %v3246
        %3255 = vst [vmem:[#allocation5 + $0xc0] sm:$0xff] %v3247
        %3256 = vst [vmem:[#allocation5 + $0x110] sm:$0xff] %v3248
        %v3257 = vld [vmem:[%s2751] sm:$0xe]
        %v3258 = vld [vmem:[%s2751 + $0x4] sm:$0x1]
        %v3259 = vld [vmem:[%s2751 + $0x8] sm:$0xe]
        %v3260 = vld [vmem:[%s2751 + $0xc] sm:$0x1]
        %v3261 = vld [vmem:[%s2751 + $0x10] sm:$0xe]
        %v3262 = vld [vmem:[%s2751 + $0x14] sm:$0x1]
        %v3263 = vld [vmem:[%s2751 + $0x18] sm:$0xe]
        %v3264 = vld [vmem:[%s2751 + $0x1c] sm:$0x1]
        %v3265 = vld [vmem:[%s2751 + $0x20] sm:$0xe]
        %v3266 = vld [vmem:[%s2751 + $0x24] sm:$0x1]
        %v3267 = vld [vmem:[%s2751 + $0x28] sm:$0xe]
        %v3268 = vld [vmem:[%s2751 + $0x2c] sm:$0x1]
        %v3269 = vld [vmem:[%s2751 + $0x30] sm:$0xe]
        %v3270 = vld [vmem:[%s2751 + $0x34] sm:$0x1]
        %v3271 = vld [vmem:[%s2751 + $0x38] sm:$0xe]
        %v3272 = vld [vmem:[%s2751 + $0x3c] sm:$0x1]
        %v3289 = vrot.slane %v3257, 5
        %v3290 = vrot.slane %v3289, 4
        %v3291 = vrot.slane %v3258, 5
        %v3292 = vsel %vm3020, %v3290, %v3291
        %v3293 = vrot.slane %v3259, 5
        %v3294 = vrot.slane %v3293, 4
        %v3295 = vrot.slane %v3260, 5
        %v3296 = vsel %vm3020, %v3294, %v3295
        %v3297 = vrot.slane %v3261, 5
        %v3298 = vrot.slane %v3297, 4
        %v3299 = vrot.slane %v3262, 5
        %v3300 = vsel %vm3020, %v3298, %v3299
        %v3301 = vrot.slane %v3263, 5
        %v3302 = vrot.slane %v3301, 4
        %v3303 = vrot.slane %v3264, 5
        %v3304 = vsel %vm3020, %v3302, %v3303
        %v3305 = vrot.slane %v3265, 5
        %v3306 = vrot.slane %v3305, 4
        %v3307 = vrot.slane %v3266, 5
        %v3308 = vsel %vm3020, %v3306, %v3307
        %v3309 = vrot.slane %v3267, 5
        %v3310 = vrot.slane %v3309, 4
        %v3311 = vrot.slane %v3268, 5
        %v3312 = vsel %vm3020, %v3310, %v3311
        %v3313 = vrot.slane %v3269, 5
        %v3314 = vrot.slane %v3313, 4
        %v3315 = vrot.slane %v3270, 5
        %v3316 = vsel %vm3020, %v3314, %v3315
        %v3317 = vrot.slane %v3271, 5
        %v3318 = vrot.slane %v3317, 4
        %v3319 = vrot.slane %v3272, 5
        %v3320 = vsel %vm3020, %v3318, %v3319
        %v3321 = vunpack.c.l.b16 %v3292
        %v3322 = vunpack.c.l.b16 %v3296
        %v3323 = vunpack.c.l.b16 %v3300
        %v3324 = vunpack.c.l.b16 %v3304
        %v3325 = vunpack.c.l.b16 %v3308
        %v3326 = vunpack.c.l.b16 %v3312
        %v3327 = vunpack.c.l.b16 %v3316
        %v3328 = vunpack.c.l.b16 %v3320
        %v3329 = vpack.c.b16 %v3322, %v3321
        %v3330 = vpack.c.b16 %v3324, %v3323
        %v3331 = vpack.c.b16 %v3326, %v3325
        %v3332 = vpack.c.b16 %v3328, %v3327
        %3337 = vst [vmem:[#allocation5 + $0x28] sm:$0xff] %v3329
        %3338 = vst [vmem:[#allocation5 + $0x78] sm:$0xff] %v3330
        %3339 = vst [vmem:[#allocation5 + $0xc8] sm:$0xff] %v3331
        %3340 = vst [vmem:[#allocation5 + $0x118] sm:$0xff] %v3332
        %s3341 = scalar_lea.vmem [#allocation4], 16
        %v3342 = vld [vmem:[%s3341] sm:$0xf]
        %v3343 = vld [vmem:[%s3341 + $0x8] sm:$0xf]
        %v3344 = vld [vmem:[%s3341 + $0x10] sm:$0xf]
        %v3345 = vld [vmem:[%s3341 + $0x18] sm:$0xf]
        %v3346 = vld [vmem:[%s3341 + $0x20] sm:$0xf]
        %v3347 = vld [vmem:[%s3341 + $0x28] sm:$0xf]
        %v3348 = vld [vmem:[%s3341 + $0x30] sm:$0xf]
        %v3349 = vld [vmem:[%s3341 + $0x38] sm:$0xf]
        %v3358 = vunpack.c.l.b16 %v3342
        %v3359 = vunpack.c.l.b16 %v3343
        %v3360 = vunpack.c.l.b16 %v3344
        %v3361 = vunpack.c.l.b16 %v3345
        %v3362 = vunpack.c.l.b16 %v3346
        %v3363 = vunpack.c.l.b16 %v3347
        %v3364 = vunpack.c.l.b16 %v3348
        %v3365 = vunpack.c.l.b16 %v3349
        %v3366 = vpack.c.b16 %v3359, %v3358
        %v3367 = vpack.c.b16 %v3361, %v3360
        %v3368 = vpack.c.b16 %v3363, %v3362
        %v3369 = vpack.c.b16 %v3365, %v3364
        %3374 = vst [vmem:[#allocation5 + $0x30] sm:$0xff] %v3366
        %3375 = vst [vmem:[#allocation5 + $0x80] sm:$0xff] %v3367
        %3376 = vst [vmem:[#allocation5 + $0xd0] sm:$0xff] %v3368
        %3377 = vst [vmem:[#allocation5 + $0x120] sm:$0xff] %v3369
        %v3378 = vld [vmem:[%s3341] sm:$0xf]
        %v3379 = vld [vmem:[%s3341 + $0x4] sm:$0x1]
        %v3380 = vld [vmem:[%s3341 + $0x8] sm:$0xf]
        %v3381 = vld [vmem:[%s3341 + $0xc] sm:$0x1]
        %v3382 = vld [vmem:[%s3341 + $0x10] sm:$0xf]
        %v3383 = vld [vmem:[%s3341 + $0x14] sm:$0x1]
        %v3384 = vld [vmem:[%s3341 + $0x18] sm:$0xf]
        %v3385 = vld [vmem:[%s3341 + $0x1c] sm:$0x1]
        %v3386 = vld [vmem:[%s3341 + $0x20] sm:$0xf]
        %v3387 = vld [vmem:[%s3341 + $0x24] sm:$0x1]
        %v3388 = vld [vmem:[%s3341 + $0x28] sm:$0xf]
        %v3389 = vld [vmem:[%s3341 + $0x2c] sm:$0x1]
        %v3390 = vld [vmem:[%s3341 + $0x30] sm:$0xf]
        %v3391 = vld [vmem:[%s3341 + $0x34] sm:$0x1]
        %v3392 = vld [vmem:[%s3341 + $0x38] sm:$0xf]
        %v3393 = vld [vmem:[%s3341 + $0x3c] sm:$0x1]
        %v3395 = vshrl.u32 %v3378, 16
        %v3397 = vrot.slane %v3395, 4
        %v3398 = vshll.u32 %v3378, 16
        %v3400 = vrot.slane %v3398, 5
        %v3401 = vor.u32 %v3397, %v3400
        %v3402 = vrot.slane %v3401, 4
        %v3404 = vshll.u32 %v3379, 16
        %v3406 = vrot.slane %v3404, 5
        %v3407 = vsel %vm1441, %v3402, %v3406
        %v3409 = vshrl.u32 %v3380, 16
        %v3411 = vrot.slane %v3409, 4
        %v3412 = vshll.u32 %v3380, 16
        %v3414 = vrot.slane %v3412, 5
        %v3415 = vor.u32 %v3411, %v3414
        %v3416 = vrot.slane %v3415, 4
        %v3418 = vshll.u32 %v3381, 16
        %v3420 = vrot.slane %v3418, 5
        %v3421 = vsel %vm1441, %v3416, %v3420
        %v3423 = vshrl.u32 %v3382, 16
        %v3425 = vrot.slane %v3423, 4
        %v3426 = vshll.u32 %v3382, 16
        %v3428 = vrot.slane %v3426, 5
        %v3429 = vor.u32 %v3425, %v3428
        %v3430 = vrot.slane %v3429, 4
        %v3432 = vshll.u32 %v3383, 16
        %v3434 = vrot.slane %v3432, 5
        %v3435 = vsel %vm1441, %v3430, %v3434
        %v3437 = vshrl.u32 %v3384, 16
        %v3439 = vrot.slane %v3437, 4
        %v3440 = vshll.u32 %v3384, 16
        %v3442 = vrot.slane %v3440, 5
        %v3443 = vor.u32 %v3439, %v3442
        %v3444 = vrot.slane %v3443, 4
        %v3446 = vshll.u32 %v3385, 16
        %v3448 = vrot.slane %v3446, 5
        %v3449 = vsel %vm1441, %v3444, %v3448
        %v3451 = vshrl.u32 %v3386, 16
        %v3453 = vrot.slane %v3451, 4
        %v3454 = vshll.u32 %v3386, 16
        %v3456 = vrot.slane %v3454, 5
        %v3457 = vor.u32 %v3453, %v3456
        %v3458 = vrot.slane %v3457, 4
        %v3460 = vshll.u32 %v3387, 16
        %v3462 = vrot.slane %v3460, 5
        %v3463 = vsel %vm1441, %v3458, %v3462
        %v3465 = vshrl.u32 %v3388, 16
        %v3467 = vrot.slane %v3465, 4
        %v3468 = vshll.u32 %v3388, 16
        %v3470 = vrot.slane %v3468, 5
        %v3471 = vor.u32 %v3467, %v3470
        %v3472 = vrot.slane %v3471, 4
        %v3474 = vshll.u32 %v3389, 16
        %v3476 = vrot.slane %v3474, 5
        %v3477 = vsel %vm1441, %v3472, %v3476
        %v3479 = vshrl.u32 %v3390, 16
        %v3481 = vrot.slane %v3479, 4
        %v3482 = vshll.u32 %v3390, 16
        %v3484 = vrot.slane %v3482, 5
        %v3485 = vor.u32 %v3481, %v3484
        %v3486 = vrot.slane %v3485, 4
        %v3488 = vshll.u32 %v3391, 16
        %v3490 = vrot.slane %v3488, 5
        %v3491 = vsel %vm1441, %v3486, %v3490
        %v3493 = vshrl.u32 %v3392, 16
        %v3495 = vrot.slane %v3493, 4
        %v3496 = vshll.u32 %v3392, 16
        %v3498 = vrot.slane %v3496, 5
        %v3499 = vor.u32 %v3495, %v3498
        %v3500 = vrot.slane %v3499, 4
        %v3502 = vshll.u32 %v3393, 16
        %v3504 = vrot.slane %v3502, 5
        %v3505 = vsel %vm1441, %v3500, %v3504
        %v3506 = vunpack.c.l.b16 %v3407
        %v3507 = vunpack.c.l.b16 %v3421
        %v3508 = vunpack.c.l.b16 %v3435
        %v3509 = vunpack.c.l.b16 %v3449
        %v3510 = vunpack.c.l.b16 %v3463
        %v3511 = vunpack.c.l.b16 %v3477
        %v3512 = vunpack.c.l.b16 %v3491
        %v3513 = vunpack.c.l.b16 %v3505
        %v3514 = vpack.c.b16 %v3507, %v3506
        %v3515 = vpack.c.b16 %v3509, %v3508
        %v3516 = vpack.c.b16 %v3511, %v3510
        %v3517 = vpack.c.b16 %v3513, %v3512
        %3522 = vst [vmem:[#allocation5 + $0x38] sm:$0xff] %v3514
        %3523 = vst [vmem:[#allocation5 + $0x88] sm:$0xff] %v3515
        %3524 = vst [vmem:[#allocation5 + $0xd8] sm:$0xff] %v3516
        %3525 = vst [vmem:[#allocation5 + $0x128] sm:$0xff] %v3517
        %v3526 = vld [vmem:[%s3341] sm:$0xe]
        %v3527 = vld [vmem:[%s3341 + $0x4] sm:$0x1]
        %v3528 = vld [vmem:[%s3341 + $0x8] sm:$0xe]
        %v3529 = vld [vmem:[%s3341 + $0xc] sm:$0x1]
        %v3530 = vld [vmem:[%s3341 + $0x10] sm:$0xe]
        %v3531 = vld [vmem:[%s3341 + $0x14] sm:$0x1]
        %v3532 = vld [vmem:[%s3341 + $0x18] sm:$0xe]
        %v3533 = vld [vmem:[%s3341 + $0x1c] sm:$0x1]
        %v3534 = vld [vmem:[%s3341 + $0x20] sm:$0xe]
        %v3535 = vld [vmem:[%s3341 + $0x24] sm:$0x1]
        %v3536 = vld [vmem:[%s3341 + $0x28] sm:$0xe]
        %v3537 = vld [vmem:[%s3341 + $0x2c] sm:$0x1]
        %v3538 = vld [vmem:[%s3341 + $0x30] sm:$0xe]
        %v3539 = vld [vmem:[%s3341 + $0x34] sm:$0x1]
        %v3540 = vld [vmem:[%s3341 + $0x38] sm:$0xe]
        %v3541 = vld [vmem:[%s3341 + $0x3c] sm:$0x1]
        %v3558 = vrot.slane %v3526, 5
        %v3559 = vrot.slane %v3558, 4
        %v3560 = vrot.slane %v3527, 5
        %v3561 = vsel %vm3020, %v3559, %v3560
        %v3562 = vrot.slane %v3528, 5
        %v3563 = vrot.slane %v3562, 4
        %v3564 = vrot.slane %v3529, 5
        %v3565 = vsel %vm3020, %v3563, %v3564
        %v3566 = vrot.slane %v3530, 5
        %v3567 = vrot.slane %v3566, 4
        %v3568 = vrot.slane %v3531, 5
        %v3569 = vsel %vm3020, %v3567, %v3568
        %v3570 = vrot.slane %v3532, 5
        %v3571 = vrot.slane %v3570, 4
        %v3572 = vrot.slane %v3533, 5
        %v3573 = vsel %vm3020, %v3571, %v3572
        %v3574 = vrot.slane %v3534, 5
        %v3575 = vrot.slane %v3574, 4
        %v3576 = vrot.slane %v3535, 5
        %v3577 = vsel %vm3020, %v3575, %v3576
        %v3578 = vrot.slane %v3536, 5
        %v3579 = vrot.slane %v3578, 4
        %v3580 = vrot.slane %v3537, 5
        %v3581 = vsel %vm3020, %v3579, %v3580
        %v3582 = vrot.slane %v3538, 5
        %v3583 = vrot.slane %v3582, 4
        %v3584 = vrot.slane %v3539, 5
        %v3585 = vsel %vm3020, %v3583, %v3584
        %v3586 = vrot.slane %v3540, 5
        %v3587 = vrot.slane %v3586, 4
        %v3588 = vrot.slane %v3541, 5
        %v3589 = vsel %vm3020, %v3587, %v3588
        %v3590 = vunpack.c.l.b16 %v3561
        %v3591 = vunpack.c.l.b16 %v3565
        %v3592 = vunpack.c.l.b16 %v3569
        %v3593 = vunpack.c.l.b16 %v3573
        %v3594 = vunpack.c.l.b16 %v3577
        %v3595 = vunpack.c.l.b16 %v3581
        %v3596 = vunpack.c.l.b16 %v3585
        %v3597 = vunpack.c.l.b16 %v3589
        %v3598 = vpack.c.b16 %v3591, %v3590
        %v3599 = vpack.c.b16 %v3593, %v3592
        %v3600 = vpack.c.b16 %v3595, %v3594
        %v3601 = vpack.c.b16 %v3597, %v3596
        %3606 = vst [vmem:[#allocation5 + $0x40] sm:$0xff] %v3598
        %3607 = vst [vmem:[#allocation5 + $0x90] sm:$0xff] %v3599
        %3608 = vst [vmem:[#allocation5 + $0xe0] sm:$0xff] %v3600
        %3609 = vst [vmem:[#allocation5 + $0x130] sm:$0xff] %v3601
        %v3618 = vunpack.c.l.b16 %v563
        %v3619 = vunpack.c.l.b16 %v564
        %v3620 = vunpack.c.l.b16 %v565
        %v3621 = vunpack.c.l.b16 %v566
        %v3622 = vunpack.c.l.b16 %v567
        %v3623 = vunpack.c.l.b16 %v568
        %v3624 = vunpack.c.l.b16 %v569
        %v3625 = vunpack.c.l.b16 %v570
        %v3626 = vpack.c.b16 %v3619, %v3618
        %v3627 = vpack.c.b16 %v3621, %v3620
        %v3628 = vpack.c.b16 %v3623, %v3622
        %v3629 = vpack.c.b16 %v3625, %v3624
        %3634 = vst.msk [vmem:[#allocation5 + $0x48] sm:$0xff] %vm1417, %v3626
        %3635 = vst.msk [vmem:[#allocation5 + $0x98] sm:$0xff] %vm1417, %v3627
        %3636 = vst.msk [vmem:[#allocation5 + $0xe8] sm:$0xff] %vm1417, %v3628
        %3637 = vst.msk [vmem:[#allocation5 + $0x138] sm:$0xff] %vm1417, %v3629
        %v3638 = vld [vmem:[#allocation5] sm:$0xff]
        %v3639 = vld [vmem:[#allocation5 + $0x8] sm:$0xff]
        %v3640 = vld [vmem:[#allocation5 + $0x10] sm:$0xff]
        %v3641 = vld [vmem:[#allocation5 + $0x18] sm:$0xff]
        %v3642 = vld [vmem:[#allocation5 + $0x20] sm:$0xff]
        %v3643 = vld [vmem:[#allocation5 + $0x28] sm:$0xff]
        %v3644 = vld [vmem:[#allocation5 + $0x30] sm:$0xff]
        %v3645 = vld [vmem:[#allocation5 + $0x38] sm:$0xff]
        %v3646 = vld [vmem:[#allocation5 + $0x40] sm:$0xff]
        %v3647 = vld [vmem:[#allocation5 + $0x48] sm:$0xff]
        %v3648 = vld [vmem:[#allocation5 + $0x50] sm:$0xff]
        %v3649 = vld [vmem:[#allocation5 + $0x58] sm:$0xff]
        %v3650 = vld [vmem:[#allocation5 + $0x60] sm:$0xff]
        %v3651 = vld [vmem:[#allocation5 + $0x68] sm:$0xff]
        %v3652 = vld [vmem:[#allocation5 + $0x70] sm:$0xff]
        %v3653 = vld [vmem:[#allocation5 + $0x78] sm:$0xff]
        %v3654 = vld [vmem:[#allocation5 + $0x80] sm:$0xff]
        %v3655 = vld [vmem:[#allocation5 + $0x88] sm:$0xff]
        %v3656 = vld [vmem:[#allocation5 + $0x90] sm:$0xff]
        %v3657 = vld [vmem:[#allocation5 + $0x98] sm:$0xff]
        %v3658 = vld [vmem:[#allocation5 + $0xa0] sm:$0xff]
        %v3659 = vld [vmem:[#allocation5 + $0xa8] sm:$0xff]
        %v3660 = vld [vmem:[#allocation5 + $0xb0] sm:$0xff]
        %v3661 = vld [vmem:[#allocation5 + $0xb8] sm:$0xff]
        %v3662 = vld [vmem:[#allocation5 + $0xc0] sm:$0xff]
        %v3663 = vld [vmem:[#allocation5 + $0xc8] sm:$0xff]
        %v3664 = vld [vmem:[#allocation5 + $0xd0] sm:$0xff]
        %v3665 = vld [vmem:[#allocation5 + $0xd8] sm:$0xff]
        %v3666 = vld [vmem:[#allocation5 + $0xe0] sm:$0xff]
        %v3667 = vld [vmem:[#allocation5 + $0xe8] sm:$0xff]
        %v3668 = vld [vmem:[#allocation5 + $0xf0] sm:$0xff]
        %v3669 = vld [vmem:[#allocation5 + $0xf8] sm:$0xff]
        %v3670 = vld [vmem:[#allocation5 + $0x100] sm:$0xff]
        %v3671 = vld [vmem:[#allocation5 + $0x108] sm:$0xff]
        %v3672 = vld [vmem:[#allocation5 + $0x110] sm:$0xff]
        %v3673 = vld [vmem:[#allocation5 + $0x118] sm:$0xff]
        %v3674 = vld [vmem:[#allocation5 + $0x120] sm:$0xff]
        %v3675 = vld [vmem:[#allocation5 + $0x128] sm:$0xff]
        %v3676 = vld [vmem:[#allocation5 + $0x130] sm:$0xff]
        %v3677 = vld [vmem:[#allocation5 + $0x138] sm:$0xff]
        %v3678 = vld [vmem:[#allocation6] sm:$0xf]
        %v3679 = vld [vmem:[#allocation6 + $0x4] sm:$0xf]
        %v3680 = vld [vmem:[#allocation6 + $0x8] sm:$0xf]
        %v3681 = vld [vmem:[#allocation6 + $0xc] sm:$0xf]
        %v3682 = vld [vmem:[#allocation6 + $0x10] sm:$0xf]
        %v3683 = vld [vmem:[#allocation6 + $0x14] sm:$0xf]
        %v3684 = vld [vmem:[#allocation6 + $0x18] sm:$0xf]
        %v3685 = vld [vmem:[#allocation6 + $0x1c] sm:$0xf]
        %v3686 = vld [vmem:[#allocation6 + $0x20] sm:$0xf]
        %v3687 = vld [vmem:[#allocation6 + $0x24] sm:$0xf]
        %v3688 = vld [vmem:[#allocation6 + $0x28] sm:$0xf]
        %v3689 = vld [vmem:[#allocation6 + $0x2c] sm:$0xf]
        %v3690 = vld [vmem:[#allocation6 + $0x30] sm:$0xf]
        %v3691 = vld [vmem:[#allocation6 + $0x34] sm:$0xf]
        %v3692 = vld [vmem:[#allocation6 + $0x38] sm:$0xf]
        %v3693 = vld [vmem:[#allocation6 + $0x3c] sm:$0xf]
        %v3694 = vld [vmem:[#allocation6 + $0x40] sm:$0xf]
        %v3695 = vld [vmem:[#allocation6 + $0x44] sm:$0xf]
        %v3696 = vld [vmem:[#allocation6 + $0x48] sm:$0xf]
        %v3697 = vld [vmem:[#allocation6 + $0x4c] sm:$0xf]
        %v3698 = vld [vmem:[#allocation6 + $0x50] sm:$0xf]
        %v3699 = vld [vmem:[#allocation6 + $0x54] sm:$0xf]
        %v3700 = vld [vmem:[#allocation6 + $0x58] sm:$0xf]
        %v3701 = vld [vmem:[#allocation6 + $0x5c] sm:$0xf]
        %v3702 = vld [vmem:[#allocation6 + $0x60] sm:$0xf]
        %v3703 = vld [vmem:[#allocation6 + $0x64] sm:$0xf]
        %v3704 = vld [vmem:[#allocation6 + $0x68] sm:$0xf]
        %v3705 = vld [vmem:[#allocation6 + $0x6c] sm:$0xf]
        %v3706 = vld [vmem:[#allocation6 + $0x70] sm:$0xf]
        %v3707 = vld [vmem:[#allocation6 + $0x74] sm:$0xf]
        %v3708 = vld [vmem:[#allocation6 + $0x78] sm:$0xf]
        %v3709 = vld [vmem:[#allocation6 + $0x7c] sm:$0xf]
        %v3710 = vld [vmem:[#allocation6 + $0x80] sm:$0xf]
        %v3711 = vld [vmem:[#allocation6 + $0x84] sm:$0xf]
        %v3712 = vld [vmem:[#allocation6 + $0x88] sm:$0xf]
        %v3713 = vld [vmem:[#allocation6 + $0x8c] sm:$0xf]
        %v3714 = vld [vmem:[#allocation6 + $0x90] sm:$0xf]
        %v3715 = vld [vmem:[#allocation6 + $0x94] sm:$0xf]
        %v3716 = vld [vmem:[#allocation6 + $0x98] sm:$0xf]
        %v3717 = vld [vmem:[#allocation6 + $0x9c] sm:$0xf]
        %v3718 = vld [vmem:[#allocation6 + $0xa0] sm:$0xf]
        %v3719 = vld [vmem:[#allocation6 + $0xa4] sm:$0xf]
        %v3720 = vld [vmem:[#allocation6 + $0xa8] sm:$0xf]
        %v3721 = vld [vmem:[#allocation6 + $0xac] sm:$0xf]
        %v3722 = vld [vmem:[#allocation6 + $0xb0] sm:$0xf]
        %v3723 = vld [vmem:[#allocation6 + $0xb4] sm:$0xf]
        %v3724 = vld [vmem:[#allocation6 + $0xb8] sm:$0xf]
        %v3725 = vld [vmem:[#allocation6 + $0xbc] sm:$0xf]
        %v3726 = vld [vmem:[#allocation6 + $0xc0] sm:$0xf]
        %v3727 = vld [vmem:[#allocation6 + $0xc4] sm:$0xf]
        %v3728 = vld [vmem:[#allocation6 + $0xc8] sm:$0xf]
        %v3729 = vld [vmem:[#allocation6 + $0xcc] sm:$0xf]
        %v3730 = vld [vmem:[#allocation6 + $0xd0] sm:$0xf]
        %v3731 = vld [vmem:[#allocation6 + $0xd4] sm:$0xf]
        %v3732 = vld [vmem:[#allocation6 + $0xd8] sm:$0xf]
        %v3733 = vld [vmem:[#allocation6 + $0xdc] sm:$0xf]
        %v3734 = vld [vmem:[#allocation6 + $0xe0] sm:$0xf]
        %v3735 = vld [vmem:[#allocation6 + $0xe4] sm:$0xf]
        %v3736 = vld [vmem:[#allocation6 + $0xe8] sm:$0xf]
        %v3737 = vld [vmem:[#allocation6 + $0xec] sm:$0xf]
        %v3738 = vld [vmem:[#allocation6 + $0xf0] sm:$0xf]
        %v3739 = vld [vmem:[#allocation6 + $0xf4] sm:$0xf]
        %v3740 = vld [vmem:[#allocation6 + $0xf8] sm:$0xf]
        %v3741 = vld [vmem:[#allocation6 + $0xfc] sm:$0xf]
        %v3742 = vld [vmem:[#allocation6 + $0x100] sm:$0xf]
        %v3743 = vld [vmem:[#allocation6 + $0x104] sm:$0xf]
        %v3744 = vld [vmem:[#allocation6 + $0x108] sm:$0xf]
        %v3745 = vld [vmem:[#allocation6 + $0x10c] sm:$0xf]
        %v3746 = vld [vmem:[#allocation6 + $0x110] sm:$0xf]
        %v3747 = vld [vmem:[#allocation6 + $0x114] sm:$0xf]
        %v3748 = vld [vmem:[#allocation6 + $0x118] sm:$0xf]
        %v3749 = vld [vmem:[#allocation6 + $0x11c] sm:$0xf]
        %v3750 = vld [vmem:[#allocation6 + $0x120] sm:$0xf]
        %v3751 = vld [vmem:[#allocation6 + $0x124] sm:$0xf]
        %v3752 = vld [vmem:[#allocation6 + $0x128] sm:$0xf]
        %v3753 = vld [vmem:[#allocation6 + $0x12c] sm:$0xf]
        %v3754 = vld [vmem:[#allocation6 + $0x130] sm:$0xf]
        %v3755 = vld [vmem:[#allocation6 + $0x134] sm:$0xf]
        %v3756 = vld [vmem:[#allocation6 + $0x138] sm:$0xf]
        %v3757 = vld [vmem:[#allocation6 + $0x13c] sm:$0xf]
        %v3758 = vld [vmem:[#allocation6 + $0x140] sm:$0xf]
        %v3759 = vld [vmem:[#allocation6 + $0x144] sm:$0xf]
        %v3760 = vld [vmem:[#allocation6 + $0x148] sm:$0xf]
        %v3761 = vld [vmem:[#allocation6 + $0x14c] sm:$0xf]
        %v3762 = vld [vmem:[#allocation6 + $0x150] sm:$0xf]
        %v3763 = vld [vmem:[#allocation6 + $0x154] sm:$0xf]
        %v3764 = vld [vmem:[#allocation6 + $0x158] sm:$0xf]
        %v3765 = vld [vmem:[#allocation6 + $0x15c] sm:$0xf]
        %v3766 = vld [vmem:[#allocation6 + $0x160] sm:$0xf]
        %v3767 = vld [vmem:[#allocation6 + $0x164] sm:$0xf]
        %v3768 = vld [vmem:[#allocation6 + $0x168] sm:$0xf]
        %v3769 = vld [vmem:[#allocation6 + $0x16c] sm:$0xf]
        %v3770 = vld [vmem:[#allocation6 + $0x170] sm:$0xf]
        %v3771 = vld [vmem:[#allocation6 + $0x174] sm:$0xf]
        %v3772 = vld [vmem:[#allocation6 + $0x178] sm:$0xf]
        %v3773 = vld [vmem:[#allocation6 + $0x17c] sm:$0xf]
        %v3774 = vld [vmem:[#allocation6 + $0x180] sm:$0xf]
        %v3775 = vld [vmem:[#allocation6 + $0x184] sm:$0xf]
        %v3776 = vld [vmem:[#allocation6 + $0x188] sm:$0xf]
        %v3777 = vld [vmem:[#allocation6 + $0x18c] sm:$0xf]
        %v3778 = vld [vmem:[#allocation6 + $0x190] sm:$0xf]
        %v3779 = vld [vmem:[#allocation6 + $0x194] sm:$0xf]
        %v3780 = vld [vmem:[#allocation6 + $0x198] sm:$0xf]
        %v3781 = vld [vmem:[#allocation6 + $0x19c] sm:$0xf]
        %v3782 = vld [vmem:[#allocation6 + $0x1a0] sm:$0xf]
        %v3783 = vld [vmem:[#allocation6 + $0x1a4] sm:$0xf]
        %v3784 = vld [vmem:[#allocation6 + $0x1a8] sm:$0xf]
        %v3785 = vld [vmem:[#allocation6 + $0x1ac] sm:$0xf]
        %v3786 = vld [vmem:[#allocation6 + $0x1b0] sm:$0xf]
        %v3787 = vld [vmem:[#allocation6 + $0x1b4] sm:$0xf]
        %v3788 = vld [vmem:[#allocation6 + $0x1b8] sm:$0xf]
        %v3789 = vld [vmem:[#allocation6 + $0x1bc] sm:$0xf]
        %v3790 = vld [vmem:[#allocation6 + $0x1c0] sm:$0xf]
        %v3791 = vld [vmem:[#allocation6 + $0x1c4] sm:$0xf]
        %v3792 = vld [vmem:[#allocation6 + $0x1c8] sm:$0xf]
        %v3793 = vld [vmem:[#allocation6 + $0x1cc] sm:$0xf]
        %v3794 = vld [vmem:[#allocation6 + $0x1d0] sm:$0xf]
        %v3795 = vld [vmem:[#allocation6 + $0x1d4] sm:$0xf]
        %v3796 = vld [vmem:[#allocation6 + $0x1d8] sm:$0xf]
        %v3797 = vld [vmem:[#allocation6 + $0x1dc] sm:$0xf]
        %v3798 = vld [vmem:[#allocation6 + $0x1e0] sm:$0xf]
        %v3799 = vld [vmem:[#allocation6 + $0x1e4] sm:$0xf]
        %v3800 = vld [vmem:[#allocation6 + $0x1e8] sm:$0xf]
        %v3801 = vld [vmem:[#allocation6 + $0x1ec] sm:$0xf]
        %v3802 = vld [vmem:[#allocation6 + $0x1f0] sm:$0xf]
        %v3803 = vld [vmem:[#allocation6 + $0x1f4] sm:$0xf]
        %v3804 = vld [vmem:[#allocation6 + $0x1f8] sm:$0xf]
        %v3805 = vld [vmem:[#allocation6 + $0x1fc] sm:$0xf]
        %v3806 = vld [vmem:[#allocation6 + $0x200] sm:$0xf]
        %v3807 = vld [vmem:[#allocation6 + $0x204] sm:$0xf]
        %v3808 = vld [vmem:[#allocation6 + $0x208] sm:$0xf]
        %v3809 = vld [vmem:[#allocation6 + $0x20c] sm:$0xf]
        %v3810 = vld [vmem:[#allocation6 + $0x210] sm:$0xf]
        %v3811 = vld [vmem:[#allocation6 + $0x214] sm:$0xf]
        %v3812 = vld [vmem:[#allocation6 + $0x218] sm:$0xf]
        %v3813 = vld [vmem:[#allocation6 + $0x21c] sm:$0xf]
        %v3814 = vld [vmem:[#allocation6 + $0x220] sm:$0xf]
        %v3815 = vld [vmem:[#allocation6 + $0x224] sm:$0xf]
        %v3816 = vld [vmem:[#allocation6 + $0x228] sm:$0xf]
        %v3817 = vld [vmem:[#allocation6 + $0x22c] sm:$0xf]
        %v3818 = vld [vmem:[#allocation6 + $0x230] sm:$0xf]
        %v3819 = vld [vmem:[#allocation6 + $0x234] sm:$0xf]
        %v3820 = vld [vmem:[#allocation6 + $0x238] sm:$0xf]
        %v3821 = vld [vmem:[#allocation6 + $0x23c] sm:$0xf]
        %v3822 = vld [vmem:[#allocation6 + $0x240] sm:$0x3]
        %v3823 = vld [vmem:[%s9] sm:$0x1]
        %v3825 = vlaneseq
        %v3826 = vshrl.u32 %v3825, 7
        %v3827 = vsub.s32 0, %v3826
        %v3828 = vrot.slane %v3823, %v3827
        %v3975 = vunpack.c.l.b16 %v3678
        %v3976 = vunpack.c.l.b16 %v3679
        %v3977 = vunpack.c.l.b16 %v3680
        %v3978 = vunpack.c.l.b16 %v3681
        %v3979 = vunpack.c.l.b16 %v3682
        %v3980 = vunpack.c.l.b16 %v3683
        %v3981 = vunpack.c.l.b16 %v3684
        %v3982 = vunpack.c.l.b16 %v3685
        %v3983 = vunpack.c.l.b16 %v3686
        %v3984 = vunpack.c.l.b16 %v3687
        %v3985 = vunpack.c.l.b16 %v3688
        %v3986 = vunpack.c.l.b16 %v3689
        %v3987 = vunpack.c.l.b16 %v3690
        %v3988 = vunpack.c.l.b16 %v3691
        %v3989 = vunpack.c.l.b16 %v3692
        %v3990 = vunpack.c.l.b16 %v3693
        %v3991 = vunpack.c.l.b16 %v3694
        %v3992 = vunpack.c.l.b16 %v3695
        %v3993 = vunpack.c.l.b16 %v3696
        %v3994 = vunpack.c.l.b16 %v3697
        %v3995 = vunpack.c.l.b16 %v3698
        %v3996 = vunpack.c.l.b16 %v3699
        %v3997 = vunpack.c.l.b16 %v3700
        %v3998 = vunpack.c.l.b16 %v3701
        %v3999 = vunpack.c.l.b16 %v3702
        %v4000 = vunpack.c.l.b16 %v3703
        %v4001 = vunpack.c.l.b16 %v3704
        %v4002 = vunpack.c.l.b16 %v3705
        %v4003 = vunpack.c.l.b16 %v3706
        %v4004 = vunpack.c.l.b16 %v3707
        %v4005 = vunpack.c.l.b16 %v3708
        %v4006 = vunpack.c.l.b16 %v3709
        %v4007 = vunpack.c.l.b16 %v3710
        %v4008 = vunpack.c.l.b16 %v3711
        %v4009 = vunpack.c.l.b16 %v3712
        %v4010 = vunpack.c.l.b16 %v3713
        %v4011 = vunpack.c.l.b16 %v3714
        %v4012 = vunpack.c.l.b16 %v3715
        %v4013 = vunpack.c.l.b16 %v3716
        %v4014 = vunpack.c.l.b16 %v3717
        %v4015 = vunpack.c.l.b16 %v3718
        %v4016 = vunpack.c.l.b16 %v3719
        %v4017 = vunpack.c.l.b16 %v3720
        %v4018 = vunpack.c.l.b16 %v3721
        %v4019 = vunpack.c.l.b16 %v3722
        %v4020 = vunpack.c.l.b16 %v3723
        %v4021 = vunpack.c.l.b16 %v3724
        %v4022 = vunpack.c.l.b16 %v3725
        %v4023 = vunpack.c.l.b16 %v3726
        %v4024 = vunpack.c.l.b16 %v3727
        %v4025 = vunpack.c.l.b16 %v3728
        %v4026 = vunpack.c.l.b16 %v3729
        %v4027 = vunpack.c.l.b16 %v3730
        %v4028 = vunpack.c.l.b16 %v3731
        %v4029 = vunpack.c.l.b16 %v3732
        %v4030 = vunpack.c.l.b16 %v3733
        %v4031 = vunpack.c.l.b16 %v3734
        %v4032 = vunpack.c.l.b16 %v3735
        %v4033 = vunpack.c.l.b16 %v3736
        %v4034 = vunpack.c.l.b16 %v3737
        %v4035 = vunpack.c.l.b16 %v3738
        %v4036 = vunpack.c.l.b16 %v3739
        %v4037 = vunpack.c.l.b16 %v3740
        %v4038 = vunpack.c.l.b16 %v3741
        %v4039 = vunpack.c.l.b16 %v3742
        %v4040 = vunpack.c.l.b16 %v3743
        %v4041 = vunpack.c.l.b16 %v3744
        %v4042 = vunpack.c.l.b16 %v3745
        %v4043 = vunpack.c.l.b16 %v3746
        %v4044 = vunpack.c.l.b16 %v3747
        %v4045 = vunpack.c.l.b16 %v3748
        %v4046 = vunpack.c.l.b16 %v3749
        %v4047 = vunpack.c.l.b16 %v3750
        %v4048 = vunpack.c.l.b16 %v3751
        %v4049 = vunpack.c.l.b16 %v3752
        %v4050 = vunpack.c.l.b16 %v3753
        %v4051 = vunpack.c.l.b16 %v3754
        %v4052 = vunpack.c.l.b16 %v3755
        %v4053 = vunpack.c.l.b16 %v3756
        %v4054 = vunpack.c.l.b16 %v3757
        %v4055 = vunpack.c.l.b16 %v3758
        %v4056 = vunpack.c.l.b16 %v3759
        %v4057 = vunpack.c.l.b16 %v3760
        %v4058 = vunpack.c.l.b16 %v3761
        %v4059 = vunpack.c.l.b16 %v3762
        %v4060 = vunpack.c.l.b16 %v3763
        %v4061 = vunpack.c.l.b16 %v3764
        %v4062 = vunpack.c.l.b16 %v3765
        %v4063 = vunpack.c.l.b16 %v3766
        %v4064 = vunpack.c.l.b16 %v3767
        %v4065 = vunpack.c.l.b16 %v3768
        %v4066 = vunpack.c.l.b16 %v3769
        %v4067 = vunpack.c.l.b16 %v3770
        %v4068 = vunpack.c.l.b16 %v3771
        %v4069 = vunpack.c.l.b16 %v3772
        %v4070 = vunpack.c.l.b16 %v3773
        %v4071 = vunpack.c.l.b16 %v3774
        %v4072 = vunpack.c.l.b16 %v3775
        %v4073 = vunpack.c.l.b16 %v3776
        %v4074 = vunpack.c.l.b16 %v3777
        %v4075 = vunpack.c.l.b16 %v3778
        %v4076 = vunpack.c.l.b16 %v3779
        %v4077 = vunpack.c.l.b16 %v3780
        %v4078 = vunpack.c.l.b16 %v3781
        %v4079 = vunpack.c.l.b16 %v3782
        %v4080 = vunpack.c.l.b16 %v3783
        %v4081 = vunpack.c.l.b16 %v3784
        %v4082 = vunpack.c.l.b16 %v3785
        %v4083 = vunpack.c.l.b16 %v3786
        %v4084 = vunpack.c.l.b16 %v3787
        %v4085 = vunpack.c.l.b16 %v3788
        %v4086 = vunpack.c.l.b16 %v3789
        %v4087 = vunpack.c.l.b16 %v3790
        %v4088 = vunpack.c.l.b16 %v3791
        %v4089 = vunpack.c.l.b16 %v3792
        %v4090 = vunpack.c.l.b16 %v3793
        %v4091 = vunpack.c.l.b16 %v3794
        %v4092 = vunpack.c.l.b16 %v3795
        %v4093 = vunpack.c.l.b16 %v3796
        %v4094 = vunpack.c.l.b16 %v3797
        %v4095 = vunpack.c.l.b16 %v3798
        %v4096 = vunpack.c.l.b16 %v3799
        %v4097 = vunpack.c.l.b16 %v3800
        %v4098 = vunpack.c.l.b16 %v3801
        %v4099 = vunpack.c.l.b16 %v3802
        %v4100 = vunpack.c.l.b16 %v3803
        %v4101 = vunpack.c.l.b16 %v3804
        %v4102 = vunpack.c.l.b16 %v3805
        %v4103 = vunpack.c.l.b16 %v3806
        %v4104 = vunpack.c.l.b16 %v3807
        %v4105 = vunpack.c.l.b16 %v3808
        %v4106 = vunpack.c.l.b16 %v3809
        %v4107 = vunpack.c.l.b16 %v3810
        %v4108 = vunpack.c.l.b16 %v3811
        %v4109 = vunpack.c.l.b16 %v3812
        %v4110 = vunpack.c.l.b16 %v3813
        %v4111 = vunpack.c.l.b16 %v3814
        %v4112 = vunpack.c.l.b16 %v3815
        %v4113 = vunpack.c.l.b16 %v3816
        %v4114 = vunpack.c.l.b16 %v3817
        %v4115 = vunpack.c.l.b16 %v3818
        %v4116 = vunpack.c.l.b16 %v3819
        %v4117 = vunpack.c.l.b16 %v3820
        %v4118 = vunpack.c.l.b16 %v3821
        %v4119 = vunpack.c.l.b16 %v3822
        %v4120 = vpack.c.b16 %v3976, %v3975
        %v4121 = vpack.c.b16 %v3978, %v3977
        %v4122 = vpack.c.b16 %v3980, %v3979
        %v4123 = vpack.c.b16 %v3982, %v3981
        %v4124 = vpack.c.b16 %v3984, %v3983
        %v4125 = vpack.c.b16 %v3986, %v3985
        %v4126 = vpack.c.b16 %v3988, %v3987
        %v4127 = vpack.c.b16 %v3990, %v3989
        %v4128 = vpack.c.b16 %v3992, %v3991
        %v4129 = vpack.c.b16 %v3994, %v3993
        %v4130 = vpack.c.b16 %v3996, %v3995
        %v4131 = vpack.c.b16 %v3998, %v3997
        %v4132 = vpack.c.b16 %v4000, %v3999
        %v4133 = vpack.c.b16 %v4002, %v4001
        %v4134 = vpack.c.b16 %v4004, %v4003
        %v4135 = vpack.c.b16 %v4006, %v4005
        %v4136 = vpack.c.b16 %v4008, %v4007
        %v4137 = vpack.c.b16 %v4010, %v4009
        %v4138 = vpack.c.b16 %v4012, %v4011
        %v4139 = vpack.c.b16 %v4014, %v4013
        %v4140 = vpack.c.b16 %v4016, %v4015
        %v4141 = vpack.c.b16 %v4018, %v4017
        %v4142 = vpack.c.b16 %v4020, %v4019
        %v4143 = vpack.c.b16 %v4022, %v4021
        %v4144 = vpack.c.b16 %v4024, %v4023
        %v4145 = vpack.c.b16 %v4026, %v4025
        %v4146 = vpack.c.b16 %v4028, %v4027
        %v4147 = vpack.c.b16 %v4030, %v4029
        %v4148 = vpack.c.b16 %v4032, %v4031
        %v4149 = vpack.c.b16 %v4034, %v4033
        %v4150 = vpack.c.b16 %v4036, %v4035
        %v4151 = vpack.c.b16 %v4038, %v4037
        %v4152 = vpack.c.b16 %v4040, %v4039
        %v4153 = vpack.c.b16 %v4042, %v4041
        %v4154 = vpack.c.b16 %v4044, %v4043
        %v4155 = vpack.c.b16 %v4046, %v4045
        %v4156 = vpack.c.b16 %v4048, %v4047
        %v4157 = vpack.c.b16 %v4050, %v4049
        %v4158 = vpack.c.b16 %v4052, %v4051
        %v4159 = vpack.c.b16 %v4054, %v4053
        %v4160 = vpack.c.b16 %v4056, %v4055
        %v4161 = vpack.c.b16 %v4058, %v4057
        %v4162 = vpack.c.b16 %v4060, %v4059
        %v4163 = vpack.c.b16 %v4062, %v4061
        %v4164 = vpack.c.b16 %v4064, %v4063
        %v4165 = vpack.c.b16 %v4066, %v4065
        %v4166 = vpack.c.b16 %v4068, %v4067
        %v4167 = vpack.c.b16 %v4070, %v4069
        %v4168 = vpack.c.b16 %v4072, %v4071
        %v4169 = vpack.c.b16 %v4074, %v4073
        %v4170 = vpack.c.b16 %v4076, %v4075
        %v4171 = vpack.c.b16 %v4078, %v4077
        %v4172 = vpack.c.b16 %v4080, %v4079
        %v4173 = vpack.c.b16 %v4082, %v4081
        %v4174 = vpack.c.b16 %v4084, %v4083
        %v4175 = vpack.c.b16 %v4086, %v4085
        %v4176 = vpack.c.b16 %v4088, %v4087
        %v4177 = vpack.c.b16 %v4090, %v4089
        %v4178 = vpack.c.b16 %v4092, %v4091
        %v4179 = vpack.c.b16 %v4094, %v4093
        %v4180 = vpack.c.b16 %v4096, %v4095
        %v4181 = vpack.c.b16 %v4098, %v4097
        %v4182 = vpack.c.b16 %v4100, %v4099
        %v4183 = vpack.c.b16 %v4102, %v4101
        %v4184 = vpack.c.b16 %v4104, %v4103
        %v4185 = vpack.c.b16 %v4106, %v4105
        %v4186 = vpack.c.b16 %v4108, %v4107
        %v4187 = vpack.c.b16 %v4110, %v4109
        %v4188 = vpack.c.b16 %v4112, %v4111
        %v4189 = vpack.c.b16 %v4114, %v4113
        %v4190 = vpack.c.b16 %v4116, %v4115
        %v4191 = vpack.c.b16 %v4118, %v4117
        %v4192 = vpack.c.b16 %v4119, %v4119
        %v4266 = vsel %vm1417, %v3647, 0
        %v4269 = vsel %vm1417, %v3657, 0
        %v4272 = vsel %vm1417, %v3667, 0
        %v4275 = vsel %vm1417, %v3677, 0
        %v4278 = vsel %vm2502, %v4192, 0
        %4280 = vmatprep.subr.bf16.mxu0 0
        %4281 = vmatpush1.bf16.msra.mxu0 %v4120
        %4282 = vmatprep.subr.bf16.mxu0 0
        %4283 = vmatpush1.bf16.msra.mxu0 %v4121
        %4284 = vmatprep.subr.bf16.mxu0 0
        %4285 = vmatpush1.bf16.msra.mxu0 %v4122
        %4286 = vmatprep.subr.bf16.mxu0 0
        %4287 = vmatpush1.bf16.msra.mxu0 %v4123
        %4288 = vmatprep.subr.bf16.mxu0 0
        %4289 = vmatpush1.bf16.msra.mxu0 %v4124
        %4290 = vmatprep.subr.bf16.mxu0 0
        %4291 = vmatpush1.bf16.msra.mxu0 %v4125
        %4292 = vmatprep.subr.bf16.mxu0 0
        %4293 = vmatpush1.bf16.msra.mxu0 %v4126
        %4294 = vmatprep.subr.bf16.mxu0 0
        %4295 = vmatpush1.bf16.msra.mxu0 %v4127
        %4296 = vmatprep.subr.bf16.mxu0 0
        %4297 = vmatpush1.bf16.msra.mxu0 %v4128
        %4298 = vmatprep.subr.bf16.mxu0 0
        %4299 = vmatpush1.bf16.msra.mxu0 %v4129
        %4300 = vmatprep.subr.bf16.mxu0 0
        %4301 = vmatpush1.bf16.msra.mxu0 %v4130
        %4302 = vmatprep.subr.bf16.mxu0 0
        %4303 = vmatpush1.bf16.msra.mxu0 %v4131
        %4304 = vmatprep.subr.bf16.mxu0 0
        %4305 = vmatpush1.bf16.msra.mxu0 %v4132
        %4306 = vmatprep.subr.bf16.mxu0 0
        %4307 = vmatpush1.bf16.msra.mxu0 %v4133
        %4308 = vmatprep.subr.bf16.mxu0 0
        %4309 = vmatpush1.bf16.msra.mxu0 %v4134
        %4310 = vmatprep.subr.bf16.mxu0 0
        %4311 = vmatpush1.bf16.msra.mxu0 %v4135
        %4312 = vmatprep.mubr.bf16.mxu0 %v3639
        %4313 = vmatmul.mubr.bf16.gmra.mrb[0].mxu0 %v3638
        %v4314 = vpop.f32.mrb[0].mxu0
        %v4315 = vadd.f32 %v3828, %v4314
        %v4316 = vpop.f32.mrb[0].mxu0
        %v4317 = vpop.f32.mrb[0].mxu0
        %v4318 = vadd.f32 %v3828, %v4317
        %v4319 = vpop.f32.mrb[0].mxu0
        %4320 = vmatprep.mubr.bf16.mxu0 %v3649
        %4321 = vmatmul.mubr.bf16.gmra.mrb[0].mxu0 %v3648
        %v4322 = vpop.f32.mrb[0].mxu0
        %v4323 = vadd.f32 %v3828, %v4322
        %v4324 = vpop.f32.mrb[0].mxu0
        %v4325 = vpop.f32.mrb[0].mxu0
        %v4326 = vadd.f32 %v3828, %v4325
        %v4327 = vpop.f32.mrb[0].mxu0
        %4328 = vmatprep.mubr.bf16.mxu0 %v3659
        %4329 = vmatmul.mubr.bf16.gmra.mrb[0].mxu0 %v3658
        %v4330 = vpop.f32.mrb[0].mxu0
        %v4331 = vadd.f32 %v3828, %v4330
        %v4332 = vpop.f32.mrb[0].mxu0
        %v4333 = vpop.f32.mrb[0].mxu0
        %v4334 = vadd.f32 %v3828, %v4333
        %v4335 = vpop.f32.mrb[0].mxu0
        %4336 = vmatprep.mubr.bf16.mxu0 %v3669
        %4337 = vmatmul.mubr.bf16.gmra.mrb[0].mxu0 %v3668
        %v4338 = vpop.f32.mrb[0].mxu0
        %v4339 = vadd.f32 %v3828, %v4338
        %v4340 = vpop.f32.mrb[0].mxu0
        %v4341 = vpop.f32.mrb[0].mxu0
        %v4342 = vadd.f32 %v3828, %v4341
        %v4343 = vpop.f32.mrb[0].mxu0
        %4344 = vdwg.mxu0
        %4345 = vmatprep.subr.bf16.mxu0 0
        %4346 = vmatpush1.bf16.msra.mxu0 %v4136
        %4347 = vmatprep.subr.bf16.mxu0 0
        %4348 = vmatpush1.bf16.msra.mxu0 %v4137
        %4349 = vmatprep.subr.bf16.mxu0 0
        %4350 = vmatpush1.bf16.msra.mxu0 %v4138
        %4351 = vmatprep.subr.bf16.mxu0 0
        %4352 = vmatpush1.bf16.msra.mxu0 %v4139
        %4353 = vmatprep.subr.bf16.mxu0 0
        %4354 = vmatpush1.bf16.msra.mxu0 %v4140
        %4355 = vmatprep.subr.bf16.mxu0 0
        %4356 = vmatpush1.bf16.msra.mxu0 %v4141
        %4357 = vmatprep.subr.bf16.mxu0 0
        %4358 = vmatpush1.bf16.msra.mxu0 %v4142
        %4359 = vmatprep.subr.bf16.mxu0 0
        %4360 = vmatpush1.bf16.msra.mxu0 %v4143
        %4361 = vmatprep.subr.bf16.mxu0 0
        %4362 = vmatpush1.bf16.msra.mxu0 %v4144
        %4363 = vmatprep.subr.bf16.mxu0 0
        %4364 = vmatpush1.bf16.msra.mxu0 %v4145
        %4365 = vmatprep.subr.bf16.mxu0 0
        %4366 = vmatpush1.bf16.msra.mxu0 %v4146
        %4367 = vmatprep.subr.bf16.mxu0 0
        %4368 = vmatpush1.bf16.msra.mxu0 %v4147
        %4369 = vmatprep.subr.bf16.mxu0 0
        %4370 = vmatpush1.bf16.msra.mxu0 %v4148
        %4371 = vmatprep.subr.bf16.mxu0 0
        %4372 = vmatpush1.bf16.msra.mxu0 %v4149
        %4373 = vmatprep.subr.bf16.mxu0 0
        %4374 = vmatpush1.bf16.msra.mxu0 %v4150
        %4375 = vmatprep.subr.bf16.mxu0 0
        %4376 = vmatpush1.bf16.msra.mxu0 %v4151
        %4377 = vmatprep.mubr.bf16.mxu0 %v3641
        %4378 = vmatmul.mubr.bf16.gmra.mrb[0].mxu0 %v3640
        %v4379 = vpop.f32.mrb[0].mxu0
        %v4380 = vadd.f32 %v4315, %v4379
        %v4381 = vpop.f32.mrb[0].mxu0
        %v4382 = vpop.f32.mrb[0].mxu0
        %v4383 = vadd.f32 %v4318, %v4382
        %v4384 = vpop.f32.mrb[0].mxu0
        %4385 = vmatprep.mubr.bf16.mxu0 %v3651
        %4386 = vmatmul.mubr.bf16.gmra.mrb[0].mxu0 %v3650
        %v4387 = vpop.f32.mrb[0].mxu0
        %v4388 = vadd.f32 %v4323, %v4387
        %v4389 = vpop.f32.mrb[0].mxu0
        %v4390 = vpop.f32.mrb[0].mxu0
        %v4391 = vadd.f32 %v4326, %v4390
        %v4392 = vpop.f32.mrb[0].mxu0
        %4393 = vmatprep.mubr.bf16.mxu0 %v3661
        %4394 = vmatmul.mubr.bf16.gmra.mrb[0].mxu0 %v3660
        %v4395 = vpop.f32.mrb[0].mxu0
        %v4396 = vadd.f32 %v4331, %v4395
        %v4397 = vpop.f32.mrb[0].mxu0
        %v4398 = vpop.f32.mrb[0].mxu0
        %v4399 = vadd.f32 %v4334, %v4398
        %v4400 = vpop.f32.mrb[0].mxu0
        %4401 = vmatprep.mubr.bf16.mxu0 %v3671
        %4402 = vmatmul.mubr.bf16.gmra.mrb[0].mxu0 %v3670
        %v4403 = vpop.f32.mrb[0].mxu0
        %v4404 = vadd.f32 %v4339, %v4403
        %v4405 = vpop.f32.mrb[0].mxu0
        %v4406 = vpop.f32.mrb[0].mxu0
        %v4407 = vadd.f32 %v4342, %v4406
        %v4408 = vpop.f32.mrb[0].mxu0
        %4409 = vdwg.mxu0
        %4410 = vmatprep.subr.bf16.mxu0 0
        %4411 = vmatpush1.bf16.msra.mxu0 %v4152
        %4412 = vmatprep.subr.bf16.mxu0 0
        %4413 = vmatpush1.bf16.msra.mxu0 %v4153
        %4414 = vmatprep.subr.bf16.mxu0 0
        %4415 = vmatpush1.bf16.msra.mxu0 %v4154
        %4416 = vmatprep.subr.bf16.mxu0 0
        %4417 = vmatpush1.bf16.msra.mxu0 %v4155
        %4418 = vmatprep.subr.bf16.mxu0 0
        %4419 = vmatpush1.bf16.msra.mxu0 %v4156
        %4420 = vmatprep.subr.bf16.mxu0 0
        %4421 = vmatpush1.bf16.msra.mxu0 %v4157
        %4422 = vmatprep.subr.bf16.mxu0 0
        %4423 = vmatpush1.bf16.msra.mxu0 %v4158
        %4424 = vmatprep.subr.bf16.mxu0 0
        %4425 = vmatpush1.bf16.msra.mxu0 %v4159
        %4426 = vmatprep.subr.bf16.mxu0 0
        %4427 = vmatpush1.bf16.msra.mxu0 %v4160
        %4428 = vmatprep.subr.bf16.mxu0 0
        %4429 = vmatpush1.bf16.msra.mxu0 %v4161
        %4430 = vmatprep.subr.bf16.mxu0 0
        %4431 = vmatpush1.bf16.msra.mxu0 %v4162
        %4432 = vmatprep.subr.bf16.mxu0 0
        %4433 = vmatpush1.bf16.msra.mxu0 %v4163
        %4434 = vmatprep.subr.bf16.mxu0 0
        %4435 = vmatpush1.bf16.msra.mxu0 %v4164
        %4436 = vmatprep.subr.bf16.mxu0 0
        %4437 = vmatpush1.bf16.msra.mxu0 %v4165
        %4438 = vmatprep.subr.bf16.mxu0 0
        %4439 = vmatpush1.bf16.msra.mxu0 %v4166
        %4440 = vmatprep.subr.bf16.mxu0 0
        %4441 = vmatpush1.bf16.msra.mxu0 %v4167
        %4442 = vmatprep.mubr.bf16.mxu0 %v3643
        %4443 = vmatmul.mubr.bf16.gmra.mrb[0].mxu0 %v3642
        %v4444 = vpop.f32.mrb[0].mxu0
        %v4445 = vadd.f32 %v4380, %v4444
        %v4446 = vpop.f32.mrb[0].mxu0
        %v4447 = vpop.f32.mrb[0].mxu0
        %v4448 = vadd.f32 %v4383, %v4447
        %v4449 = vpop.f32.mrb[0].mxu0
        %4450 = vmatprep.mubr.bf16.mxu0 %v3653
        %4451 = vmatmul.mubr.bf16.gmra.mrb[0].mxu0 %v3652
        %v4452 = vpop.f32.mrb[0].mxu0
        %v4453 = vadd.f32 %v4388, %v4452
        %v4454 = vpop.f32.mrb[0].mxu0
        %v4455 = vpop.f32.mrb[0].mxu0
        %v4456 = vadd.f32 %v4391, %v4455
        %v4457 = vpop.f32.mrb[0].mxu0
        %4458 = vmatprep.mubr.bf16.mxu0 %v3663
        %4459 = vmatmul.mubr.bf16.gmra.mrb[0].mxu0 %v3662
        %v4460 = vpop.f32.mrb[0].mxu0
        %v4461 = vadd.f32 %v4396, %v4460
        %v4462 = vpop.f32.mrb[0].mxu0
        %v4463 = vpop.f32.mrb[0].mxu0
        %v4464 = vadd.f32 %v4399, %v4463
        %v4465 = vpop.f32.mrb[0].mxu0
        %4466 = vmatprep.mubr.bf16.mxu0 %v3673
        %4467 = vmatmul.mubr.bf16.gmra.mrb[0].mxu0 %v3672
        %v4468 = vpop.f32.mrb[0].mxu0
        %v4469 = vadd.f32 %v4404, %v4468
        %v4470 = vpop.f32.mrb[0].mxu0
        %v4471 = vpop.f32.mrb[0].mxu0
        %v4472 = vadd.f32 %v4407, %v4471
        %v4473 = vpop.f32.mrb[0].mxu0
        %4474 = vdwg.mxu0
        %4475 = vmatprep.subr.bf16.mxu0 0
        %4476 = vmatpush1.bf16.msra.mxu0 %v4168
        %4477 = vmatprep.subr.bf16.mxu0 0
        %4478 = vmatpush1.bf16.msra.mxu0 %v4169
        %4479 = vmatprep.subr.bf16.mxu0 0
        %4480 = vmatpush1.bf16.msra.mxu0 %v4170
        %4481 = vmatprep.subr.bf16.mxu0 0
        %4482 = vmatpush1.bf16.msra.mxu0 %v4171
        %4483 = vmatprep.subr.bf16.mxu0 0
        %4484 = vmatpush1.bf16.msra.mxu0 %v4172
        %4485 = vmatprep.subr.bf16.mxu0 0
        %4486 = vmatpush1.bf16.msra.mxu0 %v4173
        %4487 = vmatprep.subr.bf16.mxu0 0
        %4488 = vmatpush1.bf16.msra.mxu0 %v4174
        %4489 = vmatprep.subr.bf16.mxu0 0
        %4490 = vmatpush1.bf16.msra.mxu0 %v4175
        %4491 = vmatprep.subr.bf16.mxu0 0
        %4492 = vmatpush1.bf16.msra.mxu0 %v4176
        %4493 = vmatprep.subr.bf16.mxu0 0
        %4494 = vmatpush1.bf16.msra.mxu0 %v4177
        %4495 = vmatprep.subr.bf16.mxu0 0
        %4496 = vmatpush1.bf16.msra.mxu0 %v4178
        %4497 = vmatprep.subr.bf16.mxu0 0
        %4498 = vmatpush1.bf16.msra.mxu0 %v4179
        %4499 = vmatprep.subr.bf16.mxu0 0
        %4500 = vmatpush1.bf16.msra.mxu0 %v4180
        %4501 = vmatprep.subr.bf16.mxu0 0
        %4502 = vmatpush1.bf16.msra.mxu0 %v4181
        %4503 = vmatprep.subr.bf16.mxu0 0
        %4504 = vmatpush1.bf16.msra.mxu0 %v4182
        %4505 = vmatprep.subr.bf16.mxu0 0
        %4506 = vmatpush1.bf16.msra.mxu0 %v4183
        %4507 = vmatprep.mubr.bf16.mxu0 %v3645
        %4508 = vmatmul.mubr.bf16.gmra.mrb[0].mxu0 %v3644
        %v4509 = vpop.f32.mrb[0].mxu0
        %v4510 = vadd.f32 %v4445, %v4509
        %v4511 = vpop.f32.mrb[0].mxu0
        %v4512 = vpop.f32.mrb[0].mxu0
        %v4513 = vadd.f32 %v4448, %v4512
        %v4514 = vpop.f32.mrb[0].mxu0
        %4515 = vmatprep.mubr.bf16.mxu0 %v3655
        %4516 = vmatmul.mubr.bf16.gmra.mrb[0].mxu0 %v3654
        %v4517 = vpop.f32.mrb[0].mxu0
        %v4518 = vadd.f32 %v4453, %v4517
        %v4519 = vpop.f32.mrb[0].mxu0
        %v4520 = vpop.f32.mrb[0].mxu0
        %v4521 = vadd.f32 %v4456, %v4520
        %v4522 = vpop.f32.mrb[0].mxu0
        %4523 = vmatprep.mubr.bf16.mxu0 %v3665
        %4524 = vmatmul.mubr.bf16.gmra.mrb[0].mxu0 %v3664
        %v4525 = vpop.f32.mrb[0].mxu0
        %v4526 = vadd.f32 %v4461, %v4525
        %v4527 = vpop.f32.mrb[0].mxu0
        %v4528 = vpop.f32.mrb[0].mxu0
        %v4529 = vadd.f32 %v4464, %v4528
        %v4530 = vpop.f32.mrb[0].mxu0
        %4531 = vmatprep.mubr.bf16.mxu0 %v3675
        %4532 = vmatmul.mubr.bf16.gmra.mrb[0].mxu0 %v3674
        %v4533 = vpop.f32.mrb[0].mxu0
        %v4534 = vadd.f32 %v4469, %v4533
        %v4535 = vpop.f32.mrb[0].mxu0
        %v4536 = vpop.f32.mrb[0].mxu0
        %v4537 = vadd.f32 %v4472, %v4536
        %v4538 = vpop.f32.mrb[0].mxu0
        %4539 = vdwg.mxu0
        %4540 = vmatprep.subr.bf16.mxu0 0
        %4541 = vmatpush1.bf16.msra.mxu0 %v4184
        %4542 = vmatprep.subr.bf16.mxu0 0
        %4543 = vmatpush1.bf16.msra.mxu0 %v4185
        %4544 = vmatprep.subr.bf16.mxu0 0
        %4545 = vmatpush1.bf16.msra.mxu0 %v4186
        %4546 = vmatprep.subr.bf16.mxu0 0
        %4547 = vmatpush1.bf16.msra.mxu0 %v4187
        %4548 = vmatprep.subr.bf16.mxu0 0
        %4549 = vmatpush1.bf16.msra.mxu0 %v4188
        %4550 = vmatprep.subr.bf16.mxu0 0
        %4551 = vmatpush1.bf16.msra.mxu0 %v4189
        %4552 = vmatprep.subr.bf16.mxu0 0
        %4553 = vmatpush1.bf16.msra.mxu0 %v4190
        %4554 = vmatprep.subr.bf16.mxu0 0
        %4555 = vmatpush1.bf16.msra.mxu0 %v4191
        %4556 = vmatprep.subr.bf16.mxu0 0
        %4557 = vmatpush1.bf16.msra.mxu0 %v4278
        %4558 = vmatprep.subr.bf16.mxu0 0
        %4559 = vmatpush1.bf16.msra.mxu0 0
        %4560 = vmatprep.subr.bf16.mxu0 0
        %4561 = vmatpush1.bf16.msra.mxu0 0
        %4562 = vmatprep.subr.bf16.mxu0 0
        %4563 = vmatpush1.bf16.msra.mxu0 0
        %4564 = vmatprep.subr.bf16.mxu0 0
        %4565 = vmatpush1.bf16.msra.mxu0 0
        %4566 = vmatprep.subr.bf16.mxu0 0
        %4567 = vmatpush1.bf16.msra.mxu0 0
        %4568 = vmatprep.subr.bf16.mxu0 0
        %4569 = vmatpush1.bf16.msra.mxu0 0
        %4570 = vmatprep.subr.bf16.mxu0 0
        %4571 = vmatpush1.bf16.msra.mxu0 0
        %4572 = vmatprep.mubr.bf16.mxu0 %v4266
        %4573 = vmatmul.mubr.bf16.gmra.mrb[0].mxu0 %v3646
        %v4574 = vpop.f32.mrb[0].mxu0
        %v4575 = vadd.f32 %v4510, %v4574
        %v4576 = vpop.f32.mrb[0].mxu0
        %v4577 = vpop.f32.mrb[0].mxu0
        %v4578 = vadd.f32 %v4513, %v4577
        %v4579 = vpop.f32.mrb[0].mxu0
        %4580 = vmatprep.mubr.bf16.mxu0 %v4269
        %4581 = vmatmul.mubr.bf16.gmra.mrb[0].mxu0 %v3656
        %v4582 = vpop.f32.mrb[0].mxu0
        %v4583 = vadd.f32 %v4518, %v4582
        %v4584 = vpop.f32.mrb[0].mxu0
        %v4585 = vpop.f32.mrb[0].mxu0
        %v4586 = vadd.f32 %v4521, %v4585
        %v4587 = vpop.f32.mrb[0].mxu0
        %4588 = vmatprep.mubr.bf16.mxu0 %v4272
        %4589 = vmatmul.mubr.bf16.gmra.mrb[0].mxu0 %v3666
        %v4590 = vpop.f32.mrb[0].mxu0
        %v4591 = vadd.f32 %v4526, %v4590
        %v4592 = vpop.f32.mrb[0].mxu0
        %v4593 = vpop.f32.mrb[0].mxu0
        %v4594 = vadd.f32 %v4529, %v4593
        %v4595 = vpop.f32.mrb[0].mxu0
        %4596 = vmatprep.mubr.bf16.mxu0 %v4275
        %4597 = vmatmul.mubr.bf16.gmra.mrb[0].mxu0 %v3676
        %v4598 = vpop.f32.mrb[0].mxu0
        %v4599 = vadd.f32 %v4534, %v4598
        %v4600 = vpop.f32.mrb[0].mxu0
        %v4601 = vpop.f32.mrb[0].mxu0
        %v4602 = vadd.f32 %v4537, %v4601
        %v4603 = vpop.f32.mrb[0].mxu0
        %4604 = vdwg.mxu0
        %4605 = vst [vmem:[%s412] sm:$0xff] %v4575
        %4606 = vst [vmem:[%s412 + $0x8] sm:$0xff] %v4578
        %4607 = vst [vmem:[%s412 + $0x10] sm:$0xff] %v4583
        %4608 = vst [vmem:[%s412 + $0x18] sm:$0xff] %v4586
        %4609 = vst [vmem:[%s412 + $0x20] sm:$0xff] %v4591
        %4610 = vst [vmem:[%s412 + $0x28] sm:$0xff] %v4594
        %4611 = vst [vmem:[%s412 + $0x30] sm:$0xff] %v4599
        %4612 = vst [vmem:[%s412 + $0x38] sm:$0xff] %v4602
        %s4613 = sand.u32 %s263, 1
        %s4614 = scalar_lea.sflag [#allocation8], %s4613
        %s4615 = sand.u32 %s263, 1
        %s4616 = smul.addr %s4615, 64
        %s4617 = scalar_lea.vmem [#allocation9], %s4616
        // Predicated region
        $region65: #{tpu_custom_call.1} parent=59 // pred_check
          %p4618 = pneg %p273
        $region66: #{tpu_custom_call.1} parent=59 // pred_check_branch
          %4620 = sbr.rel (%p4618) target = $region68
        $region67: #{tpu_custom_call.1} parent=59 // pred_region
          %s4621 = smul.u32 8, %s25
          %s4623 = ssub.s32 1024, 1024
          %4624 = vsyncadd %s4614, %s4623
          %s4625 = smul.addr %s4621, 128
          %s4626 = scalar_lea.hbm %s10, %s4625
          %s4627 = sshll.u32 %s4617, 4
          %s4628 = int_to_ptr.vmem [resolvable:$true] %s4627
          %4633 = dma.vmem_to_hbm [thread:$0]  %s4628, 1024, %s4626, %s4614, 128, 128, 8
        $region68: #{tpu_custom_call.1} parent=59 // pred_fallthru
          _
      $region60: #{tpu_custom_call.1} parent=5 // pred_fallthru
        _
      %p4634 = scmp.le.s32.totalorder 2, %s20
      // Predicated region
      $region69: #{tpu_custom_call.1} parent=5 // pred_check
        %p4635 = pneg %p4634
      $region70: #{tpu_custom_call.1} parent=5 // pred_check_branch
        %4637 = sbr.rel (%p4635) target = $region72
      $region71: #{tpu_custom_call.1} parent=5 // pred_region
        %s4638 = ssub.s32 %s20, 2
        // Predicated region
        $region73: #{tpu_custom_call.1} parent=71 // pred_check
          %p4639 = pneg %p279
        $region74: #{tpu_custom_call.1} parent=71 // pred_check_branch
          %4641 = sbr.rel (%p4639) target = $region76
        $region75: #{tpu_custom_call.1} parent=71 // pred_region
          %s4642 = sand.u32 %s264, 1
          %s4643 = scalar_lea.sflag [#allocation8], %s4642
          %s4644 = sand.u32 %s264, 1
          %s4645 = smul.addr %s4644, 64
          %s4646 = scalar_lea.vmem [#allocation9], %s4645
          %4647 = dma.done %s4643, 1024
        $region76: #{tpu_custom_call.1} parent=71 // pred_fallthru
          _
      $region72: #{tpu_custom_call.1} parent=5 // pred_fallthru
        _
    $region6: #{tpu_custom_call.1} parent=1 // loop_footer
      %s24 = sadd.s32 1, %s20
    $region7: #{tpu_custom_call.1} parent=1 // loop_footer_branch
      %19 = sbr.rel target = $region3
    $region8: #{tpu_custom_call.1} parent=1 // loop_exit
      _
    %4648 = vsyncpa [#allocation7], 1
    %s4649 = scalar_lea.sflag [#allocation7], 1
    %4650 = vsyncpa %s4649, 1
    %4651 = vsyncpa [#allocation8], 1
    %s4652 = scalar_lea.sflag [#allocation8], 1
    %4653 = vsyncpa %s4652, 1

</llo_original>
